<compile_context>
chip_gen: v7x
topology: tpu7x:2x2x1
jax: 0.10.0
libtpu: 0.0.40
codegen_flags: <defaults>
</compile_context>

<pallas_src>
import math

import jax
import jax.numpy as jnp
from jax.experimental import pallas as pl
from jax.experimental.pallas import tpu as pltpu


# ----------------------------------------------------------------------------
# Pallas kernels
# ----------------------------------------------------------------------------
def _make_conv_kernel(taps, mrow, use_alpha, use_res):
    """Direct-conv kernel: shifted-window matmuls + fused PReLU/residual.

    Ref order: x_phases, weights, [alpha (SMEM)], [residual], out.
      x_phases : (1, S, Mph, Cin)    f32  (one batch element, S stride phases)
      weights  : (KH*KW, Cin, Cout)  bf16
      alpha    : (1,)                f32  (SMEM scalar)
      residual : (1, Mrow, Cout)     f32
      out      : (1, Mrow, Cout)     f32
    """

    def kernel(*refs):
        it = iter(refs)
        x_ref = next(it)
        w_ref = next(it)
        alpha_ref = next(it) if use_alpha else None
        res_ref = next(it) if use_res else None
        o_ref = next(it)

        acc = None
        for t, (ph, off) in enumerate(taps):
            a = x_ref[0, ph, off:off + mrow, :].astype(jnp.bfloat16)
            part = jnp.dot(a, w_ref[t], preferred_element_type=jnp.float32)
            acc = part if acc is None else acc + part
        if use_alpha:
            alpha = alpha_ref[0]
            acc = jnp.where(acc >= 0, acc, alpha * acc)      # PReLU (f32)
        if use_res:
            acc = acc + res_ref[0]                           # residual (f32)
        o_ref[0] = acc.astype(o_ref.dtype)

    return kernel


def _grouped_1x1_kernel(x_ref, w_ref, alpha_ref, o_ref):
    """Fused channel-concat + 1x1 conv + PReLU: out = PReLU(sum_g x[g] @ w[g])."""
    groups = x_ref.shape[0]
    acc = None
    for g in range(groups):
        a = x_ref[g, 0].astype(jnp.bfloat16)
        part = jnp.dot(a, w_ref[g], preferred_element_type=jnp.float32)
        acc = part if acc is None else acc + part
    alpha = alpha_ref[0]
    acc = jnp.where(acc >= 0, acc, alpha * acc)
    o_ref[0] = acc.astype(o_ref.dtype)


# ----------------------------------------------------------------------------
# Conv wrappers (padding / flattening glue in XLA, matmuls in Pallas)
# ----------------------------------------------------------------------------
def conv2d(x, w, stride=1, padding=0, alpha=None, residual=None):
    """2-D conv (bias=False, NHWC activations, HWIO weights) with optional
    fused PReLU (scalar alpha) and fused residual add."""
    N, H, W, Cin = x.shape
    KH, KW, Cin2, Cout = w.shape
    assert Cin == Cin2
    s, p = stride, padding
    OH = (H + 2 * p - KH) // s + 1
    OW = (W + 2 * p - KW) // s + 1
    Hp, Wp = H + 2 * p, W + 2 * p

    xp = jnp.pad(x, ((0, 0), (p, p), (p, p), (0, 0))) if p else x
    A = xp.reshape(N, Hp * Wp, Cin)

    # Each tap (kh, kw) becomes a contiguous slice of one stride-phase of the
    # flattened padded input; the (Wp - OW) junk columns per output row are
    # computed on the MXU and discarded, so no strided access is ever needed.
    mrow = OH * Wp
    taps = []
    for kh in range(KH):
        for kw in range(KW):
            base = kh * Wp + kw
            taps.append((base % s, base // s))
    mph = max(off for _, off in taps) + mrow
    rows_needed = s * mph
    if rows_needed > Hp * Wp:
        A = jnp.pad(A, ((0, 0), (0, rows_needed - Hp * Wp), (0, 0)))
    elif rows_needed < Hp * Wp:
        A = A[:, :rows_needed]
    x_ph = A.reshape(N, mph, s, Cin).transpose(0, 2, 1, 3)   # (N, s, mph, Cin)

    wk = w.reshape(KH * KW, Cin, Cout).astype(jnp.bfloat16)

    use_alpha = alpha is not None
    use_res = residual is not None

    inputs = [x_ph, wk]
    in_specs = [
        pl.BlockSpec((1, s, mph, Cin), lambda n: (n, 0, 0, 0)),
        pl.BlockSpec((KH * KW, Cin, Cout), lambda n: (0, 0, 0)),
    ]
    if use_alpha:
        inputs.append(jnp.asarray(alpha, jnp.float32).reshape(1))
        in_specs.append(pl.BlockSpec(memory_space=pltpu.MemorySpace.SMEM))
    if use_res:
        r = residual
        if OW < Wp:
            r = jnp.pad(r, ((0, 0), (0, 0), (0, Wp - OW), (0, 0)))
        inputs.append(r.reshape(N, mrow, Cout))
        in_specs.append(pl.BlockSpec((1, mrow, Cout), lambda n: (n, 0, 0)))

    out = pl.pallas_call(
        _make_conv_kernel(tuple(taps), mrow, use_alpha, use_res),
        out_shape=jax.ShapeDtypeStruct((N, mrow, Cout), jnp.float32),
        grid=(N,),
        in_specs=in_specs,
        out_specs=pl.BlockSpec((1, mrow, Cout), lambda n: (n, 0, 0)),
        compiler_params=pltpu.CompilerParams(
            dimension_semantics=("parallel",)),
    )(*inputs)

    out = out.reshape(N, OH, Wp, Cout)
    if OW < Wp:
        out = out[:, :, :OW, :]
    return out


def conv_mid_fused(recon_stacked, w_mid, alpha, groups):
    """conv_mid: 1x1 conv over the channel-concat of `groups` recon outputs,
    fused (no concat materialized) with PReLU."""
    GN, H2, W2, C = recon_stacked.shape
    N = GN // groups
    Cout = w_mid.shape[-1]
    M2 = H2 * W2
    x = recon_stacked.reshape(groups, N, M2, C)
    wk = w_mid.reshape(groups, C, Cout).astype(jnp.bfloat16)
    a = jnp.asarray(alpha, jnp.float32).reshape(1)

    out = pl.pallas_call(
        _grouped_1x1_kernel,
        out_shape=jax.ShapeDtypeStruct((N, M2, Cout), jnp.float32),
        grid=(N,),
        in_specs=[
            pl.BlockSpec((groups, 1, M2, C), lambda n: (0, n, 0, 0)),
            pl.BlockSpec((groups, C, Cout), lambda n: (0, 0, 0)),
            pl.BlockSpec(memory_space=pltpu.MemorySpace.SMEM),
        ],
        out_specs=pl.BlockSpec((1, M2, Cout), lambda n: (n, 0, 0)),
        compiler_params=pltpu.CompilerParams(
            dimension_semantics=("parallel",)),
    )(x, wk, a)
    return out.reshape(N, H2, W2, Cout)


def pixel_shuffle(x, r=2):
    # matches torch.nn.PixelShuffle semantics on NHWC tensors
    N, H, W, C4 = x.shape
    C = C4 // (r * r)
    x = x.reshape(N, H, W, C, r, r)
    x = x.transpose(0, 1, 4, 2, 5, 3)
    return x.reshape(N, H * r, W * r, C)


# ----------------------------------------------------------------------------
# Parameter initialization (deterministic, synthetic; weights stored bf16)
# ----------------------------------------------------------------------------
class KeyGen:
    def __init__(self, key):
        self.key = key

    def __call__(self):
        self.key, sub = jax.random.split(self.key)
        return sub


def conv_w(kg, kh, kw, cin, cout):
    std = 1.0 / math.sqrt(kh * kw * cin)
    w = std * jax.random.normal(kg(), (kh, kw, cin, cout), jnp.float32)
    return w.astype(jnp.bfloat16)


def prelu_a():
    return jnp.full((1,), 0.25, jnp.float32)  # PyTorch PReLU default init


def init_residual_block(kg, oc):
    return {
        'c1': conv_w(kg, 3, 3, oc, oc), 'a2': prelu_a(),
        'c3': conv_w(kg, 3, 3, oc, oc), 'a4': prelu_a(),
        'c5': conv_w(kg, 3, 3, oc, 2 * oc), 'a6': prelu_a(),
        'c7': conv_w(kg, 3, 3, 2 * oc, 2 * oc), 'a8': prelu_a(),
        'c9': conv_w(kg, 3, 3, 2 * oc, 4 * oc), 'a10': prelu_a(),
        'c11': conv_w(kg, 3, 3, 4 * oc, 4 * oc), 'a12': prelu_a(),
        'c13': conv_w(kg, 1, 1, 4 * oc, 8 * oc),
        'c15': conv_w(kg, 1, 1, 4 * oc, 2 * oc),
        'c16': conv_w(kg, 3, 3, 2 * oc, 2 * oc), 'a17': prelu_a(),
        'c18': conv_w(kg, 1, 1, 2 * oc, 4 * oc),
        'c20': conv_w(kg, 1, 1, 2 * oc, oc),
        'c21': conv_w(kg, 3, 3, oc, oc), 'a22': prelu_a(),
        'c23': conv_w(kg, 3, 3, oc, oc), 'a24': prelu_a(),
        'c25': conv_w(kg, 3, 3, oc, oc),
    }


def init_recon_block(kg, oc):
    return {
        'c1': conv_w(kg, 3, 3, oc, oc), 'a2': prelu_a(),
        'c3': conv_w(kg, 3, 3, oc, oc), 'a4': prelu_a(),
        'c5': conv_w(kg, 3, 3, oc, oc), 'a6': prelu_a(),
        'c7': conv_w(kg, 3, 3, oc, oc), 'a8': prelu_a(),
        'c9': conv_w(kg, 3, 3, oc, oc), 'a10': prelu_a(),
        'c11': conv_w(kg, 3, 3, oc, oc), 'a12': prelu_a(),
        'c13': conv_w(kg, 3, 3, oc, oc), 'a14': prelu_a(),
        'c15': conv_w(kg, 3, 3, oc, oc), 'a16': prelu_a(),
        'c17': conv_w(kg, 3, 3, oc, oc),
    }


def init_didn(kg, clrch, oc=64):
    return {
        'conv_input': conv_w(kg, 3, 3, clrch, oc), 'a1': prelu_a(),
        'conv_down': conv_w(kg, 3, 3, oc, oc), 'a2': prelu_a(),
        'A': init_residual_block(kg, oc),
        'B': init_residual_block(kg, oc),
        'C': init_residual_block(kg, oc),
        'D': init_residual_block(kg, oc),
        'E': init_residual_block(kg, oc),
        'F': init_residual_block(kg, oc),
        'recon': init_recon_block(kg, oc),
        'conv_mid': conv_w(kg, 1, 1, 6 * oc, oc), 'a3': prelu_a(),
        'conv_mid2': conv_w(kg, 3, 3, oc, oc), 'a4': prelu_a(),
        'conv_output': conv_w(kg, 3, 3, oc // 4, clrch),
    }


# ----------------------------------------------------------------------------
# Forward passes (mirror the PyTorch modules exactly)
# jitted per block so the 6 residual blocks reuse one compiled executable.
# ----------------------------------------------------------------------------
@jax.jit
def residual_block_fwd(p, x):
    res1 = x
    out = conv2d(x, p['c1'], 1, 1, alpha=p['a2'])
    out = conv2d(out, p['c3'], 1, 1, alpha=p['a4'], residual=res1)
    cat1 = out
    out = conv2d(out, p['c5'], 2, 1, alpha=p['a6'])
    res2 = out
    out = conv2d(out, p['c7'], 1, 1, alpha=p['a8'], residual=res2)
    cat2 = out
    out = conv2d(out, p['c9'], 2, 1, alpha=p['a10'])
    res3 = out
    out = conv2d(out, p['c11'], 1, 1, alpha=p['a12'], residual=res3)
    out = pixel_shuffle(conv2d(out, p['c13'], 1, 0), 2)
    out = jnp.concatenate([out, cat2], axis=-1)
    out = conv2d(out, p['c15'], 1, 0)
    res4 = out
    out = conv2d(out, p['c16'], 1, 1, alpha=p['a17'], residual=res4)
    out = pixel_shuffle(conv2d(out, p['c18'], 1, 0), 2)
    out = jnp.concatenate([out, cat1], axis=-1)
    out = conv2d(out, p['c20'], 1, 0)
    res5 = out
    out = conv2d(out, p['c21'], 1, 1, alpha=p['a22'])
    out = conv2d(out, p['c23'], 1, 1, alpha=p['a24'], residual=res5)
    out = conv2d(out, p['c25'], 1, 1, residual=res1)
    return out


@jax.jit
def recon_block_fwd(p, x):
    res1 = x
    out = conv2d(x, p['c1'], 1, 1, alpha=p['a2'])
    out = conv2d(out, p['c3'], 1, 1, alpha=p['a4'], residual=res1)
    res2 = out
    out = conv2d(out, p['c5'], 1, 1, alpha=p['a6'])
    out = conv2d(out, p['c7'], 1, 1, alpha=p['a8'], residual=res2)
    res3 = out
    out = conv2d(out, p['c9'], 1, 1, alpha=p['a10'])
    out = conv2d(out, p['c11'], 1, 1, alpha=p['a12'], residual=res3)
    res4 = out
    out = conv2d(out, p['c13'], 1, 1, alpha=p['a14'])
    out = conv2d(out, p['c15'], 1, 1, alpha=p['a16'], residual=res4)
    out = conv2d(out, p['c17'], 1, 1, residual=res1)
    return out


@jax.jit
def _head_fwd(params, x):
    out = conv2d(x, params['conv_input'], 1, 1, alpha=params['a1'])
    out = conv2d(out, params['conv_down'], 2, 1, alpha=params['a2'])
    return out


@jax.jit
def _tail_fwd(params, recon_stacked, x_in):
    # fused concat + conv_mid (1x1) + PReLU
    out = conv_mid_fused(recon_stacked, params['conv_mid'], params['a3'], 6)
    residual2 = out
    out = conv2d(out, params['conv_mid2'], 1, 1, alpha=params['a4'],
                 residual=residual2)
    out = pixel_shuffle(out, 2)
    # NOTE: conv_output has Cout=4 (narrow lane stores); negligible at this size.
    out = conv2d(out, params['conv_output'], 1, 1, residual=x_in)
    return out


def didn_fwd(params, x_nhwc):
    out = _head_fwd(params, x_nhwc)
    out1 = residual_block_fwd(params['A'], out)
    out2 = residual_block_fwd(params['B'], out1)
    out3 = residual_block_fwd(params['C'], out2)
    out4 = residual_block_fwd(params['D'], out3)
    out5 = residual_block_fwd(params['E'], out4)
    out6 = residual_block_fwd(params['F'], out5)
    # the 6 recon passes share weights -> run them as one batched call
    stacked = jnp.concatenate([out1, out2, out3, out4, out5, out6], axis=0)
    recon_stacked = recon_block_fwd(params['recon'], stacked)
    return _tail_fwd(params, recon_stacked, x_nhwc)


# ----------------------------------------------------------------------------
if __name__ == "__main__":
    kg = KeyGen(jax.random.PRNGKey(0))

    # config.clrch = 4; small spatial size (must be divisible by 4)
    clrch, N, H, W = 4, 2, 16, 16
    params = init_didn(kg, clrch, oc=64)

    x_nchw = jax.random.normal(jax.random.PRNGKey(0), (N, clrch, H, W),
                               jnp.float32)
    x_nhwc = jnp.transpose(x_nchw, (0, 2, 3, 1))

    y_nhwc = didn_fwd(params, x_nhwc)
    y_nchw = jnp.transpose(y_nhwc, (0, 3, 1, 2))
    jax.block_until_ready(y_nchw)

    assert y_nchw.shape == x_nchw.shape, (y_nchw.shape, x_nchw.shape)
    assert bool(jnp.isfinite(y_nchw).all())
    print("KERNEL_OK")
</pallas_src>

<mosaic_0001>
module attributes {stable_mosaic.version = 11 : i64} {
  func.func @kernel(%arg0: i32, %arg1: memref<1x1x326x4xf32, #tpu.memory_space<vmem>>, %arg2: memref<9x4x64xbf16, #tpu.memory_space<vmem>>, %arg3: memref<1xf32, #tpu.memory_space<smem>>, %arg4: memref<1x288x64xf32, #tpu.memory_space<vmem>>) attributes {dimension_semantics = [#tpu.dimension_semantics<parallel>], iteration_bounds = array<i64: 2>, scalar_prefetch = 0 : i64, scratch_operands = 0 : i64, tpu.core_type = #tpu.core_type<tc>, window_params = [{transform_indices = @transform_0, window_bounds = array<i64: 1, 1, 326, 4>}, {pipeline_mode = #tpu.pipeline_mode<synchronous>, transform_indices = @transform_1, window_bounds = array<i64: 9, 4, 64>}, {transform_indices = @transform_2, window_bounds = array<i64: 1>}, {transform_indices = @transform_3, window_bounds = array<i64: 1, 288, 64>}]} {
    %c0 = arith.constant 0 : index
    %c0_0 = arith.constant 0 : index
    %c0_1 = arith.constant 0 : index
    %c0_2 = arith.constant 0 : index
    %0 = vector.load %arg1[%c0, %c0_0, %c0_1, %c0_2] : memref<1x1x326x4xf32, #tpu.memory_space<vmem>>, vector<1x1x288x4xf32>
    %1 = vector.shape_cast %0 : vector<1x1x288x4xf32> to vector<288x4xf32>
    %2 = arith.truncf %1 : vector<288x4xf32> to vector<288x4xbf16>
    %c0_3 = arith.constant 0 : index
    %c0_4 = arith.constant 0 : index
    %c0_5 = arith.constant 0 : index
    %3 = vector.load %arg2[%c0_3, %c0_4, %c0_5] : memref<9x4x64xbf16, #tpu.memory_space<vmem>>, vector<1x4x64xbf16>
    %4 = vector.shape_cast %3 : vector<1x4x64xbf16> to vector<4x64xbf16>
    %cst = arith.constant dense<0.000000e+00> : vector<288x64xf32>
    %5 = tpu.matmul %2, %4, %cst {dimension_numbers = #tpu.dot_dimension_numbers<[1], [0], [0], [1], [0, 0, 1, 1], [], []>} : vector<288x4xbf16>, vector<4x64xbf16>, vector<288x64xf32> -> vector<288x64xf32>
    %c0_6 = arith.constant 0 : index
    %c0_7 = arith.constant 0 : index
    %c1 = arith.constant 1 : index
    %c0_8 = arith.constant 0 : index
    %6 = vector.load %arg1[%c0_6, %c0_7, %c1, %c0_8] : memref<1x1x326x4xf32, #tpu.memory_space<vmem>>, vector<1x1x288x4xf32>
    %7 = vector.shape_cast %6 : vector<1x1x288x4xf32> to vector<288x4xf32>
    %8 = arith.truncf %7 : vector<288x4xf32> to vector<288x4xbf16>
    %c1_9 = arith.constant 1 : index
    %c0_10 = arith.constant 0 : index
    %c0_11 = arith.constant 0 : index
    %9 = vector.load %arg2[%c1_9, %c0_10, %c0_11] : memref<9x4x64xbf16, #tpu.memory_space<vmem>>, vector<1x4x64xbf16>
    %10 = vector.shape_cast %9 : vector<1x4x64xbf16> to vector<4x64xbf16>
    %cst_12 = arith.constant dense<0.000000e+00> : vector<288x64xf32>
    %11 = tpu.matmul %8, %10, %cst_12 {dimension_numbers = #tpu.dot_dimension_numbers<[1], [0], [0], [1], [0, 0, 1, 1], [], []>} : vector<288x4xbf16>, vector<4x64xbf16>, vector<288x64xf32> -> vector<288x64xf32>
    %12 = arith.addf %5, %11 : vector<288x64xf32>
    %c0_13 = arith.constant 0 : index
    %c0_14 = arith.constant 0 : index
    %c2 = arith.constant 2 : index
    %c0_15 = arith.constant 0 : index
    %13 = vector.load %arg1[%c0_13, %c0_14, %c2, %c0_15] : memref<1x1x326x4xf32, #tpu.memory_space<vmem>>, vector<1x1x288x4xf32>
    %14 = vector.shape_cast %13 : vector<1x1x288x4xf32> to vector<288x4xf32>
    %15 = arith.truncf %14 : vector<288x4xf32> to vector<288x4xbf16>
    %c2_16 = arith.constant 2 : index
    %c0_17 = arith.constant 0 : index
    %c0_18 = arith.constant 0 : index
    %16 = vector.load %arg2[%c2_16, %c0_17, %c0_18] : memref<9x4x64xbf16, #tpu.memory_space<vmem>>, vector<1x4x64xbf16>
    %17 = vector.shape_cast %16 : vector<1x4x64xbf16> to vector<4x64xbf16>
    %cst_19 = arith.constant dense<0.000000e+00> : vector<288x64xf32>
    %18 = tpu.matmul %15, %17, %cst_19 {dimension_numbers = #tpu.dot_dimension_numbers<[1], [0], [0], [1], [0, 0, 1, 1], [], []>} : vector<288x4xbf16>, vector<4x64xbf16>, vector<288x64xf32> -> vector<288x64xf32>
    %19 = arith.addf %12, %18 : vector<288x64xf32>
    %c0_20 = arith.constant 0 : index
    %c0_21 = arith.constant 0 : index
    %c18 = arith.constant 18 : index
    %c0_22 = arith.constant 0 : index
    %20 = vector.load %arg1[%c0_20, %c0_21, %c18, %c0_22] : memref<1x1x326x4xf32, #tpu.memory_space<vmem>>, vector<1x1x288x4xf32>
    %21 = vector.shape_cast %20 : vector<1x1x288x4xf32> to vector<288x4xf32>
    %22 = arith.truncf %21 : vector<288x4xf32> to vector<288x4xbf16>
    %c3 = arith.constant 3 : index
    %c0_23 = arith.constant 0 : index
    %c0_24 = arith.constant 0 : index
    %23 = vector.load %arg2[%c3, %c0_23, %c0_24] : memref<9x4x64xbf16, #tpu.memory_space<vmem>>, vector<1x4x64xbf16>
    %24 = vector.shape_cast %23 : vector<1x4x64xbf16> to vector<4x64xbf16>
    %cst_25 = arith.constant dense<0.000000e+00> : vector<288x64xf32>
    %25 = tpu.matmul %22, %24, %cst_25 {dimension_numbers = #tpu.dot_dimension_numbers<[1], [0], [0], [1], [0, 0, 1, 1], [], []>} : vector<288x4xbf16>, vector<4x64xbf16>, vector<288x64xf32> -> vector<288x64xf32>
    %26 = arith.addf %19, %25 : vector<288x64xf32>
    %c0_26 = arith.constant 0 : index
    %c0_27 = arith.constant 0 : index
    %c19 = arith.constant 19 : index
    %c0_28 = arith.constant 0 : index
    %27 = vector.load %arg1[%c0_26, %c0_27, %c19, %c0_28] : memref<1x1x326x4xf32, #tpu.memory_space<vmem>>, vector<1x1x288x4xf32>
    %28 = vector.shape_cast %27 : vector<1x1x288x4xf32> to vector<288x4xf32>
    %29 = arith.truncf %28 : vector<288x4xf32> to vector<288x4xbf16>
    %c4 = arith.constant 4 : index
    %c0_29 = arith.constant 0 : index
    %c0_30 = arith.constant 0 : index
    %30 = vector.load %arg2[%c4, %c0_29, %c0_30] : memref<9x4x64xbf16, #tpu.memory_space<vmem>>, vector<1x4x64xbf16>
    %31 = vector.shape_cast %30 : vector<1x4x64xbf16> to vector<4x64xbf16>
    %cst_31 = arith.constant dense<0.000000e+00> : vector<288x64xf32>
    %32 = tpu.matmul %29, %31, %cst_31 {dimension_numbers = #tpu.dot_dimension_numbers<[1], [0], [0], [1], [0, 0, 1, 1], [], []>} : vector<288x4xbf16>, vector<4x64xbf16>, vector<288x64xf32> -> vector<288x64xf32>
    %33 = arith.addf %26, %32 : vector<288x64xf32>
    %c0_32 = arith.constant 0 : index
    %c0_33 = arith.constant 0 : index
    %c20 = arith.constant 20 : index
    %c0_34 = arith.constant 0 : index
    %34 = vector.load %arg1[%c0_32, %c0_33, %c20, %c0_34] : memref<1x1x326x4xf32, #tpu.memory_space<vmem>>, vector<1x1x288x4xf32>
    %35 = vector.shape_cast %34 : vector<1x1x288x4xf32> to vector<288x4xf32>
    %36 = arith.truncf %35 : vector<288x4xf32> to vector<288x4xbf16>
    %c5 = arith.constant 5 : index
    %c0_35 = arith.constant 0 : index
    %c0_36 = arith.constant 0 : index
    %37 = vector.load %arg2[%c5, %c0_35, %c0_36] : memref<9x4x64xbf16, #tpu.memory_space<vmem>>, vector<1x4x64xbf16>
    %38 = vector.shape_cast %37 : vector<1x4x64xbf16> to vector<4x64xbf16>
    %cst_37 = arith.constant dense<0.000000e+00> : vector<288x64xf32>
    %39 = tpu.matmul %36, %38, %cst_37 {dimension_numbers = #tpu.dot_dimension_numbers<[1], [0], [0], [1], [0, 0, 1, 1], [], []>} : vector<288x4xbf16>, vector<4x64xbf16>, vector<288x64xf32> -> vector<288x64xf32>
    %40 = arith.addf %33, %39 : vector<288x64xf32>
    %c0_38 = arith.constant 0 : index
    %c0_39 = arith.constant 0 : index
    %c36 = arith.constant 36 : index
    %c0_40 = arith.constant 0 : index
    %41 = vector.load %arg1[%c0_38, %c0_39, %c36, %c0_40] : memref<1x1x326x4xf32, #tpu.memory_space<vmem>>, vector<1x1x288x4xf32>
    %42 = vector.shape_cast %41 : vector<1x1x288x4xf32> to vector<288x4xf32>
    %43 = arith.truncf %42 : vector<288x4xf32> to vector<288x4xbf16>
    %c6 = arith.constant 6 : index
    %c0_41 = arith.constant 0 : index
    %c0_42 = arith.constant 0 : index
    %44 = vector.load %arg2[%c6, %c0_41, %c0_42] : memref<9x4x64xbf16, #tpu.memory_space<vmem>>, vector<1x4x64xbf16>
    %45 = vector.shape_cast %44 : vector<1x4x64xbf16> to vector<4x64xbf16>
    %cst_43 = arith.constant dense<0.000000e+00> : vector<288x64xf32>
    %46 = tpu.matmul %43, %45, %cst_43 {dimension_numbers = #tpu.dot_dimension_numbers<[1], [0], [0], [1], [0, 0, 1, 1], [], []>} : vector<288x4xbf16>, vector<4x64xbf16>, vector<288x64xf32> -> vector<288x64xf32>
    %47 = arith.addf %40, %46 : vector<288x64xf32>
    %c0_44 = arith.constant 0 : index
    %c0_45 = arith.constant 0 : index
    %c37 = arith.constant 37 : index
    %c0_46 = arith.constant 0 : index
    %48 = vector.load %arg1[%c0_44, %c0_45, %c37, %c0_46] : memref<1x1x326x4xf32, #tpu.memory_space<vmem>>, vector<1x1x288x4xf32>
    %49 = vector.shape_cast %48 : vector<1x1x288x4xf32> to vector<288x4xf32>
    %50 = arith.truncf %49 : vector<288x4xf32> to vector<288x4xbf16>
    %c7 = arith.constant 7 : index
    %c0_47 = arith.constant 0 : index
    %c0_48 = arith.constant 0 : index
    %51 = vector.load %arg2[%c7, %c0_47, %c0_48] : memref<9x4x64xbf16, #tpu.memory_space<vmem>>, vector<1x4x64xbf16>
    %52 = vector.shape_cast %51 : vector<1x4x64xbf16> to vector<4x64xbf16>
    %cst_49 = arith.constant dense<0.000000e+00> : vector<288x64xf32>
    %53 = tpu.matmul %50, %52, %cst_49 {dimension_numbers = #tpu.dot_dimension_numbers<[1], [0], [0], [1], [0, 0, 1, 1], [], []>} : vector<288x4xbf16>, vector<4x64xbf16>, vector<288x64xf32> -> vector<288x64xf32>
    %54 = arith.addf %47, %53 : vector<288x64xf32>
    %c0_50 = arith.constant 0 : index
    %c0_51 = arith.constant 0 : index
    %c38 = arith.constant 38 : index
    %c0_52 = arith.constant 0 : index
    %55 = vector.load %arg1[%c0_50, %c0_51, %c38, %c0_52] : memref<1x1x326x4xf32, #tpu.memory_space<vmem>>, vector<1x1x288x4xf32>
    %56 = vector.shape_cast %55 : vector<1x1x288x4xf32> to vector<288x4xf32>
    %57 = arith.truncf %56 : vector<288x4xf32> to vector<288x4xbf16>
    %c8 = arith.constant 8 : index
    %c0_53 = arith.constant 0 : index
    %c0_54 = arith.constant 0 : index
    %58 = vector.load %arg2[%c8, %c0_53, %c0_54] : memref<9x4x64xbf16, #tpu.memory_space<vmem>>, vector<1x4x64xbf16>
    %59 = vector.shape_cast %58 : vector<1x4x64xbf16> to vector<4x64xbf16>
    %cst_55 = arith.constant dense<0.000000e+00> : vector<288x64xf32>
    %60 = tpu.matmul %57, %59, %cst_55 {dimension_numbers = #tpu.dot_dimension_numbers<[1], [0], [0], [1], [0, 0, 1, 1], [], []>} : vector<288x4xbf16>, vector<4x64xbf16>, vector<288x64xf32> -> vector<288x64xf32>
    %61 = arith.addf %54, %60 : vector<288x64xf32>
    %c0_56 = arith.constant 0 : index
    %62 = memref.load %arg3[%c0_56] : memref<1xf32, #tpu.memory_space<smem>>
    %cst_57 = arith.constant 0.000000e+00 : f32
    %63 = vector.broadcast %cst_57 : f32 to vector<288x64xf32>
    %64 = arith.cmpf oge, %61, %63 : vector<288x64xf32>
    %65 = vector.broadcast %62 : f32 to vector<288x64xf32>
    %66 = arith.mulf %65, %61 : vector<288x64xf32>
    %67 = arith.select %64, %61, %66 : vector<288x64xi1>, vector<288x64xf32>
    %c0_58 = arith.constant 0 : index
    %c0_59 = arith.constant 0 : index
    %c0_60 = arith.constant 0 : index
    %68 = vector.load %arg4[%c0_58, %c0_59, %c0_60] : memref<1x288x64xf32, #tpu.memory_space<vmem>>, vector<1x288x64xf32>
    %69 = vector.shape_cast %68 : vector<1x288x64xf32> to vector<288x64xf32>
    %70 = vector.shape_cast %67 : vector<288x64xf32> to vector<1x288x64xf32>
    tpu.vector_store %arg4[%c0_58, %c0_59, %c0_60], %70 {strides = array<i32>} : memref<1x288x64xf32, #tpu.memory_space<vmem>>, vector<1x288x64xf32>,
    return
  }
  func.func @transform_0(%arg0: i32) -> (i32, i32, i32, i32) {
    %c0_i32 = arith.constant 0 : i32
    %c0_i32_0 = arith.constant 0 : i32
    %c0_i32_1 = arith.constant 0 : i32
    %c0_i32_2 = arith.constant 0 : i32
    return %arg0, %c0_i32, %c0_i32_0, %c0_i32_1 : i32, i32, i32, i32
  }
  func.func @transform_1(%arg0: i32) -> (i32, i32, i32) {
    %c0_i32 = arith.constant 0 : i32
    %c0_i32_0 = arith.constant 0 : i32
    %c0_i32_1 = arith.constant 0 : i32
    %c0_i32_2 = arith.constant 0 : i32
    return %c0_i32, %c0_i32_0, %c0_i32_1 : i32, i32, i32
  }
  func.func @transform_2(%arg0: i32) -> i32 {
    %c0_i32 = arith.constant 0 : i32
    %c0_i32_0 = arith.constant 0 : i32
    return %c0_i32 : i32
  }
  func.func @transform_3(%arg0: i32) -> (i32, i32, i32) {
    %c0_i32 = arith.constant 0 : i32
    %c0_i32_0 = arith.constant 0 : i32
    %c0_i32_1 = arith.constant 0 : i32
    return %arg0, %c0_i32, %c0_i32_0 : i32, i32, i32
  }
}

module attributes {stable_mosaic.version = 11 : i64} {
  func.func @kernel(%arg0: i32, %arg1: memref<1x2x163x64xf32, #tpu.memory_space<vmem>>, %arg2: memref<9x64x64xbf16, #tpu.memory_space<vmem>>, %arg3: memref<1xf32, #tpu.memory_space<smem>>, %arg4: memref<1x144x64xf32, #tpu.memory_space<vmem>>) attributes {dimension_semantics = [#tpu.dimension_semantics<parallel>], iteration_bounds = array<i64: 2>, scalar_prefetch = 0 : i64, scratch_operands = 0 : i64, tpu.core_type = #tpu.core_type<tc>, window_params = [{transform_indices = @transform_0, window_bounds = array<i64: 1, 2, 163, 64>}, {pipeline_mode = #tpu.pipeline_mode<synchronous>, transform_indices = @transform_1, window_bounds = array<i64: 9, 64, 64>}, {transform_indices = @transform_2, window_bounds = array<i64: 1>}, {transform_indices = @transform_3, window_bounds = array<i64: 1, 144, 64>}]} {
    %c0 = arith.constant 0 : index
    %c0_0 = arith.constant 0 : index
    %c0_1 = arith.constant 0 : index
    %c0_2 = arith.constant 0 : index
    %0 = vector.load %arg1[%c0, %c0_0, %c0_1, %c0_2] : memref<1x2x163x64xf32, #tpu.memory_space<vmem>>, vector<1x1x144x64xf32>
    %1 = vector.shape_cast %0 : vector<1x1x144x64xf32> to vector<144x64xf32>
    %2 = arith.truncf %1 : vector<144x64xf32> to vector<144x64xbf16>
    %c0_3 = arith.constant 0 : index
    %c0_4 = arith.constant 0 : index
    %c0_5 = arith.constant 0 : index
    %3 = vector.load %arg2[%c0_3, %c0_4, %c0_5] : memref<9x64x64xbf16, #tpu.memory_space<vmem>>, vector<1x64x64xbf16>
    %4 = vector.shape_cast %3 : vector<1x64x64xbf16> to vector<64x64xbf16>
    %cst = arith.constant dense<0.000000e+00> : vector<144x64xf32>
    %5 = tpu.matmul %2, %4, %cst {dimension_numbers = #tpu.dot_dimension_numbers<[1], [0], [0], [1], [0, 0, 1, 1], [], []>} : vector<144x64xbf16>, vector<64x64xbf16>, vector<144x64xf32> -> vector<144x64xf32>
    %c0_6 = arith.constant 0 : index
    %c1 = arith.constant 1 : index
    %c0_7 = arith.constant 0 : index
    %c0_8 = arith.constant 0 : index
    %6 = vector.load %arg1[%c0_6, %c1, %c0_7, %c0_8] : memref<1x2x163x64xf32, #tpu.memory_space<vmem>>, vector<1x1x144x64xf32>
    %7 = vector.shape_cast %6 : vector<1x1x144x64xf32> to vector<144x64xf32>
    %8 = arith.truncf %7 : vector<144x64xf32> to vector<144x64xbf16>
    %c1_9 = arith.constant 1 : index
    %c0_10 = arith.constant 0 : index
    %c0_11 = arith.constant 0 : index
    %9 = vector.load %arg2[%c1_9, %c0_10, %c0_11] : memref<9x64x64xbf16, #tpu.memory_space<vmem>>, vector<1x64x64xbf16>
    %10 = vector.shape_cast %9 : vector<1x64x64xbf16> to vector<64x64xbf16>
    %cst_12 = arith.constant dense<0.000000e+00> : vector<144x64xf32>
    %11 = tpu.matmul %8, %10, %cst_12 {dimension_numbers = #tpu.dot_dimension_numbers<[1], [0], [0], [1], [0, 0, 1, 1], [], []>} : vector<144x64xbf16>, vector<64x64xbf16>, vector<144x64xf32> -> vector<144x64xf32>
    %12 = arith.addf %5, %11 : vector<144x64xf32>
    %c0_13 = arith.constant 0 : index
    %c0_14 = arith.constant 0 : index
    %c1_15 = arith.constant 1 : index
    %c0_16 = arith.constant 0 : index
    %13 = vector.load %arg1[%c0_13, %c0_14, %c1_15, %c0_16] : memref<1x2x163x64xf32, #tpu.memory_space<vmem>>, vector<1x1x144x64xf32>
    %14 = vector.shape_cast %13 : vector<1x1x144x64xf32> to vector<144x64xf32>
    %15 = arith.truncf %14 : vector<144x64xf32> to vector<144x64xbf16>
    %c2 = arith.constant 2 : index
    %c0_17 = arith.constant 0 : index
    %c0_18 = arith.constant 0 : index
    %16 = vector.load %arg2[%c2, %c0_17, %c0_18] : memref<9x64x64xbf16, #tpu.memory_space<vmem>>, vector<1x64x64xbf16>
    %17 = vector.shape_cast %16 : vector<1x64x64xbf16> to vector<64x64xbf16>
    %cst_19 = arith.constant dense<0.000000e+00> : vector<144x64xf32>
    %18 = tpu.matmul %15, %17, %cst_19 {dimension_numbers = #tpu.dot_dimension_numbers<[1], [0], [0], [1], [0, 0, 1, 1], [], []>} : vector<144x64xbf16>, vector<64x64xbf16>, vector<144x64xf32> -> vector<144x64xf32>
    %19 = arith.addf %12, %18 : vector<144x64xf32>
    %c0_20 = arith.constant 0 : index
    %c0_21 = arith.constant 0 : index
    %c9 = arith.constant 9 : index
    %c0_22 = arith.constant 0 : index
    %20 = vector.load %arg1[%c0_20, %c0_21, %c9, %c0_22] : memref<1x2x163x64xf32, #tpu.memory_space<vmem>>, vector<1x1x144x64xf32>
    %21 = vector.shape_cast %20 : vector<1x1x144x64xf32> to vector<144x64xf32>
    %22 = arith.truncf %21 : vector<144x64xf32> to vector<144x64xbf16>
    %c3 = arith.constant 3 : index
    %c0_23 = arith.constant 0 : index
    %c0_24 = arith.constant 0 : index
    %23 = vector.load %arg2[%c3, %c0_23, %c0_24] : memref<9x64x64xbf16, #tpu.memory_space<vmem>>, vector<1x64x64xbf16>
    %24 = vector.shape_cast %23 : vector<1x64x64xbf16> to vector<64x64xbf16>
    %cst_25 = arith.constant dense<0.000000e+00> : vector<144x64xf32>
    %25 = tpu.matmul %22, %24, %cst_25 {dimension_numbers = #tpu.dot_dimension_numbers<[1], [0], [0], [1], [0, 0, 1, 1], [], []>} : vector<144x64xbf16>, vector<64x64xbf16>, vector<144x64xf32> -> vector<144x64xf32>
    %26 = arith.addf %19, %25 : vector<144x64xf32>
    %c0_26 = arith.constant 0 : index
    %c1_27 = arith.constant 1 : index
    %c9_28 = arith.constant 9 : index
    %c0_29 = arith.constant 0 : index
    %27 = vector.load %arg1[%c0_26, %c1_27, %c9_28, %c0_29] : memref<1x2x163x64xf32, #tpu.memory_space<vmem>>, vector<1x1x144x64xf32>
    %28 = vector.shape_cast %27 : vector<1x1x144x64xf32> to vector<144x64xf32>
    %29 = arith.truncf %28 : vector<144x64xf32> to vector<144x64xbf16>
    %c4 = arith.constant 4 : index
    %c0_30 = arith.constant 0 : index
    %c0_31 = arith.constant 0 : index
    %30 = vector.load %arg2[%c4, %c0_30, %c0_31] : memref<9x64x64xbf16, #tpu.memory_space<vmem>>, vector<1x64x64xbf16>
    %31 = vector.shape_cast %30 : vector<1x64x64xbf16> to vector<64x64xbf16>
    %cst_32 = arith.constant dense<0.000000e+00> : vector<144x64xf32>
    %32 = tpu.matmul %29, %31, %cst_32 {dimension_numbers = #tpu.dot_dimension_numbers<[1], [0], [0], [1], [0, 0, 1, 1], [], []>} : vector<144x64xbf16>, vector<64x64xbf16>, vector<144x64xf32> -> vector<144x64xf32>
    %33 = arith.addf %26, %32 : vector<144x64xf32>
    %c0_33 = arith.constant 0 : index
    %c0_34 = arith.constant 0 : index
    %c10 = arith.constant 10 : index
    %c0_35 = arith.constant 0 : index
    %34 = vector.load %arg1[%c0_33, %c0_34, %c10, %c0_35] : memref<1x2x163x64xf32, #tpu.memory_space<vmem>>, vector<1x1x144x64xf32>
    %35 = vector.shape_cast %34 : vector<1x1x144x64xf32> to vector<144x64xf32>
    %36 = arith.truncf %35 : vector<144x64xf32> to vector<144x64xbf16>
    %c5 = arith.constant 5 : index
    %c0_36 = arith.constant 0 : index
    %c0_37 = arith.constant 0 : index
    %37 = vector.load %arg2[%c5, %c0_36, %c0_37] : memref<9x64x64xbf16, #tpu.memory_space<vmem>>, vector<1x64x64xbf16>
    %38 = vector.shape_cast %37 : vector<1x64x64xbf16> to vector<64x64xbf16>
    %cst_38 = arith.constant dense<0.000000e+00> : vector<144x64xf32>
    %39 = tpu.matmul %36, %38, %cst_38 {dimension_numbers = #tpu.dot_dimension_numbers<[1], [0], [0], [1], [0, 0, 1, 1], [], []>} : vector<144x64xbf16>, vector<64x64xbf16>, vector<144x64xf32> -> vector<144x64xf32>
    %40 = arith.addf %33, %39 : vector<144x64xf32>
    %c0_39 = arith.constant 0 : index
    %c0_40 = arith.constant 0 : index
    %c18 = arith.constant 18 : index
    %c0_41 = arith.constant 0 : index
    %41 = vector.load %arg1[%c0_39, %c0_40, %c18, %c0_41] : memref<1x2x163x64xf32, #tpu.memory_space<vmem>>, vector<1x1x144x64xf32>
    %42 = vector.shape_cast %41 : vector<1x1x144x64xf32> to vector<144x64xf32>
    %43 = arith.truncf %42 : vector<144x64xf32> to vector<144x64xbf16>
    %c6 = arith.constant 6 : index
    %c0_42 = arith.constant 0 : index
    %c0_43 = arith.constant 0 : index
    %44 = vector.load %arg2[%c6, %c0_42, %c0_43] : memref<9x64x64xbf16, #tpu.memory_space<vmem>>, vector<1x64x64xbf16>
    %45 = vector.shape_cast %44 : vector<1x64x64xbf16> to vector<64x64xbf16>
    %cst_44 = arith.constant dense<0.000000e+00> : vector<144x64xf32>
    %46 = tpu.matmul %43, %45, %cst_44 {dimension_numbers = #tpu.dot_dimension_numbers<[1], [0], [0], [1], [0, 0, 1, 1], [], []>} : vector<144x64xbf16>, vector<64x64xbf16>, vector<144x64xf32> -> vector<144x64xf32>
    %47 = arith.addf %40, %46 : vector<144x64xf32>
    %c0_45 = arith.constant 0 : index
    %c1_46 = arith.constant 1 : index
    %c18_47 = arith.constant 18 : index
    %c0_48 = arith.constant 0 : index
    %48 = vector.load %arg1[%c0_45, %c1_46, %c18_47, %c0_48] : memref<1x2x163x64xf32, #tpu.memory_space<vmem>>, vector<1x1x144x64xf32>
    %49 = vector.shape_cast %48 : vector<1x1x144x64xf32> to vector<144x64xf32>
    %50 = arith.truncf %49 : vector<144x64xf32> to vector<144x64xbf16>
    %c7 = arith.constant 7 : index
    %c0_49 = arith.constant 0 : index
    %c0_50 = arith.constant 0 : index
    %51 = vector.load %arg2[%c7, %c0_49, %c0_50] : memref<9x64x64xbf16, #tpu.memory_space<vmem>>, vector<1x64x64xbf16>
    %52 = vector.shape_cast %51 : vector<1x64x64xbf16> to vector<64x64xbf16>
    %cst_51 = arith.constant dense<0.000000e+00> : vector<144x64xf32>
    %53 = tpu.matmul %50, %52, %cst_51 {dimension_numbers = #tpu.dot_dimension_numbers<[1], [0], [0], [1], [0, 0, 1, 1], [], []>} : vector<144x64xbf16>, vector<64x64xbf16>, vector<144x64xf32> -> vector<144x64xf32>
    %54 = arith.addf %47, %53 : vector<144x64xf32>
    %c0_52 = arith.constant 0 : index
    %c0_53 = arith.constant 0 : index
    %c19 = arith.constant 19 : index
    %c0_54 = arith.constant 0 : index
    %55 = vector.load %arg1[%c0_52, %c0_53, %c19, %c0_54] : memref<1x2x163x64xf32, #tpu.memory_space<vmem>>, vector<1x1x144x64xf32>
    %56 = vector.shape_cast %55 : vector<1x1x144x64xf32> to vector<144x64xf32>
    %57 = arith.truncf %56 : vector<144x64xf32> to vector<144x64xbf16>
    %c8 = arith.constant 8 : index
    %c0_55 = arith.constant 0 : index
    %c0_56 = arith.constant 0 : index
    %58 = vector.load %arg2[%c8, %c0_55, %c0_56] : memref<9x64x64xbf16, #tpu.memory_space<vmem>>, vector<1x64x64xbf16>
    %59 = vector.shape_cast %58 : vector<1x64x64xbf16> to vector<64x64xbf16>
    %cst_57 = arith.constant dense<0.000000e+00> : vector<144x64xf32>
    %60 = tpu.matmul %57, %59, %cst_57 {dimension_numbers = #tpu.dot_dimension_numbers<[1], [0], [0], [1], [0, 0, 1, 1], [], []>} : vector<144x64xbf16>, vector<64x64xbf16>, vector<144x64xf32> -> vector<144x64xf32>
    %61 = arith.addf %54, %60 : vector<144x64xf32>
    %c0_58 = arith.constant 0 : index
    %62 = memref.load %arg3[%c0_58] : memref<1xf32, #tpu.memory_space<smem>>
    %cst_59 = arith.constant 0.000000e+00 : f32
    %63 = vector.broadcast %cst_59 : f32 to vector<144x64xf32>
    %64 = arith.cmpf oge, %61, %63 : vector<144x64xf32>
    %65 = vector.broadcast %62 : f32 to vector<144x64xf32>
    %66 = arith.mulf %65, %61 : vector<144x64xf32>
    %67 = arith.select %64, %61, %66 : vector<144x64xi1>, vector<144x64xf32>
    %c0_60 = arith.constant 0 : index
    %c0_61 = arith.constant 0 : index
    %c0_62 = arith.constant 0 : index
    %68 = vector.load %arg4[%c0_60, %c0_61, %c0_62] : memref<1x144x64xf32, #tpu.memory_space<vmem>>, vector<1x144x64xf32>
    %69 = vector.shape_cast %68 : vector<1x144x64xf32> to vector<144x64xf32>
    %70 = vector.shape_cast %67 : vector<144x64xf32> to vector<1x144x64xf32>
    tpu.vector_store %arg4[%c0_60, %c0_61, %c0_62], %70 {strides = array<i32>} : memref<1x144x64xf32, #tpu.memory_space<vmem>>, vector<1x144x64xf32>,
    return
  }
  func.func @transform_0(%arg0: i32) -> (i32, i32, i32, i32) {
    %c0_i32 = arith.constant 0 : i32
    %c0_i32_0 = arith.constant 0 : i32
    %c0_i32_1 = arith.constant 0 : i32
    %c0_i32_2 = arith.constant 0 : i32
    return %arg0, %c0_i32, %c0_i32_0, %c0_i32_1 : i32, i32, i32, i32
  }
  func.func @transform_1(%arg0: i32) -> (i32, i32, i32) {
    %c0_i32 = arith.constant 0 : i32
    %c0_i32_0 = arith.constant 0 : i32
    %c0_i32_1 = arith.constant 0 : i32
    %c0_i32_2 = arith.constant 0 : i32
    return %c0_i32, %c0_i32_0, %c0_i32_1 : i32, i32, i32
  }
  func.func @transform_2(%arg0: i32) -> i32 {
    %c0_i32 = arith.constant 0 : i32
    %c0_i32_0 = arith.constant 0 : i32
    return %c0_i32 : i32
  }
  func.func @transform_3(%arg0: i32) -> (i32, i32, i32) {
    %c0_i32 = arith.constant 0 : i32
    %c0_i32_0 = arith.constant 0 : i32
    %c0_i32_1 = arith.constant 0 : i32
    return %arg0, %c0_i32, %c0_i32_0 : i32, i32, i32
  }
}

</mosaic_0001>

<llo_original>
// kernel: _head_fwd.2
$region0: #{_head_fwd.2}
  #allocation0 [shape = 'u32[]', space=smem, size = 0x4, offset = 0x4, fixed_abs, tag = 'smem constant byte address 0x4 - core index']
  #allocation1 [shape = 'u32[144,128]{1,0:T(1,128)}', space=vmem, size = 0x12000, scoped, tag = 'internal scratch']
  #allocation2 [shape = 'f32[1]{0:T(128)S(6)}', space=smem, size = 0x200, scoped, tag = 'scoped memory for _head_fwd.2']
  %s0 = inlined_call_operand.vmem [shape: f32[2,1,326,4], index: 0, kind: input, shape index: {}]
  %s1 = inlined_call_operand.vmem [shape: bf16[9,4,64], index: 1, kind: input, shape index: {}]
  %s2 = inlined_call_operand.<no memory space> [shape: f32[1], index: 2, kind: input, shape index: {}]
  %s3 = inlined_call_operand.vmem [shape: f32[2,288,64], index: 3, kind: output, shape index: {}]
  %s4 = sld [smem:[#allocation0]]
  $region45: #{_head_fwd.2} parent=0
    _
  %s6 = ssub.s32 1, %s4
  %s7 = scalar_select 0, %s6, %s4
  %8 = sst [smem:[#allocation2]] %s2
  loop: start=0, step=1, limit=4
  $region2: #{_head_fwd.2} parent=0 // loop_pre_header
    _
  $region3: #{_head_fwd.2} parent=0 // loop_header
    %s10 = sphi 0, %s14
    %p11 = scmp.ge.s32.totalorder %s10, 4
    %s20 = sphi 0, %s22
    %s23 = sphi 0, %s20
    %s24 = sphi 0, %s23
    %s40 = sphi 0, %s24
    %s44 = sphi 0, %s44
    %s46 = sphi 0, %s44
    %s47 = sphi 0, %s46
    %s61 = sphi 0, %s47
    %s65 = sphi 0, %s65
    %s67 = sphi 0, %s65
    %s68 = sphi 0, %s67
    %s82 = sphi 0, %s68
    %s88 = sphi 0, %s90
    %s91 = sphi 0, %s88
    %s92 = sphi 0, %s91
    %s108 = sphi 0, %s92
  $region4: #{_head_fwd.2} parent=0 // loop_header_branch
    %13 = sbr.rel (%p11) target = $region8
  $region5: #{_head_fwd.2} parent=0 // loop_body
    %s15 = ssub.s32 %s10, 1
    %s16 = ssub.s32 %s10, 2
    %s17 = sadd.s32 %s10, 1
    %s18 = ssub.s32 %s10, %s17
    %p19 = scmp.eq.s32.totalorder %s18, 0
    %s21 = sadd.s32 %s20, 1
    %s22 = scalar_select %p19, %s20, %s21
    %p25 = pneg %p19
    %p26 = scmp.eq.s32.totalorder %s10, 1
    %p27 = por %p25, %p26
    %p28 = scmp.ne.s32.totalorder %s20, %s23
    %p29 = scmp.eq.s32.totalorder %s10, 0
    %p30 = por %p28, %p29
    %p31 = scmp.ne.s32.totalorder %s20, %s23
    %p32 = scmp.eq.s32.totalorder %s15, 1
    %p33 = por %p31, %p32
    %p34 = scmp.ne.s32.totalorder %s23, %s24
    %p35 = scmp.eq.s32.totalorder %s15, 0
    %p36 = por %p34, %p35
    %p37 = scmp.ne.s32.totalorder %s23, %s24
    %p38 = scmp.eq.s32.totalorder %s16, 1
    %p39 = por %p37, %p38
    %p41 = scmp.ne.s32.totalorder %s24, %s40
    %p42 = scmp.eq.s32.totalorder %s16, 0
    %p43 = por %p41, %p42
    %s45 = sadd.s32 %s44, 1
    %p48 = scmp.eq.s32.totalorder %s10, 1
    %p49 = scmp.ne.s32.totalorder %s44, %s46
    %p50 = scmp.eq.s32.totalorder %s10, 0
    %p51 = por %p49, %p50
    %p52 = scmp.ne.s32.totalorder %s44, %s46
    %p53 = scmp.eq.s32.totalorder %s15, 1
    %p54 = por %p52, %p53
    %p55 = scmp.ne.s32.totalorder %s46, %s47
    %p56 = scmp.eq.s32.totalorder %s15, 0
    %p57 = por %p55, %p56
    %p58 = scmp.ne.s32.totalorder %s46, %s47
    %p59 = scmp.eq.s32.totalorder %s16, 1
    %p60 = por %p58, %p59
    %p62 = scmp.ne.s32.totalorder %s47, %s61
    %p63 = scmp.eq.s32.totalorder %s16, 0
    %p64 = por %p62, %p63
    %s66 = sadd.s32 %s65, 1
    %p69 = scmp.eq.s32.totalorder %s10, 1
    %p70 = scmp.ne.s32.totalorder %s65, %s67
    %p71 = scmp.eq.s32.totalorder %s10, 0
    %p72 = por %p70, %p71
    %p73 = scmp.ne.s32.totalorder %s65, %s67
    %p74 = scmp.eq.s32.totalorder %s15, 1
    %p75 = por %p73, %p74
    %p76 = scmp.ne.s32.totalorder %s67, %s68
    %p77 = scmp.eq.s32.totalorder %s15, 0
    %p78 = por %p76, %p77
    %p79 = scmp.ne.s32.totalorder %s67, %s68
    %p80 = scmp.eq.s32.totalorder %s16, 1
    %p81 = por %p79, %p80
    %p83 = scmp.ne.s32.totalorder %s68, %s82
    %p84 = scmp.eq.s32.totalorder %s16, 0
    %p85 = por %p83, %p84
    %s86 = ssub.s32 %s10, %s17
    %p87 = scmp.eq.s32.totalorder %s86, 0
    %s89 = sadd.s32 %s88, 1
    %s90 = scalar_select %p87, %s88, %s89
    %p93 = pneg %p87
    %p94 = scmp.eq.s32.totalorder %s10, 1
    %p95 = por %p93, %p94
    %p96 = scmp.ne.s32.totalorder %s88, %s91
    %p97 = scmp.eq.s32.totalorder %s10, 0
    %p98 = por %p96, %p97
    %p99 = scmp.ne.s32.totalorder %s88, %s91
    %p100 = scmp.eq.s32.totalorder %s15, 1
    %p101 = por %p99, %p100
    %p102 = scmp.ne.s32.totalorder %s91, %s92
    %p103 = scmp.eq.s32.totalorder %s15, 0
    %p104 = por %p102, %p103
    %p105 = scmp.ne.s32.totalorder %s91, %s92
    %p106 = scmp.eq.s32.totalorder %s16, 1
    %p107 = por %p105, %p106
    %p109 = scmp.ne.s32.totalorder %s92, %s108
    %p110 = scmp.eq.s32.totalorder %s16, 0
    %p111 = por %p109, %p110
    %p112 = scmp.le.s32.totalorder 1, %s10
    %p113 = scmp.lt.s32.totalorder %s10, 3
    %p114 = pnand %p112, %p113
    %p115 = pneg %p114
    // Predicated region
    $region9: #{_head_fwd.2} parent=5 // pred_check
      _
    $region10: #{_head_fwd.2} parent=5 // pred_check_branch
      %117 = sbr.rel (%p114) target = $region12
    $region11: #{_head_fwd.2} parent=5 // pred_region
      %s118 = ssub.s32 %s10, 1
      // Predicated region
      $region13: #{_head_fwd.2} parent=11 // pred_check
        %p119 = pneg %p57
      $region14: #{_head_fwd.2} parent=11 // pred_check_branch
        %121 = sbr.rel (%p119) target = $region16
      $region15: #{_head_fwd.2} parent=11 // pred_region
        _
      $region16: #{_head_fwd.2} parent=11 // pred_fallthru
        _
      // Predicated region
      $region17: #{_head_fwd.2} parent=11 // pred_check
        %p122 = pneg %p78
      $region18: #{_head_fwd.2} parent=11 // pred_check_branch
        %124 = sbr.rel (%p122) target = $region20
      $region19: #{_head_fwd.2} parent=11 // pred_region
        _
      $region20: #{_head_fwd.2} parent=11 // pred_fallthru
        _
    $region12: #{_head_fwd.2} parent=5 // pred_fallthru
      _
    %p125 = scmp.lt.s32.totalorder %s10, 2
    // Predicated region
    $region21: #{_head_fwd.2} parent=5 // pred_check
      %p126 = pneg %p125
    $region22: #{_head_fwd.2} parent=5 // pred_check_branch
      %128 = sbr.rel (%p126) target = $region24
    $region23: #{_head_fwd.2} parent=5 // pred_region
      // Predicated region
      $region25: #{_head_fwd.2} parent=23 // pred_check
        %p129 = pneg %p30
      $region26: #{_head_fwd.2} parent=23 // pred_check_branch
        %131 = sbr.rel (%p129) target = $region28
      $region27: #{_head_fwd.2} parent=23 // pred_region
        %p132 = scmp.lt.s32.totalorder %s10, 1
        %s133 = scalar_select %p132, %s10, 1
        %s134 = smul.addr %s133, 41
        %s135 = smul.addr %s134, 8
        %s136 = scalar_lea.vmem %s0, %s135
      $region28: #{_head_fwd.2} parent=23 // pred_fallthru
        _
    $region24: #{_head_fwd.2} parent=5 // pred_fallthru
      _
    %p137 = scmp.le.s32.totalorder 1, %s10
    %p138 = scmp.lt.s32.totalorder %s10, 3
    %p139 = pnand %p137, %p138
    %p140 = pneg %p139
    // Predicated region
    $region29: #{_head_fwd.2} parent=5 // pred_check
      _
    $region30: #{_head_fwd.2} parent=5 // pred_check_branch
      %142 = sbr.rel (%p139) target = $region32
    $region31: #{_head_fwd.2} parent=5 // pred_region
      %s143 = ssub.s32 %s10, 1
      %p144 = scmp.lt.s32.totalorder %s15, 1
      %s145 = scalar_select %p144, %s15, 1
      %s146 = smul.addr %s145, 41
      %s147 = smul.addr %s146, 8
      %s148 = scalar_lea.vmem %s0, %s147
      %p149 = pneg %p36
      %p150 = pneg %p33
      %p151 = pneg %p57
      %p152 = pneg %p54
      %p153 = pneg %p78
      %p154 = pneg %p75
      %p155 = pneg %p104
      %p156 = pneg %p101
      %p157 = scmp.lt.s32.totalorder %s15, 1
      %s158 = scalar_select %p157, %s15, 1
      %s159 = smul.addr %s158, 36
      %s160 = smul.addr %s159, 8
      %s161 = scalar_lea.vmem %s3, %s160
      %p162 = scmp.lt.s32.totalorder %s15, 1
      %s163 = scalar_select %p162, %s15, 1
      %s164 = smul.addr %s163, 41
      %s165 = smul.addr %s164, 8
      %s166 = scalar_lea.vmem %s0, %s165
      %p167 = scmp.lt.s32.totalorder %s15, 1
      %s168 = scalar_select %p167, %s15, 1
      %s169 = smul.addr %s168, 36
      %s170 = smul.addr %s169, 8
      %s171 = scalar_lea.vmem %s3, %s170
      %v173 = vld [vmem:[%s166] sm:$0xff]
      %v174 = vld [vmem:[%s166 + $0x8] sm:$0xff]
      %v175 = vld [vmem:[%s166 + $0x10] sm:$0xff]
      %v176 = vld [vmem:[%s166 + $0x18] sm:$0xff]
      %v177 = vld [vmem:[%s166 + $0x20] sm:$0xff]
      %v178 = vld [vmem:[%s166 + $0x28] sm:$0xff]
      %v179 = vld [vmem:[%s166 + $0x30] sm:$0xff]
      %v180 = vld [vmem:[%s166 + $0x38] sm:$0xff]
      %v181 = vld [vmem:[%s166 + $0x40] sm:$0xff]
      %v182 = vld [vmem:[%s166 + $0x48] sm:$0xff]
      %v183 = vld [vmem:[%s166 + $0x50] sm:$0xff]
      %v184 = vld [vmem:[%s166 + $0x58] sm:$0xff]
      %v185 = vld [vmem:[%s166 + $0x60] sm:$0xff]
      %v186 = vld [vmem:[%s166 + $0x68] sm:$0xff]
      %v187 = vld [vmem:[%s166 + $0x70] sm:$0xff]
      %v188 = vld [vmem:[%s166 + $0x78] sm:$0xff]
      %v189 = vld [vmem:[%s166 + $0x80] sm:$0xff]
      %v190 = vld [vmem:[%s166 + $0x88] sm:$0xff]
      %v191 = vld [vmem:[%s166 + $0x90] sm:$0xff]
      %v192 = vld [vmem:[%s166 + $0x98] sm:$0xff]
      %v193 = vld [vmem:[%s166 + $0xa0] sm:$0xff]
      %v194 = vld [vmem:[%s166 + $0xa8] sm:$0xff]
      %v195 = vld [vmem:[%s166 + $0xb0] sm:$0xff]
      %v196 = vld [vmem:[%s166 + $0xb8] sm:$0xff]
      %v197 = vld [vmem:[%s166 + $0xc0] sm:$0xff]
      %v198 = vld [vmem:[%s166 + $0xc8] sm:$0xff]
      %v199 = vld [vmem:[%s166 + $0xd0] sm:$0xff]
      %v200 = vld [vmem:[%s166 + $0xd8] sm:$0xff]
      %v201 = vld [vmem:[%s166 + $0xe0] sm:$0xff]
      %v202 = vld [vmem:[%s166 + $0xe8] sm:$0xff]
      %v203 = vld [vmem:[%s166 + $0xf0] sm:$0xff]
      %v204 = vld [vmem:[%s166 + $0xf8] sm:$0xff]
      %v205 = vld [vmem:[%s166 + $0x100] sm:$0xff]
      %v206 = vld [vmem:[%s166 + $0x108] sm:$0xff]
      %v207 = vld [vmem:[%s166 + $0x110] sm:$0xff]
      %v208 = vld [vmem:[%s166 + $0x118] sm:$0xff]
      %v209 = vpack.c.bf16 %v174, %v173
      %v210 = vpack.c.bf16 %v176, %v175
      %v211 = vpack.c.bf16 %v178, %v177
      %v212 = vpack.c.bf16 %v180, %v179
      %v213 = vpack.c.bf16 %v182, %v181
      %v214 = vpack.c.bf16 %v184, %v183
      %v215 = vpack.c.bf16 %v186, %v185
      %v216 = vpack.c.bf16 %v188, %v187
      %v217 = vpack.c.bf16 %v190, %v189
      %v218 = vpack.c.bf16 %v192, %v191
      %v219 = vpack.c.bf16 %v194, %v193
      %v220 = vpack.c.bf16 %v196, %v195
      %v221 = vpack.c.bf16 %v198, %v197
      %v222 = vpack.c.bf16 %v200, %v199
      %v223 = vpack.c.bf16 %v202, %v201
      %v224 = vpack.c.bf16 %v204, %v203
      %v225 = vpack.c.bf16 %v206, %v205
      %v226 = vpack.c.bf16 %v208, %v207
      %v227 = vld [vmem:[%s1] sm:$0x3]
      %v228 = vld [vmem:[%s166 + $0x1] sm:$0xff]
      %v229 = vld [vmem:[%s166 + $0x9] sm:$0xff]
      %v230 = vld [vmem:[%s166 + $0x11] sm:$0xff]
      %v231 = vld [vmem:[%s166 + $0x19] sm:$0xff]
      %v232 = vld [vmem:[%s166 + $0x21] sm:$0xff]
      %v233 = vld [vmem:[%s166 + $0x29] sm:$0xff]
      %v234 = vld [vmem:[%s166 + $0x31] sm:$0xff]
      %v235 = vld [vmem:[%s166 + $0x39] sm:$0xff]
      %v236 = vld [vmem:[%s166 + $0x41] sm:$0xff]
      %v237 = vld [vmem:[%s166 + $0x49] sm:$0xff]
      %v238 = vld [vmem:[%s166 + $0x51] sm:$0xff]
      %v239 = vld [vmem:[%s166 + $0x59] sm:$0xff]
      %v240 = vld [vmem:[%s166 + $0x61] sm:$0xff]
      %v241 = vld [vmem:[%s166 + $0x69] sm:$0xff]
      %v242 = vld [vmem:[%s166 + $0x71] sm:$0xff]
      %v243 = vld [vmem:[%s166 + $0x79] sm:$0xff]
      %v244 = vld [vmem:[%s166 + $0x81] sm:$0xff]
      %v245 = vld [vmem:[%s166 + $0x89] sm:$0xff]
      %v246 = vld [vmem:[%s166 + $0x91] sm:$0xff]
      %v247 = vld [vmem:[%s166 + $0x99] sm:$0xff]
      %v248 = vld [vmem:[%s166 + $0xa1] sm:$0xff]
      %v249 = vld [vmem:[%s166 + $0xa9] sm:$0xff]
      %v250 = vld [vmem:[%s166 + $0xb1] sm:$0xff]
      %v251 = vld [vmem:[%s166 + $0xb9] sm:$0xff]
      %v252 = vld [vmem:[%s166 + $0xc1] sm:$0xff]
      %v253 = vld [vmem:[%s166 + $0xc9] sm:$0xff]
      %v254 = vld [vmem:[%s166 + $0xd1] sm:$0xff]
      %v255 = vld [vmem:[%s166 + $0xd9] sm:$0xff]
      %v256 = vld [vmem:[%s166 + $0xe1] sm:$0xff]
      %v257 = vld [vmem:[%s166 + $0xe9] sm:$0xff]
      %v258 = vld [vmem:[%s166 + $0xf1] sm:$0xff]
      %v259 = vld [vmem:[%s166 + $0xf9] sm:$0xff]
      %v260 = vld [vmem:[%s166 + $0x101] sm:$0xff]
      %v261 = vld [vmem:[%s166 + $0x109] sm:$0xff]
      %v262 = vld [vmem:[%s166 + $0x111] sm:$0xff]
      %v263 = vld [vmem:[%s166 + $0x119] sm:$0xff]
      %v264 = vpack.c.bf16 %v229, %v228
      %v265 = vpack.c.bf16 %v231, %v230
      %v266 = vpack.c.bf16 %v233, %v232
      %v267 = vpack.c.bf16 %v235, %v234
      %v268 = vpack.c.bf16 %v237, %v236
      %v269 = vpack.c.bf16 %v239, %v238
      %v270 = vpack.c.bf16 %v241, %v240
      %v271 = vpack.c.bf16 %v243, %v242
      %v272 = vpack.c.bf16 %v245, %v244
      %v273 = vpack.c.bf16 %v247, %v246
      %v274 = vpack.c.bf16 %v249, %v248
      %v275 = vpack.c.bf16 %v251, %v250
      %v276 = vpack.c.bf16 %v253, %v252
      %v277 = vpack.c.bf16 %v255, %v254
      %v278 = vpack.c.bf16 %v257, %v256
      %v279 = vpack.c.bf16 %v259, %v258
      %v280 = vpack.c.bf16 %v261, %v260
      %v281 = vpack.c.bf16 %v263, %v262
      %s282 = scalar_lea.vmem %s1, 2
      %v283 = vld [vmem:[%s282] sm:$0x3]
      %vm284 = vcmask 31744
      %v286 = vsel %vm284, %v264, 0
      %v289 = vsel %vm284, %v265, 0
      %v292 = vsel %vm284, %v266, 0
      %v295 = vsel %vm284, %v267, 0
      %v298 = vsel %vm284, %v268, 0
      %v301 = vsel %vm284, %v269, 0
      %v304 = vsel %vm284, %v270, 0
      %v307 = vsel %vm284, %v271, 0
      %v310 = vsel %vm284, %v272, 0
      %v313 = vsel %vm284, %v273, 0
      %v316 = vsel %vm284, %v274, 0
      %v319 = vsel %vm284, %v275, 0
      %v322 = vsel %vm284, %v276, 0
      %v325 = vsel %vm284, %v277, 0
      %v328 = vsel %vm284, %v278, 0
      %v331 = vsel %vm284, %v279, 0
      %v334 = vsel %vm284, %v280, 0
      %v337 = vsel %vm284, %v281, 0
      %vm339 = vcmask 1041408
      %v341 = vsel %vm339, %v283, 0
      %343 = vmatprep.subr.bf16.mxu0 0
      %344 = vmatpush1.bf16.msra.mxu0 %v341
      %345 = vmatprep.subr.bf16.mxu0 0
      %346 = vmatpush1.bf16.msra.mxu0 0
      %347 = vmatprep.subr.bf16.mxu0 0
      %348 = vmatpush1.bf16.msra.mxu0 0
      %349 = vmatprep.subr.bf16.mxu0 0
      %350 = vmatpush1.bf16.msra.mxu0 0
      %351 = vmatprep.subr.bf16.mxu0 0
      %352 = vmatpush1.bf16.msra.mxu0 0
      %353 = vmatprep.subr.bf16.mxu0 0
      %354 = vmatpush1.bf16.msra.mxu0 0
      %355 = vmatprep.subr.bf16.mxu0 0
      %356 = vmatpush1.bf16.msra.mxu0 0
      %357 = vmatprep.subr.bf16.mxu0 0
      %358 = vmatpush1.bf16.msra.mxu0 0
      %359 = vmatprep.subr.bf16.mxu0 0
      %360 = vmatpush1.bf16.msra.mxu0 0
      %361 = vmatprep.subr.bf16.mxu0 0
      %362 = vmatpush1.bf16.msra.mxu0 0
      %363 = vmatprep.subr.bf16.mxu0 0
      %364 = vmatpush1.bf16.msra.mxu0 0
      %365 = vmatprep.subr.bf16.mxu0 0
      %366 = vmatpush1.bf16.msra.mxu0 0
      %367 = vmatprep.subr.bf16.mxu0 0
      %368 = vmatpush1.bf16.msra.mxu0 0
      %369 = vmatprep.subr.bf16.mxu0 0
      %370 = vmatpush1.bf16.msra.mxu0 0
      %371 = vmatprep.subr.bf16.mxu0 0
      %372 = vmatpush1.bf16.msra.mxu0 0
      %373 = vmatprep.subr.bf16.mxu0 0
      %374 = vmatpush1.bf16.msra.mxu0 0
      %375 = vmatprep.mubr.bf16.mxu0 0
      %376 = vmatmul.mubr.bf16.gmra.mrb[0].mxu0 %v286
      %v377 = vpop.f32.mrb[0].mxu0
      %v378 = vadd.f32 0.0, %v377
      %v379 = vpop.f32.mrb[0].mxu0
      %v380 = vpop.f32.mrb[0].mxu0
      %v381 = vadd.f32 0.0, %v380
      %v382 = vpop.f32.mrb[0].mxu0
      %383 = vmatprep.mubr.bf16.mxu0 0
      %384 = vmatmul.mubr.bf16.gmra.mrb[0].mxu0 %v289
      %v385 = vpop.f32.mrb[0].mxu0
      %v386 = vadd.f32 0.0, %v385
      %v387 = vpop.f32.mrb[0].mxu0
      %v388 = vpop.f32.mrb[0].mxu0
      %v389 = vadd.f32 0.0, %v388
      %v390 = vpop.f32.mrb[0].mxu0
      %391 = vmatprep.mubr.bf16.mxu0 0
      %392 = vmatmul.mubr.bf16.gmra.mrb[0].mxu0 %v292
      %v393 = vpop.f32.mrb[0].mxu0
      %v394 = vadd.f32 0.0, %v393
      %v395 = vpop.f32.mrb[0].mxu0
      %v396 = vpop.f32.mrb[0].mxu0
      %v397 = vadd.f32 0.0, %v396
      %v398 = vpop.f32.mrb[0].mxu0
      %399 = vmatprep.mubr.bf16.mxu0 0
      %400 = vmatmul.mubr.bf16.gmra.mrb[0].mxu0 %v295
      %v401 = vpop.f32.mrb[0].mxu0
      %v402 = vadd.f32 0.0, %v401
      %v403 = vpop.f32.mrb[0].mxu0
      %v404 = vpop.f32.mrb[0].mxu0
      %v405 = vadd.f32 0.0, %v404
      %v406 = vpop.f32.mrb[0].mxu0
      %407 = vmatprep.mubr.bf16.mxu0 0
      %408 = vmatmul.mubr.bf16.gmra.mrb[0].mxu0 %v298
      %v409 = vpop.f32.mrb[0].mxu0
      %v410 = vadd.f32 0.0, %v409
      %v411 = vpop.f32.mrb[0].mxu0
      %v412 = vpop.f32.mrb[0].mxu0
      %v413 = vadd.f32 0.0, %v412
      %v414 = vpop.f32.mrb[0].mxu0
      %415 = vmatprep.mubr.bf16.mxu0 0
      %416 = vmatmul.mubr.bf16.gmra.mrb[0].mxu0 %v301
      %v417 = vpop.f32.mrb[0].mxu0
      %v418 = vadd.f32 0.0, %v417
      %v419 = vpop.f32.mrb[0].mxu0
      %v420 = vpop.f32.mrb[0].mxu0
      %v421 = vadd.f32 0.0, %v420
      %v422 = vpop.f32.mrb[0].mxu0
      %423 = vmatprep.mubr.bf16.mxu0 0
      %424 = vmatmul.mubr.bf16.gmra.mrb[0].mxu0 %v304
      %v425 = vpop.f32.mrb[0].mxu0
      %v426 = vadd.f32 0.0, %v425
      %v427 = vpop.f32.mrb[0].mxu0
      %v428 = vpop.f32.mrb[0].mxu0
      %v429 = vadd.f32 0.0, %v428
      %v430 = vpop.f32.mrb[0].mxu0
      %431 = vmatprep.mubr.bf16.mxu0 0
      %432 = vmatmul.mubr.bf16.gmra.mrb[0].mxu0 %v307
      %v433 = vpop.f32.mrb[0].mxu0
      %v434 = vadd.f32 0.0, %v433
      %v435 = vpop.f32.mrb[0].mxu0
      %v436 = vpop.f32.mrb[0].mxu0
      %v437 = vadd.f32 0.0, %v436
      %v438 = vpop.f32.mrb[0].mxu0
      %439 = vmatprep.mubr.bf16.mxu0 0
      %440 = vmatmul.mubr.bf16.gmra.mrb[0].mxu0 %v310
      %v441 = vpop.f32.mrb[0].mxu0
      %v442 = vadd.f32 0.0, %v441
      %v443 = vpop.f32.mrb[0].mxu0
      %v444 = vpop.f32.mrb[0].mxu0
      %v445 = vadd.f32 0.0, %v444
      %v446 = vpop.f32.mrb[0].mxu0
      %447 = vmatprep.mubr.bf16.mxu0 0
      %448 = vmatmul.mubr.bf16.gmra.mrb[0].mxu0 %v313
      %v449 = vpop.f32.mrb[0].mxu0
      %v450 = vadd.f32 0.0, %v449
      %v451 = vpop.f32.mrb[0].mxu0
      %v452 = vpop.f32.mrb[0].mxu0
      %v453 = vadd.f32 0.0, %v452
      %v454 = vpop.f32.mrb[0].mxu0
      %455 = vmatprep.mubr.bf16.mxu0 0
      %456 = vmatmul.mubr.bf16.gmra.mrb[0].mxu0 %v316
      %v457 = vpop.f32.mrb[0].mxu0
      %v458 = vadd.f32 0.0, %v457
      %v459 = vpop.f32.mrb[0].mxu0
      %v460 = vpop.f32.mrb[0].mxu0
      %v461 = vadd.f32 0.0, %v460
      %v462 = vpop.f32.mrb[0].mxu0
      %463 = vmatprep.mubr.bf16.mxu0 0
      %464 = vmatmul.mubr.bf16.gmra.mrb[0].mxu0 %v319
      %v465 = vpop.f32.mrb[0].mxu0
      %v466 = vadd.f32 0.0, %v465
      %v467 = vpop.f32.mrb[0].mxu0
      %v468 = vpop.f32.mrb[0].mxu0
      %v469 = vadd.f32 0.0, %v468
      %v470 = vpop.f32.mrb[0].mxu0
      %471 = vmatprep.mubr.bf16.mxu0 0
      %472 = vmatmul.mubr.bf16.gmra.mrb[0].mxu0 %v322
      %v473 = vpop.f32.mrb[0].mxu0
      %v474 = vadd.f32 0.0, %v473
      %v475 = vpop.f32.mrb[0].mxu0
      %v476 = vpop.f32.mrb[0].mxu0
      %v477 = vadd.f32 0.0, %v476
      %v478 = vpop.f32.mrb[0].mxu0
      %479 = vmatprep.mubr.bf16.mxu0 0
      %480 = vmatmul.mubr.bf16.gmra.mrb[0].mxu0 %v325
      %v481 = vpop.f32.mrb[0].mxu0
      %v482 = vadd.f32 0.0, %v481
      %v483 = vpop.f32.mrb[0].mxu0
      %v484 = vpop.f32.mrb[0].mxu0
      %v485 = vadd.f32 0.0, %v484
      %v486 = vpop.f32.mrb[0].mxu0
      %487 = vmatprep.mubr.bf16.mxu0 0
      %488 = vmatmul.mubr.bf16.gmra.mrb[0].mxu0 %v328
      %v489 = vpop.f32.mrb[0].mxu0
      %v490 = vadd.f32 0.0, %v489
      %v491 = vpop.f32.mrb[0].mxu0
      %v492 = vpop.f32.mrb[0].mxu0
      %v493 = vadd.f32 0.0, %v492
      %v494 = vpop.f32.mrb[0].mxu0
      %495 = vmatprep.mubr.bf16.mxu0 0
      %496 = vmatmul.mubr.bf16.gmra.mrb[0].mxu0 %v331
      %v497 = vpop.f32.mrb[0].mxu0
      %v498 = vadd.f32 0.0, %v497
      %v499 = vpop.f32.mrb[0].mxu0
      %v500 = vpop.f32.mrb[0].mxu0
      %v501 = vadd.f32 0.0, %v500
      %v502 = vpop.f32.mrb[0].mxu0
      %503 = vmatprep.mubr.bf16.mxu0 0
      %504 = vmatmul.mubr.bf16.gmra.mrb[0].mxu0 %v334
      %v505 = vpop.f32.mrb[0].mxu0
      %v506 = vadd.f32 0.0, %v505
      %v507 = vpop.f32.mrb[0].mxu0
      %v508 = vpop.f32.mrb[0].mxu0
      %v509 = vadd.f32 0.0, %v508
      %v510 = vpop.f32.mrb[0].mxu0
      %511 = vmatprep.mubr.bf16.mxu0 0
      %512 = vmatmul.mubr.bf16.gmra.mrb[0].mxu0 %v337
      %v513 = vpop.f32.mrb[0].mxu0
      %v514 = vadd.f32 0.0, %v513
      %v515 = vpop.f32.mrb[0].mxu0
      %v516 = vpop.f32.mrb[0].mxu0
      %v517 = vadd.f32 0.0, %v516
      %v518 = vpop.f32.mrb[0].mxu0
      %519 = vdwg.mxu0
      %v521 = vsel %vm284, %v209, 0
      %v524 = vsel %vm284, %v210, 0
      %v527 = vsel %vm284, %v211, 0
      %v530 = vsel %vm284, %v212, 0
      %v533 = vsel %vm284, %v213, 0
      %v536 = vsel %vm284, %v214, 0
      %v539 = vsel %vm284, %v215, 0
      %v542 = vsel %vm284, %v216, 0
      %v545 = vsel %vm284, %v217, 0
      %v548 = vsel %vm284, %v218, 0
      %v551 = vsel %vm284, %v219, 0
      %v554 = vsel %vm284, %v220, 0
      %v557 = vsel %vm284, %v221, 0
      %v560 = vsel %vm284, %v222, 0
      %v563 = vsel %vm284, %v223, 0
      %v566 = vsel %vm284, %v224, 0
      %v569 = vsel %vm284, %v225, 0
      %v572 = vsel %vm284, %v226, 0
      %v575 = vsel %vm339, %v227, 0
      %577 = vmatprep.subr.bf16.mxu0 0
      %578 = vmatpush1.bf16.msra.mxu0 %v575
      %579 = vmatprep.subr.bf16.mxu0 0
      %580 = vmatpush1.bf16.msra.mxu0 0
      %581 = vmatprep.subr.bf16.mxu0 0
      %582 = vmatpush1.bf16.msra.mxu0 0
      %583 = vmatprep.subr.bf16.mxu0 0
      %584 = vmatpush1.bf16.msra.mxu0 0
      %585 = vmatprep.subr.bf16.mxu0 0
      %586 = vmatpush1.bf16.msra.mxu0 0
      %587 = vmatprep.subr.bf16.mxu0 0
      %588 = vmatpush1.bf16.msra.mxu0 0
      %589 = vmatprep.subr.bf16.mxu0 0
      %590 = vmatpush1.bf16.msra.mxu0 0
      %591 = vmatprep.subr.bf16.mxu0 0
      %592 = vmatpush1.bf16.msra.mxu0 0
      %593 = vmatprep.subr.bf16.mxu0 0
      %594 = vmatpush1.bf16.msra.mxu0 0
      %595 = vmatprep.subr.bf16.mxu0 0
      %596 = vmatpush1.bf16.msra.mxu0 0
      %597 = vmatprep.subr.bf16.mxu0 0
      %598 = vmatpush1.bf16.msra.mxu0 0
      %599 = vmatprep.subr.bf16.mxu0 0
      %600 = vmatpush1.bf16.msra.mxu0 0
      %601 = vmatprep.subr.bf16.mxu0 0
      %602 = vmatpush1.bf16.msra.mxu0 0
      %603 = vmatprep.subr.bf16.mxu0 0
      %604 = vmatpush1.bf16.msra.mxu0 0
      %605 = vmatprep.subr.bf16.mxu0 0
      %606 = vmatpush1.bf16.msra.mxu0 0
      %607 = vmatprep.subr.bf16.mxu0 0
      %608 = vmatpush1.bf16.msra.mxu0 0
      %609 = vmatprep.mubr.bf16.mxu0 0
      %610 = vmatmul.mubr.bf16.gmra.mrb[0].mxu0 %v521
      %v611 = vpop.f32.mrb[0].mxu0
      %v612 = vadd.f32 %v378, %v611
      %v613 = vpop.f32.mrb[0].mxu0
      %v614 = vpop.f32.mrb[0].mxu0
      %v615 = vadd.f32 %v381, %v614
      %v616 = vpop.f32.mrb[0].mxu0
      %617 = vmatprep.mubr.bf16.mxu0 0
      %618 = vmatmul.mubr.bf16.gmra.mrb[0].mxu0 %v524
      %v619 = vpop.f32.mrb[0].mxu0
      %v620 = vadd.f32 %v386, %v619
      %v621 = vpop.f32.mrb[0].mxu0
      %v622 = vpop.f32.mrb[0].mxu0
      %v623 = vadd.f32 %v389, %v622
      %v624 = vpop.f32.mrb[0].mxu0
      %625 = vmatprep.mubr.bf16.mxu0 0
      %626 = vmatmul.mubr.bf16.gmra.mrb[0].mxu0 %v527
      %v627 = vpop.f32.mrb[0].mxu0
      %v628 = vadd.f32 %v394, %v627
      %v629 = vpop.f32.mrb[0].mxu0
      %v630 = vpop.f32.mrb[0].mxu0
      %v631 = vadd.f32 %v397, %v630
      %v632 = vpop.f32.mrb[0].mxu0
      %633 = vmatprep.mubr.bf16.mxu0 0
      %634 = vmatmul.mubr.bf16.gmra.mrb[0].mxu0 %v530
      %v635 = vpop.f32.mrb[0].mxu0
      %v636 = vadd.f32 %v402, %v635
      %v637 = vpop.f32.mrb[0].mxu0
      %v638 = vpop.f32.mrb[0].mxu0
      %v639 = vadd.f32 %v405, %v638
      %v640 = vpop.f32.mrb[0].mxu0
      %641 = vmatprep.mubr.bf16.mxu0 0
      %642 = vmatmul.mubr.bf16.gmra.mrb[0].mxu0 %v533
      %v643 = vpop.f32.mrb[0].mxu0
      %v644 = vadd.f32 %v410, %v643
      %v645 = vpop.f32.mrb[0].mxu0
      %v646 = vpop.f32.mrb[0].mxu0
      %v647 = vadd.f32 %v413, %v646
      %v648 = vpop.f32.mrb[0].mxu0
      %649 = vmatprep.mubr.bf16.mxu0 0
      %650 = vmatmul.mubr.bf16.gmra.mrb[0].mxu0 %v536
      %v651 = vpop.f32.mrb[0].mxu0
      %v652 = vadd.f32 %v418, %v651
      %v653 = vpop.f32.mrb[0].mxu0
      %v654 = vpop.f32.mrb[0].mxu0
      %v655 = vadd.f32 %v421, %v654
      %v656 = vpop.f32.mrb[0].mxu0
      %657 = vmatprep.mubr.bf16.mxu0 0
      %658 = vmatmul.mubr.bf16.gmra.mrb[0].mxu0 %v539
      %v659 = vpop.f32.mrb[0].mxu0
      %v660 = vadd.f32 %v426, %v659
      %v661 = vpop.f32.mrb[0].mxu0
      %v662 = vpop.f32.mrb[0].mxu0
      %v663 = vadd.f32 %v429, %v662
      %v664 = vpop.f32.mrb[0].mxu0
      %665 = vmatprep.mubr.bf16.mxu0 0
      %666 = vmatmul.mubr.bf16.gmra.mrb[0].mxu0 %v542
      %v667 = vpop.f32.mrb[0].mxu0
      %v668 = vadd.f32 %v434, %v667
      %v669 = vpop.f32.mrb[0].mxu0
      %v670 = vpop.f32.mrb[0].mxu0
      %v671 = vadd.f32 %v437, %v670
      %v672 = vpop.f32.mrb[0].mxu0
      %673 = vmatprep.mubr.bf16.mxu0 0
      %674 = vmatmul.mubr.bf16.gmra.mrb[0].mxu0 %v545
      %v675 = vpop.f32.mrb[0].mxu0
      %v676 = vadd.f32 %v442, %v675
      %v677 = vpop.f32.mrb[0].mxu0
      %v678 = vpop.f32.mrb[0].mxu0
      %v679 = vadd.f32 %v445, %v678
      %v680 = vpop.f32.mrb[0].mxu0
      %681 = vmatprep.mubr.bf16.mxu0 0
      %682 = vmatmul.mubr.bf16.gmra.mrb[0].mxu0 %v548
      %v683 = vpop.f32.mrb[0].mxu0
      %v684 = vadd.f32 %v450, %v683
      %v685 = vpop.f32.mrb[0].mxu0
      %v686 = vpop.f32.mrb[0].mxu0
      %v687 = vadd.f32 %v453, %v686
      %v688 = vpop.f32.mrb[0].mxu0
      %689 = vmatprep.mubr.bf16.mxu0 0
      %690 = vmatmul.mubr.bf16.gmra.mrb[0].mxu0 %v551
      %v691 = vpop.f32.mrb[0].mxu0
      %v692 = vadd.f32 %v458, %v691
      %v693 = vpop.f32.mrb[0].mxu0
      %v694 = vpop.f32.mrb[0].mxu0
      %v695 = vadd.f32 %v461, %v694
      %v696 = vpop.f32.mrb[0].mxu0
      %697 = vmatprep.mubr.bf16.mxu0 0
      %698 = vmatmul.mubr.bf16.gmra.mrb[0].mxu0 %v554
      %v699 = vpop.f32.mrb[0].mxu0
      %v700 = vadd.f32 %v466, %v699
      %v701 = vpop.f32.mrb[0].mxu0
      %v702 = vpop.f32.mrb[0].mxu0
      %v703 = vadd.f32 %v469, %v702
      %v704 = vpop.f32.mrb[0].mxu0
      %705 = vmatprep.mubr.bf16.mxu0 0
      %706 = vmatmul.mubr.bf16.gmra.mrb[0].mxu0 %v557
      %v707 = vpop.f32.mrb[0].mxu0
      %v708 = vadd.f32 %v474, %v707
      %v709 = vpop.f32.mrb[0].mxu0
      %v710 = vpop.f32.mrb[0].mxu0
      %v711 = vadd.f32 %v477, %v710
      %v712 = vpop.f32.mrb[0].mxu0
      %713 = vmatprep.mubr.bf16.mxu0 0
      %714 = vmatmul.mubr.bf16.gmra.mrb[0].mxu0 %v560
      %v715 = vpop.f32.mrb[0].mxu0
      %v716 = vadd.f32 %v482, %v715
      %v717 = vpop.f32.mrb[0].mxu0
      %v718 = vpop.f32.mrb[0].mxu0
      %v719 = vadd.f32 %v485, %v718
      %v720 = vpop.f32.mrb[0].mxu0
      %721 = vmatprep.mubr.bf16.mxu0 0
      %722 = vmatmul.mubr.bf16.gmra.mrb[0].mxu0 %v563
      %v723 = vpop.f32.mrb[0].mxu0
      %v724 = vadd.f32 %v490, %v723
      %v725 = vpop.f32.mrb[0].mxu0
      %v726 = vpop.f32.mrb[0].mxu0
      %v727 = vadd.f32 %v493, %v726
      %v728 = vpop.f32.mrb[0].mxu0
      %729 = vmatprep.mubr.bf16.mxu0 0
      %730 = vmatmul.mubr.bf16.gmra.mrb[0].mxu0 %v566
      %v731 = vpop.f32.mrb[0].mxu0
      %v732 = vadd.f32 %v498, %v731
      %v733 = vpop.f32.mrb[0].mxu0
      %v734 = vpop.f32.mrb[0].mxu0
      %v735 = vadd.f32 %v501, %v734
      %v736 = vpop.f32.mrb[0].mxu0
      %737 = vmatprep.mubr.bf16.mxu0 0
      %738 = vmatmul.mubr.bf16.gmra.mrb[0].mxu0 %v569
      %v739 = vpop.f32.mrb[0].mxu0
      %v740 = vadd.f32 %v506, %v739
      %v741 = vpop.f32.mrb[0].mxu0
      %v742 = vpop.f32.mrb[0].mxu0
      %v743 = vadd.f32 %v509, %v742
      %v744 = vpop.f32.mrb[0].mxu0
      %745 = vmatprep.mubr.bf16.mxu0 0
      %746 = vmatmul.mubr.bf16.gmra.mrb[0].mxu0 %v572
      %v747 = vpop.f32.mrb[0].mxu0
      %v748 = vadd.f32 %v514, %v747
      %v749 = vpop.f32.mrb[0].mxu0
      %v750 = vpop.f32.mrb[0].mxu0
      %v751 = vadd.f32 %v517, %v750
      %v752 = vpop.f32.mrb[0].mxu0
      %753 = vdwg.mxu0
      %v754 = vld [vmem:[%s166 + $0x2] sm:$0xff]
      %v755 = vld [vmem:[%s166 + $0xa] sm:$0xff]
      %v756 = vld [vmem:[%s166 + $0x12] sm:$0xff]
      %v757 = vld [vmem:[%s166 + $0x1a] sm:$0xff]
      %v758 = vld [vmem:[%s166 + $0x22] sm:$0xff]
      %v759 = vld [vmem:[%s166 + $0x2a] sm:$0xff]
      %v760 = vld [vmem:[%s166 + $0x32] sm:$0xff]
      %v761 = vld [vmem:[%s166 + $0x3a] sm:$0xff]
      %v762 = vld [vmem:[%s166 + $0x42] sm:$0xff]
      %v763 = vld [vmem:[%s166 + $0x4a] sm:$0xff]
      %v764 = vld [vmem:[%s166 + $0x52] sm:$0xff]
      %v765 = vld [vmem:[%s166 + $0x5a] sm:$0xff]
      %v766 = vld [vmem:[%s166 + $0x62] sm:$0xff]
      %v767 = vld [vmem:[%s166 + $0x6a] sm:$0xff]
      %v768 = vld [vmem:[%s166 + $0x72] sm:$0xff]
      %v769 = vld [vmem:[%s166 + $0x7a] sm:$0xff]
      %v770 = vld [vmem:[%s166 + $0x82] sm:$0xff]
      %v771 = vld [vmem:[%s166 + $0x8a] sm:$0xff]
      %v772 = vld [vmem:[%s166 + $0x92] sm:$0xff]
      %v773 = vld [vmem:[%s166 + $0x9a] sm:$0xff]
      %v774 = vld [vmem:[%s166 + $0xa2] sm:$0xff]
      %v775 = vld [vmem:[%s166 + $0xaa] sm:$0xff]
      %v776 = vld [vmem:[%s166 + $0xb2] sm:$0xff]
      %v777 = vld [vmem:[%s166 + $0xba] sm:$0xff]
      %v778 = vld [vmem:[%s166 + $0xc2] sm:$0xff]
      %v779 = vld [vmem:[%s166 + $0xca] sm:$0xff]
      %v780 = vld [vmem:[%s166 + $0xd2] sm:$0xff]
      %v781 = vld [vmem:[%s166 + $0xda] sm:$0xff]
      %v782 = vld [vmem:[%s166 + $0xe2] sm:$0xff]
      %v783 = vld [vmem:[%s166 + $0xea] sm:$0xff]
      %v784 = vld [vmem:[%s166 + $0xf2] sm:$0xff]
      %v785 = vld [vmem:[%s166 + $0xfa] sm:$0xff]
      %v786 = vld [vmem:[%s166 + $0x102] sm:$0xff]
      %v787 = vld [vmem:[%s166 + $0x10a] sm:$0xff]
      %v788 = vld [vmem:[%s166 + $0x112] sm:$0xff]
      %v789 = vld [vmem:[%s166 + $0x11a] sm:$0xff]
      %v790 = vpack.c.bf16 %v755, %v754
      %v791 = vpack.c.bf16 %v757, %v756
      %v792 = vpack.c.bf16 %v759, %v758
      %v793 = vpack.c.bf16 %v761, %v760
      %v794 = vpack.c.bf16 %v763, %v762
      %v795 = vpack.c.bf16 %v765, %v764
      %v796 = vpack.c.bf16 %v767, %v766
      %v797 = vpack.c.bf16 %v769, %v768
      %v798 = vpack.c.bf16 %v771, %v770
      %v799 = vpack.c.bf16 %v773, %v772
      %v800 = vpack.c.bf16 %v775, %v774
      %v801 = vpack.c.bf16 %v777, %v776
      %v802 = vpack.c.bf16 %v779, %v778
      %v803 = vpack.c.bf16 %v781, %v780
      %v804 = vpack.c.bf16 %v783, %v782
      %v805 = vpack.c.bf16 %v785, %v784
      %v806 = vpack.c.bf16 %v787, %v786
      %v807 = vpack.c.bf16 %v789, %v788
      %s808 = scalar_lea.vmem %s1, 4
      %v809 = vld [vmem:[%s808] sm:$0x3]
      %v811 = vsel %vm284, %v790, 0
      %v814 = vsel %vm284, %v791, 0
      %v817 = vsel %vm284, %v792, 0
      %v820 = vsel %vm284, %v793, 0
      %v823 = vsel %vm284, %v794, 0
      %v826 = vsel %vm284, %v795, 0
      %v829 = vsel %vm284, %v796, 0
      %v832 = vsel %vm284, %v797, 0
      %v835 = vsel %vm284, %v798, 0
      %v838 = vsel %vm284, %v799, 0
      %v841 = vsel %vm284, %v800, 0
      %v844 = vsel %vm284, %v801, 0
      %v847 = vsel %vm284, %v802, 0
      %v850 = vsel %vm284, %v803, 0
      %v853 = vsel %vm284, %v804, 0
      %v856 = vsel %vm284, %v805, 0
      %v859 = vsel %vm284, %v806, 0
      %v862 = vsel %vm284, %v807, 0
      %v865 = vsel %vm339, %v809, 0
      %867 = vmatprep.subr.bf16.mxu0 0
      %868 = vmatpush1.bf16.msra.mxu0 %v865
      %869 = vmatprep.subr.bf16.mxu0 0
      %870 = vmatpush1.bf16.msra.mxu0 0
      %871 = vmatprep.subr.bf16.mxu0 0
      %872 = vmatpush1.bf16.msra.mxu0 0
      %873 = vmatprep.subr.bf16.mxu0 0
      %874 = vmatpush1.bf16.msra.mxu0 0
      %875 = vmatprep.subr.bf16.mxu0 0
      %876 = vmatpush1.bf16.msra.mxu0 0
      %877 = vmatprep.subr.bf16.mxu0 0
      %878 = vmatpush1.bf16.msra.mxu0 0
      %879 = vmatprep.subr.bf16.mxu0 0
      %880 = vmatpush1.bf16.msra.mxu0 0
      %881 = vmatprep.subr.bf16.mxu0 0
      %882 = vmatpush1.bf16.msra.mxu0 0
      %883 = vmatprep.subr.bf16.mxu0 0
      %884 = vmatpush1.bf16.msra.mxu0 0
      %885 = vmatprep.subr.bf16.mxu0 0
      %886 = vmatpush1.bf16.msra.mxu0 0
      %887 = vmatprep.subr.bf16.mxu0 0
      %888 = vmatpush1.bf16.msra.mxu0 0
      %889 = vmatprep.subr.bf16.mxu0 0
      %890 = vmatpush1.bf16.msra.mxu0 0
      %891 = vmatprep.subr.bf16.mxu0 0
      %892 = vmatpush1.bf16.msra.mxu0 0
      %893 = vmatprep.subr.bf16.mxu0 0
      %894 = vmatpush1.bf16.msra.mxu0 0
      %895 = vmatprep.subr.bf16.mxu0 0
      %896 = vmatpush1.bf16.msra.mxu0 0
      %897 = vmatprep.subr.bf16.mxu0 0
      %898 = vmatpush1.bf16.msra.mxu0 0
      %899 = vmatprep.mubr.bf16.mxu0 0
      %900 = vmatmul.mubr.bf16.gmra.mrb[0].mxu0 %v811
      %v901 = vpop.f32.mrb[0].mxu0
      %v902 = vadd.f32 0.0, %v901
      %v903 = vpop.f32.mrb[0].mxu0
      %v904 = vpop.f32.mrb[0].mxu0
      %v905 = vadd.f32 0.0, %v904
      %v906 = vpop.f32.mrb[0].mxu0
      %907 = vmatprep.mubr.bf16.mxu0 0
      %908 = vmatmul.mubr.bf16.gmra.mrb[0].mxu0 %v814
      %v909 = vpop.f32.mrb[0].mxu0
      %v910 = vadd.f32 0.0, %v909
      %v911 = vpop.f32.mrb[0].mxu0
      %v912 = vpop.f32.mrb[0].mxu0
      %v913 = vadd.f32 0.0, %v912
      %v914 = vpop.f32.mrb[0].mxu0
      %915 = vmatprep.mubr.bf16.mxu0 0
      %916 = vmatmul.mubr.bf16.gmra.mrb[0].mxu0 %v817
      %v917 = vpop.f32.mrb[0].mxu0
      %v918 = vadd.f32 0.0, %v917
      %v919 = vpop.f32.mrb[0].mxu0
      %v920 = vpop.f32.mrb[0].mxu0
      %v921 = vadd.f32 0.0, %v920
      %v922 = vpop.f32.mrb[0].mxu0
      %923 = vmatprep.mubr.bf16.mxu0 0
      %924 = vmatmul.mubr.bf16.gmra.mrb[0].mxu0 %v820
      %v925 = vpop.f32.mrb[0].mxu0
      %v926 = vadd.f32 0.0, %v925
      %v927 = vpop.f32.mrb[0].mxu0
      %v928 = vpop.f32.mrb[0].mxu0
      %v929 = vadd.f32 0.0, %v928
      %v930 = vpop.f32.mrb[0].mxu0
      %931 = vmatprep.mubr.bf16.mxu0 0
      %932 = vmatmul.mubr.bf16.gmra.mrb[0].mxu0 %v823
      %v933 = vpop.f32.mrb[0].mxu0
      %v934 = vadd.f32 0.0, %v933
      %v935 = vpop.f32.mrb[0].mxu0
      %v936 = vpop.f32.mrb[0].mxu0
      %v937 = vadd.f32 0.0, %v936
      %v938 = vpop.f32.mrb[0].mxu0
      %939 = vmatprep.mubr.bf16.mxu0 0
      %940 = vmatmul.mubr.bf16.gmra.mrb[0].mxu0 %v826
      %v941 = vpop.f32.mrb[0].mxu0
      %v942 = vadd.f32 0.0, %v941
      %v943 = vpop.f32.mrb[0].mxu0
      %v944 = vpop.f32.mrb[0].mxu0
      %v945 = vadd.f32 0.0, %v944
      %v946 = vpop.f32.mrb[0].mxu0
      %947 = vmatprep.mubr.bf16.mxu0 0
      %948 = vmatmul.mubr.bf16.gmra.mrb[0].mxu0 %v829
      %v949 = vpop.f32.mrb[0].mxu0
      %v950 = vadd.f32 0.0, %v949
      %v951 = vpop.f32.mrb[0].mxu0
      %v952 = vpop.f32.mrb[0].mxu0
      %v953 = vadd.f32 0.0, %v952
      %v954 = vpop.f32.mrb[0].mxu0
      %955 = vmatprep.mubr.bf16.mxu0 0
      %956 = vmatmul.mubr.bf16.gmra.mrb[0].mxu0 %v832
      %v957 = vpop.f32.mrb[0].mxu0
      %v958 = vadd.f32 0.0, %v957
      %v959 = vpop.f32.mrb[0].mxu0
      %v960 = vpop.f32.mrb[0].mxu0
      %v961 = vadd.f32 0.0, %v960
      %v962 = vpop.f32.mrb[0].mxu0
      %963 = vmatprep.mubr.bf16.mxu0 0
      %964 = vmatmul.mubr.bf16.gmra.mrb[0].mxu0 %v835
      %v965 = vpop.f32.mrb[0].mxu0
      %v966 = vadd.f32 0.0, %v965
      %v967 = vpop.f32.mrb[0].mxu0
      %v968 = vpop.f32.mrb[0].mxu0
      %v969 = vadd.f32 0.0, %v968
      %v970 = vpop.f32.mrb[0].mxu0
      %971 = vmatprep.mubr.bf16.mxu0 0
      %972 = vmatmul.mubr.bf16.gmra.mrb[0].mxu0 %v838
      %v973 = vpop.f32.mrb[0].mxu0
      %v974 = vadd.f32 0.0, %v973
      %v975 = vpop.f32.mrb[0].mxu0
      %v976 = vpop.f32.mrb[0].mxu0
      %v977 = vadd.f32 0.0, %v976
      %v978 = vpop.f32.mrb[0].mxu0
      %979 = vmatprep.mubr.bf16.mxu0 0
      %980 = vmatmul.mubr.bf16.gmra.mrb[0].mxu0 %v841
      %v981 = vpop.f32.mrb[0].mxu0
      %v982 = vadd.f32 0.0, %v981
      %v983 = vpop.f32.mrb[0].mxu0
      %v984 = vpop.f32.mrb[0].mxu0
      %v985 = vadd.f32 0.0, %v984
      %v986 = vpop.f32.mrb[0].mxu0
      %987 = vmatprep.mubr.bf16.mxu0 0
      %988 = vmatmul.mubr.bf16.gmra.mrb[0].mxu0 %v844
      %v989 = vpop.f32.mrb[0].mxu0
      %v990 = vadd.f32 0.0, %v989
      %v991 = vpop.f32.mrb[0].mxu0
      %v992 = vpop.f32.mrb[0].mxu0
      %v993 = vadd.f32 0.0, %v992
      %v994 = vpop.f32.mrb[0].mxu0
      %995 = vmatprep.mubr.bf16.mxu0 0
      %996 = vmatmul.mubr.bf16.gmra.mrb[0].mxu0 %v847
      %v997 = vpop.f32.mrb[0].mxu0
      %v998 = vadd.f32 0.0, %v997
      %v999 = vpop.f32.mrb[0].mxu0
      %v1000 = vpop.f32.mrb[0].mxu0
      %v1001 = vadd.f32 0.0, %v1000
      %v1002 = vpop.f32.mrb[0].mxu0
      %1003 = vmatprep.mubr.bf16.mxu0 0
      %1004 = vmatmul.mubr.bf16.gmra.mrb[0].mxu0 %v850
      %v1005 = vpop.f32.mrb[0].mxu0
      %v1006 = vadd.f32 0.0, %v1005
      %v1007 = vpop.f32.mrb[0].mxu0
      %v1008 = vpop.f32.mrb[0].mxu0
      %v1009 = vadd.f32 0.0, %v1008
      %v1010 = vpop.f32.mrb[0].mxu0
      %1011 = vmatprep.mubr.bf16.mxu0 0
      %1012 = vmatmul.mubr.bf16.gmra.mrb[0].mxu0 %v853
      %v1013 = vpop.f32.mrb[0].mxu0
      %v1014 = vadd.f32 0.0, %v1013
      %v1015 = vpop.f32.mrb[0].mxu0
      %v1016 = vpop.f32.mrb[0].mxu0
      %v1017 = vadd.f32 0.0, %v1016
      %v1018 = vpop.f32.mrb[0].mxu0
      %1019 = vmatprep.mubr.bf16.mxu0 0
      %1020 = vmatmul.mubr.bf16.gmra.mrb[0].mxu0 %v856
      %v1021 = vpop.f32.mrb[0].mxu0
      %v1022 = vadd.f32 0.0, %v1021
      %v1023 = vpop.f32.mrb[0].mxu0
      %v1024 = vpop.f32.mrb[0].mxu0
      %v1025 = vadd.f32 0.0, %v1024
      %v1026 = vpop.f32.mrb[0].mxu0
      %1027 = vmatprep.mubr.bf16.mxu0 0
      %1028 = vmatmul.mubr.bf16.gmra.mrb[0].mxu0 %v859
      %v1029 = vpop.f32.mrb[0].mxu0
      %v1030 = vadd.f32 0.0, %v1029
      %v1031 = vpop.f32.mrb[0].mxu0
      %v1032 = vpop.f32.mrb[0].mxu0
      %v1033 = vadd.f32 0.0, %v1032
      %v1034 = vpop.f32.mrb[0].mxu0
      %1035 = vmatprep.mubr.bf16.mxu0 0
      %1036 = vmatmul.mubr.bf16.gmra.mrb[0].mxu0 %v862
      %v1037 = vpop.f32.mrb[0].mxu0
      %v1038 = vadd.f32 0.0, %v1037
      %v1039 = vpop.f32.mrb[0].mxu0
      %v1040 = vpop.f32.mrb[0].mxu0
      %v1041 = vadd.f32 0.0, %v1040
      %v1042 = vpop.f32.mrb[0].mxu0
      %1043 = vdwg.mxu0
      %v1044 = vadd.f32 %v612, %v902
      %v1045 = vadd.f32 %v615, %v905
      %v1046 = vadd.f32 %v620, %v910
      %v1047 = vadd.f32 %v623, %v913
      %v1048 = vadd.f32 %v628, %v918
      %v1049 = vadd.f32 %v631, %v921
      %v1050 = vadd.f32 %v636, %v926
      %v1051 = vadd.f32 %v639, %v929
      %v1052 = vadd.f32 %v644, %v934
      %v1053 = vadd.f32 %v647, %v937
      %v1054 = vadd.f32 %v652, %v942
      %v1055 = vadd.f32 %v655, %v945
      %v1056 = vadd.f32 %v660, %v950
      %v1057 = vadd.f32 %v663, %v953
      %v1058 = vadd.f32 %v668, %v958
      %v1059 = vadd.f32 %v671, %v961
      %v1060 = vadd.f32 %v676, %v966
      %v1061 = vadd.f32 %v679, %v969
      %v1062 = vadd.f32 %v684, %v974
      %v1063 = vadd.f32 %v687, %v977
      %v1064 = vadd.f32 %v692, %v982
      %v1065 = vadd.f32 %v695, %v985
      %v1066 = vadd.f32 %v700, %v990
      %v1067 = vadd.f32 %v703, %v993
      %v1068 = vadd.f32 %v708, %v998
      %v1069 = vadd.f32 %v711, %v1001
      %v1070 = vadd.f32 %v716, %v1006
      %v1071 = vadd.f32 %v719, %v1009
      %v1072 = vadd.f32 %v724, %v1014
      %v1073 = vadd.f32 %v727, %v1017
      %v1074 = vadd.f32 %v732, %v1022
      %v1075 = vadd.f32 %v735, %v1025
      %v1076 = vadd.f32 %v740, %v1030
      %v1077 = vadd.f32 %v743, %v1033
      %v1078 = vadd.f32 %v748, %v1038
      %v1079 = vadd.f32 %v751, %v1041
      %v1080 = vld [vmem:[%s166 + $0x12] sm:$0xff]
      %v1081 = vld [vmem:[%s166 + $0x1a] sm:$0xff]
      %v1082 = vld [vmem:[%s166 + $0x22] sm:$0xff]
      %v1083 = vld [vmem:[%s166 + $0x2a] sm:$0xff]
      %v1084 = vld [vmem:[%s166 + $0x32] sm:$0xff]
      %v1085 = vld [vmem:[%s166 + $0x3a] sm:$0xff]
      %v1086 = vld [vmem:[%s166 + $0x42] sm:$0xff]
      %v1087 = vld [vmem:[%s166 + $0x4a] sm:$0xff]
      %v1088 = vld [vmem:[%s166 + $0x52] sm:$0xff]
      %v1089 = vld [vmem:[%s166 + $0x5a] sm:$0xff]
      %v1090 = vld [vmem:[%s166 + $0x62] sm:$0xff]
      %v1091 = vld [vmem:[%s166 + $0x6a] sm:$0xff]
      %v1092 = vld [vmem:[%s166 + $0x72] sm:$0xff]
      %v1093 = vld [vmem:[%s166 + $0x7a] sm:$0xff]
      %v1094 = vld [vmem:[%s166 + $0x82] sm:$0xff]
      %v1095 = vld [vmem:[%s166 + $0x8a] sm:$0xff]
      %v1096 = vld [vmem:[%s166 + $0x92] sm:$0xff]
      %v1097 = vld [vmem:[%s166 + $0x9a] sm:$0xff]
      %v1098 = vld [vmem:[%s166 + $0xa2] sm:$0xff]
      %v1099 = vld [vmem:[%s166 + $0xaa] sm:$0xff]
      %v1100 = vld [vmem:[%s166 + $0xb2] sm:$0xff]
      %v1101 = vld [vmem:[%s166 + $0xba] sm:$0xff]
      %v1102 = vld [vmem:[%s166 + $0xc2] sm:$0xff]
      %v1103 = vld [vmem:[%s166 + $0xca] sm:$0xff]
      %v1104 = vld [vmem:[%s166 + $0xd2] sm:$0xff]
      %v1105 = vld [vmem:[%s166 + $0xda] sm:$0xff]
      %v1106 = vld [vmem:[%s166 + $0xe2] sm:$0xff]
      %v1107 = vld [vmem:[%s166 + $0xea] sm:$0xff]
      %v1108 = vld [vmem:[%s166 + $0xf2] sm:$0xff]
      %v1109 = vld [vmem:[%s166 + $0xfa] sm:$0xff]
      %v1110 = vld [vmem:[%s166 + $0x102] sm:$0xff]
      %v1111 = vld [vmem:[%s166 + $0x10a] sm:$0xff]
      %v1112 = vld [vmem:[%s166 + $0x112] sm:$0xff]
      %v1113 = vld [vmem:[%s166 + $0x11a] sm:$0xff]
      %v1114 = vld [vmem:[%s166 + $0x122] sm:$0xff]
      %v1115 = vld [vmem:[%s166 + $0x12a] sm:$0xff]
      %v1116 = vpack.c.bf16 %v1081, %v1080
      %v1117 = vpack.c.bf16 %v1083, %v1082
      %v1118 = vpack.c.bf16 %v1085, %v1084
      %v1119 = vpack.c.bf16 %v1087, %v1086
      %v1120 = vpack.c.bf16 %v1089, %v1088
      %v1121 = vpack.c.bf16 %v1091, %v1090
      %v1122 = vpack.c.bf16 %v1093, %v1092
      %v1123 = vpack.c.bf16 %v1095, %v1094
      %v1124 = vpack.c.bf16 %v1097, %v1096
      %v1125 = vpack.c.bf16 %v1099, %v1098
      %v1126 = vpack.c.bf16 %v1101, %v1100
      %v1127 = vpack.c.bf16 %v1103, %v1102
      %v1128 = vpack.c.bf16 %v1105, %v1104
      %v1129 = vpack.c.bf16 %v1107, %v1106
      %v1130 = vpack.c.bf16 %v1109, %v1108
      %v1131 = vpack.c.bf16 %v1111, %v1110
      %v1132 = vpack.c.bf16 %v1113, %v1112
      %v1133 = vpack.c.bf16 %v1115, %v1114
      %s1134 = scalar_lea.vmem %s1, 6
      %v1135 = vld [vmem:[%s1134] sm:$0x3]
      %v1137 = vsel %vm284, %v1116, 0
      %v1140 = vsel %vm284, %v1117, 0
      %v1143 = vsel %vm284, %v1118, 0
      %v1146 = vsel %vm284, %v1119, 0
      %v1149 = vsel %vm284, %v1120, 0
      %v1152 = vsel %vm284, %v1121, 0
      %v1155 = vsel %vm284, %v1122, 0
      %v1158 = vsel %vm284, %v1123, 0
      %v1161 = vsel %vm284, %v1124, 0
      %v1164 = vsel %vm284, %v1125, 0
      %v1167 = vsel %vm284, %v1126, 0
      %v1170 = vsel %vm284, %v1127, 0
      %v1173 = vsel %vm284, %v1128, 0
      %v1176 = vsel %vm284, %v1129, 0
      %v1179 = vsel %vm284, %v1130, 0
      %v1182 = vsel %vm284, %v1131, 0
      %v1185 = vsel %vm284, %v1132, 0
      %v1188 = vsel %vm284, %v1133, 0
      %v1191 = vsel %vm339, %v1135, 0
      %1193 = vmatprep.subr.bf16.mxu0 0
      %1194 = vmatpush1.bf16.msra.mxu0 %v1191
      %1195 = vmatprep.subr.bf16.mxu0 0
      %1196 = vmatpush1.bf16.msra.mxu0 0
      %1197 = vmatprep.subr.bf16.mxu0 0
      %1198 = vmatpush1.bf16.msra.mxu0 0
      %1199 = vmatprep.subr.bf16.mxu0 0
      %1200 = vmatpush1.bf16.msra.mxu0 0
      %1201 = vmatprep.subr.bf16.mxu0 0
      %1202 = vmatpush1.bf16.msra.mxu0 0
      %1203 = vmatprep.subr.bf16.mxu0 0
      %1204 = vmatpush1.bf16.msra.mxu0 0
      %1205 = vmatprep.subr.bf16.mxu0 0
      %1206 = vmatpush1.bf16.msra.mxu0 0
      %1207 = vmatprep.subr.bf16.mxu0 0
      %1208 = vmatpush1.bf16.msra.mxu0 0
      %1209 = vmatprep.subr.bf16.mxu0 0
      %1210 = vmatpush1.bf16.msra.mxu0 0
      %1211 = vmatprep.subr.bf16.mxu0 0
      %1212 = vmatpush1.bf16.msra.mxu0 0
      %1213 = vmatprep.subr.bf16.mxu0 0
      %1214 = vmatpush1.bf16.msra.mxu0 0
      %1215 = vmatprep.subr.bf16.mxu0 0
      %1216 = vmatpush1.bf16.msra.mxu0 0
      %1217 = vmatprep.subr.bf16.mxu0 0
      %1218 = vmatpush1.bf16.msra.mxu0 0
      %1219 = vmatprep.subr.bf16.mxu0 0
      %1220 = vmatpush1.bf16.msra.mxu0 0
      %1221 = vmatprep.subr.bf16.mxu0 0
      %1222 = vmatpush1.bf16.msra.mxu0 0
      %1223 = vmatprep.subr.bf16.mxu0 0
      %1224 = vmatpush1.bf16.msra.mxu0 0
      %1225 = vmatprep.mubr.bf16.mxu0 0
      %1226 = vmatmul.mubr.bf16.gmra.mrb[0].mxu0 %v1137
      %v1227 = vpop.f32.mrb[0].mxu0
      %v1228 = vadd.f32 0.0, %v1227
      %v1229 = vpop.f32.mrb[0].mxu0
      %v1230 = vpop.f32.mrb[0].mxu0
      %v1231 = vadd.f32 0.0, %v1230
      %v1232 = vpop.f32.mrb[0].mxu0
      %1233 = vmatprep.mubr.bf16.mxu0 0
      %1234 = vmatmul.mubr.bf16.gmra.mrb[0].mxu0 %v1140
      %v1235 = vpop.f32.mrb[0].mxu0
      %v1236 = vadd.f32 0.0, %v1235
      %v1237 = vpop.f32.mrb[0].mxu0
      %v1238 = vpop.f32.mrb[0].mxu0
      %v1239 = vadd.f32 0.0, %v1238
      %v1240 = vpop.f32.mrb[0].mxu0
      %1241 = vmatprep.mubr.bf16.mxu0 0
      %1242 = vmatmul.mubr.bf16.gmra.mrb[0].mxu0 %v1143
      %v1243 = vpop.f32.mrb[0].mxu0
      %v1244 = vadd.f32 0.0, %v1243
      %v1245 = vpop.f32.mrb[0].mxu0
      %v1246 = vpop.f32.mrb[0].mxu0
      %v1247 = vadd.f32 0.0, %v1246
      %v1248 = vpop.f32.mrb[0].mxu0
      %1249 = vmatprep.mubr.bf16.mxu0 0
      %1250 = vmatmul.mubr.bf16.gmra.mrb[0].mxu0 %v1146
      %v1251 = vpop.f32.mrb[0].mxu0
      %v1252 = vadd.f32 0.0, %v1251
      %v1253 = vpop.f32.mrb[0].mxu0
      %v1254 = vpop.f32.mrb[0].mxu0
      %v1255 = vadd.f32 0.0, %v1254
      %v1256 = vpop.f32.mrb[0].mxu0
      %1257 = vmatprep.mubr.bf16.mxu0 0
      %1258 = vmatmul.mubr.bf16.gmra.mrb[0].mxu0 %v1149
      %v1259 = vpop.f32.mrb[0].mxu0
      %v1260 = vadd.f32 0.0, %v1259
      %v1261 = vpop.f32.mrb[0].mxu0
      %v1262 = vpop.f32.mrb[0].mxu0
      %v1263 = vadd.f32 0.0, %v1262
      %v1264 = vpop.f32.mrb[0].mxu0
      %1265 = vmatprep.mubr.bf16.mxu0 0
      %1266 = vmatmul.mubr.bf16.gmra.mrb[0].mxu0 %v1152
      %v1267 = vpop.f32.mrb[0].mxu0
      %v1268 = vadd.f32 0.0, %v1267
      %v1269 = vpop.f32.mrb[0].mxu0
      %v1270 = vpop.f32.mrb[0].mxu0
      %v1271 = vadd.f32 0.0, %v1270
      %v1272 = vpop.f32.mrb[0].mxu0
      %1273 = vmatprep.mubr.bf16.mxu0 0
      %1274 = vmatmul.mubr.bf16.gmra.mrb[0].mxu0 %v1155
      %v1275 = vpop.f32.mrb[0].mxu0
      %v1276 = vadd.f32 0.0, %v1275
      %v1277 = vpop.f32.mrb[0].mxu0
      %v1278 = vpop.f32.mrb[0].mxu0
      %v1279 = vadd.f32 0.0, %v1278
      %v1280 = vpop.f32.mrb[0].mxu0
      %1281 = vmatprep.mubr.bf16.mxu0 0
      %1282 = vmatmul.mubr.bf16.gmra.mrb[0].mxu0 %v1158
      %v1283 = vpop.f32.mrb[0].mxu0
      %v1284 = vadd.f32 0.0, %v1283
      %v1285 = vpop.f32.mrb[0].mxu0
      %v1286 = vpop.f32.mrb[0].mxu0
      %v1287 = vadd.f32 0.0, %v1286
      %v1288 = vpop.f32.mrb[0].mxu0
      %1289 = vmatprep.mubr.bf16.mxu0 0
      %1290 = vmatmul.mubr.bf16.gmra.mrb[0].mxu0 %v1161
      %v1291 = vpop.f32.mrb[0].mxu0
      %v1292 = vadd.f32 0.0, %v1291
      %v1293 = vpop.f32.mrb[0].mxu0
      %v1294 = vpop.f32.mrb[0].mxu0
      %v1295 = vadd.f32 0.0, %v1294
      %v1296 = vpop.f32.mrb[0].mxu0
      %1297 = vmatprep.mubr.bf16.mxu0 0
      %1298 = vmatmul.mubr.bf16.gmra.mrb[0].mxu0 %v1164
      %v1299 = vpop.f32.mrb[0].mxu0
      %v1300 = vadd.f32 0.0, %v1299
      %v1301 = vpop.f32.mrb[0].mxu0
      %v1302 = vpop.f32.mrb[0].mxu0
      %v1303 = vadd.f32 0.0, %v1302
      %v1304 = vpop.f32.mrb[0].mxu0
      %1305 = vmatprep.mubr.bf16.mxu0 0
      %1306 = vmatmul.mubr.bf16.gmra.mrb[0].mxu0 %v1167
      %v1307 = vpop.f32.mrb[0].mxu0
      %v1308 = vadd.f32 0.0, %v1307
      %v1309 = vpop.f32.mrb[0].mxu0
      %v1310 = vpop.f32.mrb[0].mxu0
      %v1311 = vadd.f32 0.0, %v1310
      %v1312 = vpop.f32.mrb[0].mxu0
      %1313 = vmatprep.mubr.bf16.mxu0 0
      %1314 = vmatmul.mubr.bf16.gmra.mrb[0].mxu0 %v1170
      %v1315 = vpop.f32.mrb[0].mxu0
      %v1316 = vadd.f32 0.0, %v1315
      %v1317 = vpop.f32.mrb[0].mxu0
      %v1318 = vpop.f32.mrb[0].mxu0
      %v1319 = vadd.f32 0.0, %v1318
      %v1320 = vpop.f32.mrb[0].mxu0
      %1321 = vmatprep.mubr.bf16.mxu0 0
      %1322 = vmatmul.mubr.bf16.gmra.mrb[0].mxu0 %v1173
      %v1323 = vpop.f32.mrb[0].mxu0
      %v1324 = vadd.f32 0.0, %v1323
      %v1325 = vpop.f32.mrb[0].mxu0
      %v1326 = vpop.f32.mrb[0].mxu0
      %v1327 = vadd.f32 0.0, %v1326
      %v1328 = vpop.f32.mrb[0].mxu0
      %1329 = vmatprep.mubr.bf16.mxu0 0
      %1330 = vmatmul.mubr.bf16.gmra.mrb[0].mxu0 %v1176
      %v1331 = vpop.f32.mrb[0].mxu0
      %v1332 = vadd.f32 0.0, %v1331
      %v1333 = vpop.f32.mrb[0].mxu0
      %v1334 = vpop.f32.mrb[0].mxu0
      %v1335 = vadd.f32 0.0, %v1334
      %v1336 = vpop.f32.mrb[0].mxu0
      %1337 = vmatprep.mubr.bf16.mxu0 0
      %1338 = vmatmul.mubr.bf16.gmra.mrb[0].mxu0 %v1179
      %v1339 = vpop.f32.mrb[0].mxu0
      %v1340 = vadd.f32 0.0, %v1339
      %v1341 = vpop.f32.mrb[0].mxu0
      %v1342 = vpop.f32.mrb[0].mxu0
      %v1343 = vadd.f32 0.0, %v1342
      %v1344 = vpop.f32.mrb[0].mxu0
      %1345 = vmatprep.mubr.bf16.mxu0 0
      %1346 = vmatmul.mubr.bf16.gmra.mrb[0].mxu0 %v1182
      %v1347 = vpop.f32.mrb[0].mxu0
      %v1348 = vadd.f32 0.0, %v1347
      %v1349 = vpop.f32.mrb[0].mxu0
      %v1350 = vpop.f32.mrb[0].mxu0
      %v1351 = vadd.f32 0.0, %v1350
      %v1352 = vpop.f32.mrb[0].mxu0
      %1353 = vmatprep.mubr.bf16.mxu0 0
      %1354 = vmatmul.mubr.bf16.gmra.mrb[0].mxu0 %v1185
      %v1355 = vpop.f32.mrb[0].mxu0
      %v1356 = vadd.f32 0.0, %v1355
      %v1357 = vpop.f32.mrb[0].mxu0
      %v1358 = vpop.f32.mrb[0].mxu0
      %v1359 = vadd.f32 0.0, %v1358
      %v1360 = vpop.f32.mrb[0].mxu0
      %1361 = vmatprep.mubr.bf16.mxu0 0
      %1362 = vmatmul.mubr.bf16.gmra.mrb[0].mxu0 %v1188
      %v1363 = vpop.f32.mrb[0].mxu0
      %v1364 = vadd.f32 0.0, %v1363
      %v1365 = vpop.f32.mrb[0].mxu0
      %v1366 = vpop.f32.mrb[0].mxu0
      %v1367 = vadd.f32 0.0, %v1366
      %v1368 = vpop.f32.mrb[0].mxu0
      %1369 = vdwg.mxu0
      %v1370 = vadd.f32 %v1044, %v1228
      %v1371 = vadd.f32 %v1045, %v1231
      %v1372 = vadd.f32 %v1046, %v1236
      %v1373 = vadd.f32 %v1047, %v1239
      %v1374 = vadd.f32 %v1048, %v1244
      %v1375 = vadd.f32 %v1049, %v1247
      %v1376 = vadd.f32 %v1050, %v1252
      %v1377 = vadd.f32 %v1051, %v1255
      %v1378 = vadd.f32 %v1052, %v1260
      %v1379 = vadd.f32 %v1053, %v1263
      %v1380 = vadd.f32 %v1054, %v1268
      %v1381 = vadd.f32 %v1055, %v1271
      %v1382 = vadd.f32 %v1056, %v1276
      %v1383 = vadd.f32 %v1057, %v1279
      %v1384 = vadd.f32 %v1058, %v1284
      %v1385 = vadd.f32 %v1059, %v1287
      %v1386 = vadd.f32 %v1060, %v1292
      %v1387 = vadd.f32 %v1061, %v1295
      %v1388 = vadd.f32 %v1062, %v1300
      %v1389 = vadd.f32 %v1063, %v1303
      %v1390 = vadd.f32 %v1064, %v1308
      %v1391 = vadd.f32 %v1065, %v1311
      %v1392 = vadd.f32 %v1066, %v1316
      %v1393 = vadd.f32 %v1067, %v1319
      %v1394 = vadd.f32 %v1068, %v1324
      %v1395 = vadd.f32 %v1069, %v1327
      %v1396 = vadd.f32 %v1070, %v1332
      %v1397 = vadd.f32 %v1071, %v1335
      %v1398 = vadd.f32 %v1072, %v1340
      %v1399 = vadd.f32 %v1073, %v1343
      %v1400 = vadd.f32 %v1074, %v1348
      %v1401 = vadd.f32 %v1075, %v1351
      %v1402 = vadd.f32 %v1076, %v1356
      %v1403 = vadd.f32 %v1077, %v1359
      %v1404 = vadd.f32 %v1078, %v1364
      %v1405 = vadd.f32 %v1079, %v1367
      %v1406 = vld [vmem:[%s166 + $0x13] sm:$0xff]
      %v1407 = vld [vmem:[%s166 + $0x1b] sm:$0xff]
      %v1408 = vld [vmem:[%s166 + $0x23] sm:$0xff]
      %v1409 = vld [vmem:[%s166 + $0x2b] sm:$0xff]
      %v1410 = vld [vmem:[%s166 + $0x33] sm:$0xff]
      %v1411 = vld [vmem:[%s166 + $0x3b] sm:$0xff]
      %v1412 = vld [vmem:[%s166 + $0x43] sm:$0xff]
      %v1413 = vld [vmem:[%s166 + $0x4b] sm:$0xff]
      %v1414 = vld [vmem:[%s166 + $0x53] sm:$0xff]
      %v1415 = vld [vmem:[%s166 + $0x5b] sm:$0xff]
      %v1416 = vld [vmem:[%s166 + $0x63] sm:$0xff]
      %v1417 = vld [vmem:[%s166 + $0x6b] sm:$0xff]
      %v1418 = vld [vmem:[%s166 + $0x73] sm:$0xff]
      %v1419 = vld [vmem:[%s166 + $0x7b] sm:$0xff]
      %v1420 = vld [vmem:[%s166 + $0x83] sm:$0xff]
      %v1421 = vld [vmem:[%s166 + $0x8b] sm:$0xff]
      %v1422 = vld [vmem:[%s166 + $0x93] sm:$0xff]
      %v1423 = vld [vmem:[%s166 + $0x9b] sm:$0xff]
      %v1424 = vld [vmem:[%s166 + $0xa3] sm:$0xff]
      %v1425 = vld [vmem:[%s166 + $0xab] sm:$0xff]
      %v1426 = vld [vmem:[%s166 + $0xb3] sm:$0xff]
      %v1427 = vld [vmem:[%s166 + $0xbb] sm:$0xff]
      %v1428 = vld [vmem:[%s166 + $0xc3] sm:$0xff]
      %v1429 = vld [vmem:[%s166 + $0xcb] sm:$0xff]
      %v1430 = vld [vmem:[%s166 + $0xd3] sm:$0xff]
      %v1431 = vld [vmem:[%s166 + $0xdb] sm:$0xff]
      %v1432 = vld [vmem:[%s166 + $0xe3] sm:$0xff]
      %v1433 = vld [vmem:[%s166 + $0xeb] sm:$0xff]
      %v1434 = vld [vmem:[%s166 + $0xf3] sm:$0xff]
      %v1435 = vld [vmem:[%s166 + $0xfb] sm:$0xff]
      %v1436 = vld [vmem:[%s166 + $0x103] sm:$0xff]
      %v1437 = vld [vmem:[%s166 + $0x10b] sm:$0xff]
      %v1438 = vld [vmem:[%s166 + $0x113] sm:$0xff]
      %v1439 = vld [vmem:[%s166 + $0x11b] sm:$0xff]
      %v1440 = vld [vmem:[%s166 + $0x123] sm:$0xff]
      %v1441 = vld [vmem:[%s166 + $0x12b] sm:$0xff]
      %v1442 = vpack.c.bf16 %v1407, %v1406
      %v1443 = vpack.c.bf16 %v1409, %v1408
      %v1444 = vpack.c.bf16 %v1411, %v1410
      %v1445 = vpack.c.bf16 %v1413, %v1412
      %v1446 = vpack.c.bf16 %v1415, %v1414
      %v1447 = vpack.c.bf16 %v1417, %v1416
      %v1448 = vpack.c.bf16 %v1419, %v1418
      %v1449 = vpack.c.bf16 %v1421, %v1420
      %v1450 = vpack.c.bf16 %v1423, %v1422
      %v1451 = vpack.c.bf16 %v1425, %v1424
      %v1452 = vpack.c.bf16 %v1427, %v1426
      %v1453 = vpack.c.bf16 %v1429, %v1428
      %v1454 = vpack.c.bf16 %v1431, %v1430
      %v1455 = vpack.c.bf16 %v1433, %v1432
      %v1456 = vpack.c.bf16 %v1435, %v1434
      %v1457 = vpack.c.bf16 %v1437, %v1436
      %v1458 = vpack.c.bf16 %v1439, %v1438
      %v1459 = vpack.c.bf16 %v1441, %v1440
      %s1460 = scalar_lea.vmem %s1, 8
      %v1461 = vld [vmem:[%s1460] sm:$0x3]
      %v1463 = vsel %vm284, %v1442, 0
      %v1466 = vsel %vm284, %v1443, 0
      %v1469 = vsel %vm284, %v1444, 0
      %v1472 = vsel %vm284, %v1445, 0
      %v1475 = vsel %vm284, %v1446, 0
      %v1478 = vsel %vm284, %v1447, 0
      %v1481 = vsel %vm284, %v1448, 0
      %v1484 = vsel %vm284, %v1449, 0
      %v1487 = vsel %vm284, %v1450, 0
      %v1490 = vsel %vm284, %v1451, 0
      %v1493 = vsel %vm284, %v1452, 0
      %v1496 = vsel %vm284, %v1453, 0
      %v1499 = vsel %vm284, %v1454, 0
      %v1502 = vsel %vm284, %v1455, 0
      %v1505 = vsel %vm284, %v1456, 0
      %v1508 = vsel %vm284, %v1457, 0
      %v1511 = vsel %vm284, %v1458, 0
      %v1514 = vsel %vm284, %v1459, 0
      %v1517 = vsel %vm339, %v1461, 0
      %1519 = vmatprep.subr.bf16.mxu0 0
      %1520 = vmatpush1.bf16.msra.mxu0 %v1517
      %1521 = vmatprep.subr.bf16.mxu0 0
      %1522 = vmatpush1.bf16.msra.mxu0 0
      %1523 = vmatprep.subr.bf16.mxu0 0
      %1524 = vmatpush1.bf16.msra.mxu0 0
      %1525 = vmatprep.subr.bf16.mxu0 0
      %1526 = vmatpush1.bf16.msra.mxu0 0
      %1527 = vmatprep.subr.bf16.mxu0 0
      %1528 = vmatpush1.bf16.msra.mxu0 0
      %1529 = vmatprep.subr.bf16.mxu0 0
      %1530 = vmatpush1.bf16.msra.mxu0 0
      %1531 = vmatprep.subr.bf16.mxu0 0
      %1532 = vmatpush1.bf16.msra.mxu0 0
      %1533 = vmatprep.subr.bf16.mxu0 0
      %1534 = vmatpush1.bf16.msra.mxu0 0
      %1535 = vmatprep.subr.bf16.mxu0 0
      %1536 = vmatpush1.bf16.msra.mxu0 0
      %1537 = vmatprep.subr.bf16.mxu0 0
      %1538 = vmatpush1.bf16.msra.mxu0 0
      %1539 = vmatprep.subr.bf16.mxu0 0
      %1540 = vmatpush1.bf16.msra.mxu0 0
      %1541 = vmatprep.subr.bf16.mxu0 0
      %1542 = vmatpush1.bf16.msra.mxu0 0
      %1543 = vmatprep.subr.bf16.mxu0 0
      %1544 = vmatpush1.bf16.msra.mxu0 0
      %1545 = vmatprep.subr.bf16.mxu0 0
      %1546 = vmatpush1.bf16.msra.mxu0 0
      %1547 = vmatprep.subr.bf16.mxu0 0
      %1548 = vmatpush1.bf16.msra.mxu0 0
      %1549 = vmatprep.subr.bf16.mxu0 0
      %1550 = vmatpush1.bf16.msra.mxu0 0
      %1551 = vmatprep.mubr.bf16.mxu0 0
      %1552 = vmatmul.mubr.bf16.gmra.mrb[0].mxu0 %v1463
      %v1553 = vpop.f32.mrb[0].mxu0
      %v1554 = vadd.f32 0.0, %v1553
      %v1555 = vpop.f32.mrb[0].mxu0
      %v1556 = vpop.f32.mrb[0].mxu0
      %v1557 = vadd.f32 0.0, %v1556
      %v1558 = vpop.f32.mrb[0].mxu0
      %1559 = vmatprep.mubr.bf16.mxu0 0
      %1560 = vmatmul.mubr.bf16.gmra.mrb[0].mxu0 %v1466
      %v1561 = vpop.f32.mrb[0].mxu0
      %v1562 = vadd.f32 0.0, %v1561
      %v1563 = vpop.f32.mrb[0].mxu0
      %v1564 = vpop.f32.mrb[0].mxu0
      %v1565 = vadd.f32 0.0, %v1564
      %v1566 = vpop.f32.mrb[0].mxu0
      %1567 = vmatprep.mubr.bf16.mxu0 0
      %1568 = vmatmul.mubr.bf16.gmra.mrb[0].mxu0 %v1469
      %v1569 = vpop.f32.mrb[0].mxu0
      %v1570 = vadd.f32 0.0, %v1569
      %v1571 = vpop.f32.mrb[0].mxu0
      %v1572 = vpop.f32.mrb[0].mxu0
      %v1573 = vadd.f32 0.0, %v1572
      %v1574 = vpop.f32.mrb[0].mxu0
      %1575 = vmatprep.mubr.bf16.mxu0 0
      %1576 = vmatmul.mubr.bf16.gmra.mrb[0].mxu0 %v1472
      %v1577 = vpop.f32.mrb[0].mxu0
      %v1578 = vadd.f32 0.0, %v1577
      %v1579 = vpop.f32.mrb[0].mxu0
      %v1580 = vpop.f32.mrb[0].mxu0
      %v1581 = vadd.f32 0.0, %v1580
      %v1582 = vpop.f32.mrb[0].mxu0
      %1583 = vmatprep.mubr.bf16.mxu0 0
      %1584 = vmatmul.mubr.bf16.gmra.mrb[0].mxu0 %v1475
      %v1585 = vpop.f32.mrb[0].mxu0
      %v1586 = vadd.f32 0.0, %v1585
      %v1587 = vpop.f32.mrb[0].mxu0
      %v1588 = vpop.f32.mrb[0].mxu0
      %v1589 = vadd.f32 0.0, %v1588
      %v1590 = vpop.f32.mrb[0].mxu0
      %1591 = vmatprep.mubr.bf16.mxu0 0
      %1592 = vmatmul.mubr.bf16.gmra.mrb[0].mxu0 %v1478
      %v1593 = vpop.f32.mrb[0].mxu0
      %v1594 = vadd.f32 0.0, %v1593
      %v1595 = vpop.f32.mrb[0].mxu0
      %v1596 = vpop.f32.mrb[0].mxu0
      %v1597 = vadd.f32 0.0, %v1596
      %v1598 = vpop.f32.mrb[0].mxu0
      %1599 = vmatprep.mubr.bf16.mxu0 0
      %1600 = vmatmul.mubr.bf16.gmra.mrb[0].mxu0 %v1481
      %v1601 = vpop.f32.mrb[0].mxu0
      %v1602 = vadd.f32 0.0, %v1601
      %v1603 = vpop.f32.mrb[0].mxu0
      %v1604 = vpop.f32.mrb[0].mxu0
      %v1605 = vadd.f32 0.0, %v1604
      %v1606 = vpop.f32.mrb[0].mxu0
      %1607 = vmatprep.mubr.bf16.mxu0 0
      %1608 = vmatmul.mubr.bf16.gmra.mrb[0].mxu0 %v1484
      %v1609 = vpop.f32.mrb[0].mxu0
      %v1610 = vadd.f32 0.0, %v1609
      %v1611 = vpop.f32.mrb[0].mxu0
      %v1612 = vpop.f32.mrb[0].mxu0
      %v1613 = vadd.f32 0.0, %v1612
      %v1614 = vpop.f32.mrb[0].mxu0
      %1615 = vmatprep.mubr.bf16.mxu0 0
      %1616 = vmatmul.mubr.bf16.gmra.mrb[0].mxu0 %v1487
      %v1617 = vpop.f32.mrb[0].mxu0
      %v1618 = vadd.f32 0.0, %v1617
      %v1619 = vpop.f32.mrb[0].mxu0
      %v1620 = vpop.f32.mrb[0].mxu0
      %v1621 = vadd.f32 0.0, %v1620
      %v1622 = vpop.f32.mrb[0].mxu0
      %1623 = vmatprep.mubr.bf16.mxu0 0
      %1624 = vmatmul.mubr.bf16.gmra.mrb[0].mxu0 %v1490
      %v1625 = vpop.f32.mrb[0].mxu0
      %v1626 = vadd.f32 0.0, %v1625
      %v1627 = vpop.f32.mrb[0].mxu0
      %v1628 = vpop.f32.mrb[0].mxu0
      %v1629 = vadd.f32 0.0, %v1628
      %v1630 = vpop.f32.mrb[0].mxu0
      %1631 = vmatprep.mubr.bf16.mxu0 0
      %1632 = vmatmul.mubr.bf16.gmra.mrb[0].mxu0 %v1493
      %v1633 = vpop.f32.mrb[0].mxu0
      %v1634 = vadd.f32 0.0, %v1633
      %v1635 = vpop.f32.mrb[0].mxu0
      %v1636 = vpop.f32.mrb[0].mxu0
      %v1637 = vadd.f32 0.0, %v1636
      %v1638 = vpop.f32.mrb[0].mxu0
      %1639 = vmatprep.mubr.bf16.mxu0 0
      %1640 = vmatmul.mubr.bf16.gmra.mrb[0].mxu0 %v1496
      %v1641 = vpop.f32.mrb[0].mxu0
      %v1642 = vadd.f32 0.0, %v1641
      %v1643 = vpop.f32.mrb[0].mxu0
      %v1644 = vpop.f32.mrb[0].mxu0
      %v1645 = vadd.f32 0.0, %v1644
      %v1646 = vpop.f32.mrb[0].mxu0
      %1647 = vmatprep.mubr.bf16.mxu0 0
      %1648 = vmatmul.mubr.bf16.gmra.mrb[0].mxu0 %v1499
      %v1649 = vpop.f32.mrb[0].mxu0
      %v1650 = vadd.f32 0.0, %v1649
      %v1651 = vpop.f32.mrb[0].mxu0
      %v1652 = vpop.f32.mrb[0].mxu0
      %v1653 = vadd.f32 0.0, %v1652
      %v1654 = vpop.f32.mrb[0].mxu0
      %1655 = vmatprep.mubr.bf16.mxu0 0
      %1656 = vmatmul.mubr.bf16.gmra.mrb[0].mxu0 %v1502
      %v1657 = vpop.f32.mrb[0].mxu0
      %v1658 = vadd.f32 0.0, %v1657
      %v1659 = vpop.f32.mrb[0].mxu0
      %v1660 = vpop.f32.mrb[0].mxu0
      %v1661 = vadd.f32 0.0, %v1660
      %v1662 = vpop.f32.mrb[0].mxu0
      %1663 = vmatprep.mubr.bf16.mxu0 0
      %1664 = vmatmul.mubr.bf16.gmra.mrb[0].mxu0 %v1505
      %v1665 = vpop.f32.mrb[0].mxu0
      %v1666 = vadd.f32 0.0, %v1665
      %v1667 = vpop.f32.mrb[0].mxu0
      %v1668 = vpop.f32.mrb[0].mxu0
      %v1669 = vadd.f32 0.0, %v1668
      %v1670 = vpop.f32.mrb[0].mxu0
      %1671 = vmatprep.mubr.bf16.mxu0 0
      %1672 = vmatmul.mubr.bf16.gmra.mrb[0].mxu0 %v1508
      %v1673 = vpop.f32.mrb[0].mxu0
      %v1674 = vadd.f32 0.0, %v1673
      %v1675 = vpop.f32.mrb[0].mxu0
      %v1676 = vpop.f32.mrb[0].mxu0
      %v1677 = vadd.f32 0.0, %v1676
      %v1678 = vpop.f32.mrb[0].mxu0
      %1679 = vmatprep.mubr.bf16.mxu0 0
      %1680 = vmatmul.mubr.bf16.gmra.mrb[0].mxu0 %v1511
      %v1681 = vpop.f32.mrb[0].mxu0
      %v1682 = vadd.f32 0.0, %v1681
      %v1683 = vpop.f32.mrb[0].mxu0
      %v1684 = vpop.f32.mrb[0].mxu0
      %v1685 = vadd.f32 0.0, %v1684
      %v1686 = vpop.f32.mrb[0].mxu0
      %1687 = vmatprep.mubr.bf16.mxu0 0
      %1688 = vmatmul.mubr.bf16.gmra.mrb[0].mxu0 %v1514
      %v1689 = vpop.f32.mrb[0].mxu0
      %v1690 = vadd.f32 0.0, %v1689
      %v1691 = vpop.f32.mrb[0].mxu0
      %v1692 = vpop.f32.mrb[0].mxu0
      %v1693 = vadd.f32 0.0, %v1692
      %v1694 = vpop.f32.mrb[0].mxu0
      %1695 = vdwg.mxu0
      %v1696 = vadd.f32 %v1370, %v1554
      %v1697 = vadd.f32 %v1371, %v1557
      %v1698 = vadd.f32 %v1372, %v1562
      %v1699 = vadd.f32 %v1373, %v1565
      %v1700 = vadd.f32 %v1374, %v1570
      %v1701 = vadd.f32 %v1375, %v1573
      %v1702 = vadd.f32 %v1376, %v1578
      %v1703 = vadd.f32 %v1377, %v1581
      %v1704 = vadd.f32 %v1378, %v1586
      %v1705 = vadd.f32 %v1379, %v1589
      %v1706 = vadd.f32 %v1380, %v1594
      %v1707 = vadd.f32 %v1381, %v1597
      %v1708 = vadd.f32 %v1382, %v1602
      %v1709 = vadd.f32 %v1383, %v1605
      %v1710 = vadd.f32 %v1384, %v1610
      %v1711 = vadd.f32 %v1385, %v1613
      %v1712 = vadd.f32 %v1386, %v1618
      %v1713 = vadd.f32 %v1387, %v1621
      %v1714 = vadd.f32 %v1388, %v1626
      %v1715 = vadd.f32 %v1389, %v1629
      %v1716 = vadd.f32 %v1390, %v1634
      %v1717 = vadd.f32 %v1391, %v1637
      %v1718 = vadd.f32 %v1392, %v1642
      %v1719 = vadd.f32 %v1393, %v1645
      %v1720 = vadd.f32 %v1394, %v1650
      %v1721 = vadd.f32 %v1395, %v1653
      %v1722 = vadd.f32 %v1396, %v1658
      %v1723 = vadd.f32 %v1397, %v1661
      %v1724 = vadd.f32 %v1398, %v1666
      %v1725 = vadd.f32 %v1399, %v1669
      %v1726 = vadd.f32 %v1400, %v1674
      %v1727 = vadd.f32 %v1401, %v1677
      %v1728 = vadd.f32 %v1402, %v1682
      %v1729 = vadd.f32 %v1403, %v1685
      %v1730 = vadd.f32 %v1404, %v1690
      %v1731 = vadd.f32 %v1405, %v1693
      %v1732 = vld [vmem:[%s166 + $0x14] sm:$0xff]
      %v1733 = vld [vmem:[%s166 + $0x1c] sm:$0xff]
      %v1734 = vld [vmem:[%s166 + $0x24] sm:$0xff]
      %v1735 = vld [vmem:[%s166 + $0x2c] sm:$0xff]
      %v1736 = vld [vmem:[%s166 + $0x34] sm:$0xff]
      %v1737 = vld [vmem:[%s166 + $0x3c] sm:$0xff]
      %v1738 = vld [vmem:[%s166 + $0x44] sm:$0xff]
      %v1739 = vld [vmem:[%s166 + $0x4c] sm:$0xff]
      %v1740 = vld [vmem:[%s166 + $0x54] sm:$0xff]
      %v1741 = vld [vmem:[%s166 + $0x5c] sm:$0xff]
      %v1742 = vld [vmem:[%s166 + $0x64] sm:$0xff]
      %v1743 = vld [vmem:[%s166 + $0x6c] sm:$0xff]
      %v1744 = vld [vmem:[%s166 + $0x74] sm:$0xff]
      %v1745 = vld [vmem:[%s166 + $0x7c] sm:$0xff]
      %v1746 = vld [vmem:[%s166 + $0x84] sm:$0xff]
      %v1747 = vld [vmem:[%s166 + $0x8c] sm:$0xff]
      %v1748 = vld [vmem:[%s166 + $0x94] sm:$0xff]
      %v1749 = vld [vmem:[%s166 + $0x9c] sm:$0xff]
      %v1750 = vld [vmem:[%s166 + $0xa4] sm:$0xff]
      %v1751 = vld [vmem:[%s166 + $0xac] sm:$0xff]
      %v1752 = vld [vmem:[%s166 + $0xb4] sm:$0xff]
      %v1753 = vld [vmem:[%s166 + $0xbc] sm:$0xff]
      %v1754 = vld [vmem:[%s166 + $0xc4] sm:$0xff]
      %v1755 = vld [vmem:[%s166 + $0xcc] sm:$0xff]
      %v1756 = vld [vmem:[%s166 + $0xd4] sm:$0xff]
      %v1757 = vld [vmem:[%s166 + $0xdc] sm:$0xff]
      %v1758 = vld [vmem:[%s166 + $0xe4] sm:$0xff]
      %v1759 = vld [vmem:[%s166 + $0xec] sm:$0xff]
      %v1760 = vld [vmem:[%s166 + $0xf4] sm:$0xff]
      %v1761 = vld [vmem:[%s166 + $0xfc] sm:$0xff]
      %v1762 = vld [vmem:[%s166 + $0x104] sm:$0xff]
      %v1763 = vld [vmem:[%s166 + $0x10c] sm:$0xff]
      %v1764 = vld [vmem:[%s166 + $0x114] sm:$0xff]
      %v1765 = vld [vmem:[%s166 + $0x11c] sm:$0xff]
      %v1766 = vld [vmem:[%s166 + $0x124] sm:$0xff]
      %v1767 = vld [vmem:[%s166 + $0x12c] sm:$0xff]
      %v1768 = vpack.c.bf16 %v1733, %v1732
      %v1769 = vpack.c.bf16 %v1735, %v1734
      %v1770 = vpack.c.bf16 %v1737, %v1736
      %v1771 = vpack.c.bf16 %v1739, %v1738
      %v1772 = vpack.c.bf16 %v1741, %v1740
      %v1773 = vpack.c.bf16 %v1743, %v1742
      %v1774 = vpack.c.bf16 %v1745, %v1744
      %v1775 = vpack.c.bf16 %v1747, %v1746
      %v1776 = vpack.c.bf16 %v1749, %v1748
      %v1777 = vpack.c.bf16 %v1751, %v1750
      %v1778 = vpack.c.bf16 %v1753, %v1752
      %v1779 = vpack.c.bf16 %v1755, %v1754
      %v1780 = vpack.c.bf16 %v1757, %v1756
      %v1781 = vpack.c.bf16 %v1759, %v1758
      %v1782 = vpack.c.bf16 %v1761, %v1760
      %v1783 = vpack.c.bf16 %v1763, %v1762
      %v1784 = vpack.c.bf16 %v1765, %v1764
      %v1785 = vpack.c.bf16 %v1767, %v1766
      %s1786 = scalar_lea.vmem %s1, 10
      %v1787 = vld [vmem:[%s1786] sm:$0x3]
      %v1789 = vsel %vm284, %v1768, 0
      %v1792 = vsel %vm284, %v1769, 0
      %v1795 = vsel %vm284, %v1770, 0
      %v1798 = vsel %vm284, %v1771, 0
      %v1801 = vsel %vm284, %v1772, 0
      %v1804 = vsel %vm284, %v1773, 0
      %v1807 = vsel %vm284, %v1774, 0
      %v1810 = vsel %vm284, %v1775, 0
      %v1813 = vsel %vm284, %v1776, 0
      %v1816 = vsel %vm284, %v1777, 0
      %v1819 = vsel %vm284, %v1778, 0
      %v1822 = vsel %vm284, %v1779, 0
      %v1825 = vsel %vm284, %v1780, 0
      %v1828 = vsel %vm284, %v1781, 0
      %v1831 = vsel %vm284, %v1782, 0
      %v1834 = vsel %vm284, %v1783, 0
      %v1837 = vsel %vm284, %v1784, 0
      %v1840 = vsel %vm284, %v1785, 0
      %v1843 = vsel %vm339, %v1787, 0
      %1845 = vmatprep.subr.bf16.mxu0 0
      %1846 = vmatpush1.bf16.msra.mxu0 %v1843
      %1847 = vmatprep.subr.bf16.mxu0 0
      %1848 = vmatpush1.bf16.msra.mxu0 0
      %1849 = vmatprep.subr.bf16.mxu0 0
      %1850 = vmatpush1.bf16.msra.mxu0 0
      %1851 = vmatprep.subr.bf16.mxu0 0
      %1852 = vmatpush1.bf16.msra.mxu0 0
      %1853 = vmatprep.subr.bf16.mxu0 0
      %1854 = vmatpush1.bf16.msra.mxu0 0
      %1855 = vmatprep.subr.bf16.mxu0 0
      %1856 = vmatpush1.bf16.msra.mxu0 0
      %1857 = vmatprep.subr.bf16.mxu0 0
      %1858 = vmatpush1.bf16.msra.mxu0 0
      %1859 = vmatprep.subr.bf16.mxu0 0
      %1860 = vmatpush1.bf16.msra.mxu0 0
      %1861 = vmatprep.subr.bf16.mxu0 0
      %1862 = vmatpush1.bf16.msra.mxu0 0
      %1863 = vmatprep.subr.bf16.mxu0 0
      %1864 = vmatpush1.bf16.msra.mxu0 0
      %1865 = vmatprep.subr.bf16.mxu0 0
      %1866 = vmatpush1.bf16.msra.mxu0 0
      %1867 = vmatprep.subr.bf16.mxu0 0
      %1868 = vmatpush1.bf16.msra.mxu0 0
      %1869 = vmatprep.subr.bf16.mxu0 0
      %1870 = vmatpush1.bf16.msra.mxu0 0
      %1871 = vmatprep.subr.bf16.mxu0 0
      %1872 = vmatpush1.bf16.msra.mxu0 0
      %1873 = vmatprep.subr.bf16.mxu0 0
      %1874 = vmatpush1.bf16.msra.mxu0 0
      %1875 = vmatprep.subr.bf16.mxu0 0
      %1876 = vmatpush1.bf16.msra.mxu0 0
      %1877 = vmatprep.mubr.bf16.mxu0 0
      %1878 = vmatmul.mubr.bf16.gmra.mrb[0].mxu0 %v1789
      %v1879 = vpop.f32.mrb[0].mxu0
      %v1880 = vadd.f32 0.0, %v1879
      %v1881 = vpop.f32.mrb[0].mxu0
      %v1882 = vpop.f32.mrb[0].mxu0
      %v1883 = vadd.f32 0.0, %v1882
      %v1884 = vpop.f32.mrb[0].mxu0
      %1885 = vmatprep.mubr.bf16.mxu0 0
      %1886 = vmatmul.mubr.bf16.gmra.mrb[0].mxu0 %v1792
      %v1887 = vpop.f32.mrb[0].mxu0
      %v1888 = vadd.f32 0.0, %v1887
      %v1889 = vpop.f32.mrb[0].mxu0
      %v1890 = vpop.f32.mrb[0].mxu0
      %v1891 = vadd.f32 0.0, %v1890
      %v1892 = vpop.f32.mrb[0].mxu0
      %1893 = vmatprep.mubr.bf16.mxu0 0
      %1894 = vmatmul.mubr.bf16.gmra.mrb[0].mxu0 %v1795
      %v1895 = vpop.f32.mrb[0].mxu0
      %v1896 = vadd.f32 0.0, %v1895
      %v1897 = vpop.f32.mrb[0].mxu0
      %v1898 = vpop.f32.mrb[0].mxu0
      %v1899 = vadd.f32 0.0, %v1898
      %v1900 = vpop.f32.mrb[0].mxu0
      %1901 = vmatprep.mubr.bf16.mxu0 0
      %1902 = vmatmul.mubr.bf16.gmra.mrb[0].mxu0 %v1798
      %v1903 = vpop.f32.mrb[0].mxu0
      %v1904 = vadd.f32 0.0, %v1903
      %v1905 = vpop.f32.mrb[0].mxu0
      %v1906 = vpop.f32.mrb[0].mxu0
      %v1907 = vadd.f32 0.0, %v1906
      %v1908 = vpop.f32.mrb[0].mxu0
      %1909 = vmatprep.mubr.bf16.mxu0 0
      %1910 = vmatmul.mubr.bf16.gmra.mrb[0].mxu0 %v1801
      %v1911 = vpop.f32.mrb[0].mxu0
      %v1912 = vadd.f32 0.0, %v1911
      %v1913 = vpop.f32.mrb[0].mxu0
      %v1914 = vpop.f32.mrb[0].mxu0
      %v1915 = vadd.f32 0.0, %v1914
      %v1916 = vpop.f32.mrb[0].mxu0
      %1917 = vmatprep.mubr.bf16.mxu0 0
      %1918 = vmatmul.mubr.bf16.gmra.mrb[0].mxu0 %v1804
      %v1919 = vpop.f32.mrb[0].mxu0
      %v1920 = vadd.f32 0.0, %v1919
      %v1921 = vpop.f32.mrb[0].mxu0
      %v1922 = vpop.f32.mrb[0].mxu0
      %v1923 = vadd.f32 0.0, %v1922
      %v1924 = vpop.f32.mrb[0].mxu0
      %1925 = vmatprep.mubr.bf16.mxu0 0
      %1926 = vmatmul.mubr.bf16.gmra.mrb[0].mxu0 %v1807
      %v1927 = vpop.f32.mrb[0].mxu0
      %v1928 = vadd.f32 0.0, %v1927
      %v1929 = vpop.f32.mrb[0].mxu0
      %v1930 = vpop.f32.mrb[0].mxu0
      %v1931 = vadd.f32 0.0, %v1930
      %v1932 = vpop.f32.mrb[0].mxu0
      %1933 = vmatprep.mubr.bf16.mxu0 0
      %1934 = vmatmul.mubr.bf16.gmra.mrb[0].mxu0 %v1810
      %v1935 = vpop.f32.mrb[0].mxu0
      %v1936 = vadd.f32 0.0, %v1935
      %v1937 = vpop.f32.mrb[0].mxu0
      %v1938 = vpop.f32.mrb[0].mxu0
      %v1939 = vadd.f32 0.0, %v1938
      %v1940 = vpop.f32.mrb[0].mxu0
      %1941 = vmatprep.mubr.bf16.mxu0 0
      %1942 = vmatmul.mubr.bf16.gmra.mrb[0].mxu0 %v1813
      %v1943 = vpop.f32.mrb[0].mxu0
      %v1944 = vadd.f32 0.0, %v1943
      %v1945 = vpop.f32.mrb[0].mxu0
      %v1946 = vpop.f32.mrb[0].mxu0
      %v1947 = vadd.f32 0.0, %v1946
      %v1948 = vpop.f32.mrb[0].mxu0
      %1949 = vmatprep.mubr.bf16.mxu0 0
      %1950 = vmatmul.mubr.bf16.gmra.mrb[0].mxu0 %v1816
      %v1951 = vpop.f32.mrb[0].mxu0
      %v1952 = vadd.f32 0.0, %v1951
      %v1953 = vpop.f32.mrb[0].mxu0
      %v1954 = vpop.f32.mrb[0].mxu0
      %v1955 = vadd.f32 0.0, %v1954
      %v1956 = vpop.f32.mrb[0].mxu0
      %1957 = vmatprep.mubr.bf16.mxu0 0
      %1958 = vmatmul.mubr.bf16.gmra.mrb[0].mxu0 %v1819
      %v1959 = vpop.f32.mrb[0].mxu0
      %v1960 = vadd.f32 0.0, %v1959
      %v1961 = vpop.f32.mrb[0].mxu0
      %v1962 = vpop.f32.mrb[0].mxu0
      %v1963 = vadd.f32 0.0, %v1962
      %v1964 = vpop.f32.mrb[0].mxu0
      %1965 = vmatprep.mubr.bf16.mxu0 0
      %1966 = vmatmul.mubr.bf16.gmra.mrb[0].mxu0 %v1822
      %v1967 = vpop.f32.mrb[0].mxu0
      %v1968 = vadd.f32 0.0, %v1967
      %v1969 = vpop.f32.mrb[0].mxu0
      %v1970 = vpop.f32.mrb[0].mxu0
      %v1971 = vadd.f32 0.0, %v1970
      %v1972 = vpop.f32.mrb[0].mxu0
      %1973 = vmatprep.mubr.bf16.mxu0 0
      %1974 = vmatmul.mubr.bf16.gmra.mrb[0].mxu0 %v1825
      %v1975 = vpop.f32.mrb[0].mxu0
      %v1976 = vadd.f32 0.0, %v1975
      %v1977 = vpop.f32.mrb[0].mxu0
      %v1978 = vpop.f32.mrb[0].mxu0
      %v1979 = vadd.f32 0.0, %v1978
      %v1980 = vpop.f32.mrb[0].mxu0
      %1981 = vmatprep.mubr.bf16.mxu0 0
      %1982 = vmatmul.mubr.bf16.gmra.mrb[0].mxu0 %v1828
      %v1983 = vpop.f32.mrb[0].mxu0
      %v1984 = vadd.f32 0.0, %v1983
      %v1985 = vpop.f32.mrb[0].mxu0
      %v1986 = vpop.f32.mrb[0].mxu0
      %v1987 = vadd.f32 0.0, %v1986
      %v1988 = vpop.f32.mrb[0].mxu0
      %1989 = vmatprep.mubr.bf16.mxu0 0
      %1990 = vmatmul.mubr.bf16.gmra.mrb[0].mxu0 %v1831
      %v1991 = vpop.f32.mrb[0].mxu0
      %v1992 = vadd.f32 0.0, %v1991
      %v1993 = vpop.f32.mrb[0].mxu0
      %v1994 = vpop.f32.mrb[0].mxu0
      %v1995 = vadd.f32 0.0, %v1994
      %v1996 = vpop.f32.mrb[0].mxu0
      %1997 = vmatprep.mubr.bf16.mxu0 0
      %1998 = vmatmul.mubr.bf16.gmra.mrb[0].mxu0 %v1834
      %v1999 = vpop.f32.mrb[0].mxu0
      %v2000 = vadd.f32 0.0, %v1999
      %v2001 = vpop.f32.mrb[0].mxu0
      %v2002 = vpop.f32.mrb[0].mxu0
      %v2003 = vadd.f32 0.0, %v2002
      %v2004 = vpop.f32.mrb[0].mxu0
      %2005 = vmatprep.mubr.bf16.mxu0 0
      %2006 = vmatmul.mubr.bf16.gmra.mrb[0].mxu0 %v1837
      %v2007 = vpop.f32.mrb[0].mxu0
      %v2008 = vadd.f32 0.0, %v2007
      %v2009 = vpop.f32.mrb[0].mxu0
      %v2010 = vpop.f32.mrb[0].mxu0
      %v2011 = vadd.f32 0.0, %v2010
      %v2012 = vpop.f32.mrb[0].mxu0
      %2013 = vmatprep.mubr.bf16.mxu0 0
      %2014 = vmatmul.mubr.bf16.gmra.mrb[0].mxu0 %v1840
      %v2015 = vpop.f32.mrb[0].mxu0
      %v2016 = vadd.f32 0.0, %v2015
      %v2017 = vpop.f32.mrb[0].mxu0
      %v2018 = vpop.f32.mrb[0].mxu0
      %v2019 = vadd.f32 0.0, %v2018
      %v2020 = vpop.f32.mrb[0].mxu0
      %2021 = vdwg.mxu0
      %v2022 = vadd.f32 %v1696, %v1880
      %v2023 = vadd.f32 %v1697, %v1883
      %v2024 = vadd.f32 %v1698, %v1888
      %v2025 = vadd.f32 %v1699, %v1891
      %v2026 = vadd.f32 %v1700, %v1896
      %v2027 = vadd.f32 %v1701, %v1899
      %v2028 = vadd.f32 %v1702, %v1904
      %v2029 = vadd.f32 %v1703, %v1907
      %v2030 = vadd.f32 %v1704, %v1912
      %v2031 = vadd.f32 %v1705, %v1915
      %v2032 = vadd.f32 %v1706, %v1920
      %v2033 = vadd.f32 %v1707, %v1923
      %v2034 = vadd.f32 %v1708, %v1928
      %v2035 = vadd.f32 %v1709, %v1931
      %v2036 = vadd.f32 %v1710, %v1936
      %v2037 = vadd.f32 %v1711, %v1939
      %v2038 = vadd.f32 %v1712, %v1944
      %v2039 = vadd.f32 %v1713, %v1947
      %v2040 = vadd.f32 %v1714, %v1952
      %v2041 = vadd.f32 %v1715, %v1955
      %v2042 = vadd.f32 %v1716, %v1960
      %v2043 = vadd.f32 %v1717, %v1963
      %v2044 = vadd.f32 %v1718, %v1968
      %v2045 = vadd.f32 %v1719, %v1971
      %v2046 = vadd.f32 %v1720, %v1976
      %v2047 = vadd.f32 %v1721, %v1979
      %v2048 = vadd.f32 %v1722, %v1984
      %v2049 = vadd.f32 %v1723, %v1987
      %v2050 = vadd.f32 %v1724, %v1992
      %v2051 = vadd.f32 %v1725, %v1995
      %v2052 = vadd.f32 %v1726, %v2000
      %v2053 = vadd.f32 %v1727, %v2003
      %v2054 = vadd.f32 %v1728, %v2008
      %v2055 = vadd.f32 %v1729, %v2011
      %v2056 = vadd.f32 %v1730, %v2016
      %v2057 = vadd.f32 %v1731, %v2019
      %v2058 = vld [vmem:[%s166 + $0x24] sm:$0xff]
      %v2059 = vld [vmem:[%s166 + $0x2c] sm:$0xff]
      %v2060 = vld [vmem:[%s166 + $0x34] sm:$0xff]
      %v2061 = vld [vmem:[%s166 + $0x3c] sm:$0xff]
      %v2062 = vld [vmem:[%s166 + $0x44] sm:$0xff]
      %v2063 = vld [vmem:[%s166 + $0x4c] sm:$0xff]
      %v2064 = vld [vmem:[%s166 + $0x54] sm:$0xff]
      %v2065 = vld [vmem:[%s166 + $0x5c] sm:$0xff]
      %v2066 = vld [vmem:[%s166 + $0x64] sm:$0xff]
      %v2067 = vld [vmem:[%s166 + $0x6c] sm:$0xff]
      %v2068 = vld [vmem:[%s166 + $0x74] sm:$0xff]
      %v2069 = vld [vmem:[%s166 + $0x7c] sm:$0xff]
      %v2070 = vld [vmem:[%s166 + $0x84] sm:$0xff]
      %v2071 = vld [vmem:[%s166 + $0x8c] sm:$0xff]
      %v2072 = vld [vmem:[%s166 + $0x94] sm:$0xff]
      %v2073 = vld [vmem:[%s166 + $0x9c] sm:$0xff]
      %v2074 = vld [vmem:[%s166 + $0xa4] sm:$0xff]
      %v2075 = vld [vmem:[%s166 + $0xac] sm:$0xff]
      %v2076 = vld [vmem:[%s166 + $0xb4] sm:$0xff]
      %v2077 = vld [vmem:[%s166 + $0xbc] sm:$0xff]
      %v2078 = vld [vmem:[%s166 + $0xc4] sm:$0xff]
      %v2079 = vld [vmem:[%s166 + $0xcc] sm:$0xff]
      %v2080 = vld [vmem:[%s166 + $0xd4] sm:$0xff]
      %v2081 = vld [vmem:[%s166 + $0xdc] sm:$0xff]
      %v2082 = vld [vmem:[%s166 + $0xe4] sm:$0xff]
      %v2083 = vld [vmem:[%s166 + $0xec] sm:$0xff]
      %v2084 = vld [vmem:[%s166 + $0xf4] sm:$0xff]
      %v2085 = vld [vmem:[%s166 + $0xfc] sm:$0xff]
      %v2086 = vld [vmem:[%s166 + $0x104] sm:$0xff]
      %v2087 = vld [vmem:[%s166 + $0x10c] sm:$0xff]
      %v2088 = vld [vmem:[%s166 + $0x114] sm:$0xff]
      %v2089 = vld [vmem:[%s166 + $0x11c] sm:$0xff]
      %v2090 = vld [vmem:[%s166 + $0x124] sm:$0xff]
      %v2091 = vld [vmem:[%s166 + $0x12c] sm:$0xff]
      %v2092 = vld [vmem:[%s166 + $0x134] sm:$0xff]
      %v2093 = vld [vmem:[%s166 + $0x13c] sm:$0xff]
      %v2094 = vpack.c.bf16 %v2059, %v2058
      %v2095 = vpack.c.bf16 %v2061, %v2060
      %v2096 = vpack.c.bf16 %v2063, %v2062
      %v2097 = vpack.c.bf16 %v2065, %v2064
      %v2098 = vpack.c.bf16 %v2067, %v2066
      %v2099 = vpack.c.bf16 %v2069, %v2068
      %v2100 = vpack.c.bf16 %v2071, %v2070
      %v2101 = vpack.c.bf16 %v2073, %v2072
      %v2102 = vpack.c.bf16 %v2075, %v2074
      %v2103 = vpack.c.bf16 %v2077, %v2076
      %v2104 = vpack.c.bf16 %v2079, %v2078
      %v2105 = vpack.c.bf16 %v2081, %v2080
      %v2106 = vpack.c.bf16 %v2083, %v2082
      %v2107 = vpack.c.bf16 %v2085, %v2084
      %v2108 = vpack.c.bf16 %v2087, %v2086
      %v2109 = vpack.c.bf16 %v2089, %v2088
      %v2110 = vpack.c.bf16 %v2091, %v2090
      %v2111 = vpack.c.bf16 %v2093, %v2092
      %s2112 = scalar_lea.vmem %s1, 12
      %v2113 = vld [vmem:[%s2112] sm:$0x3]
      %v2115 = vsel %vm284, %v2094, 0
      %v2118 = vsel %vm284, %v2095, 0
      %v2121 = vsel %vm284, %v2096, 0
      %v2124 = vsel %vm284, %v2097, 0
      %v2127 = vsel %vm284, %v2098, 0
      %v2130 = vsel %vm284, %v2099, 0
      %v2133 = vsel %vm284, %v2100, 0
      %v2136 = vsel %vm284, %v2101, 0
      %v2139 = vsel %vm284, %v2102, 0
      %v2142 = vsel %vm284, %v2103, 0
      %v2145 = vsel %vm284, %v2104, 0
      %v2148 = vsel %vm284, %v2105, 0
      %v2151 = vsel %vm284, %v2106, 0
      %v2154 = vsel %vm284, %v2107, 0
      %v2157 = vsel %vm284, %v2108, 0
      %v2160 = vsel %vm284, %v2109, 0
      %v2163 = vsel %vm284, %v2110, 0
      %v2166 = vsel %vm284, %v2111, 0
      %v2169 = vsel %vm339, %v2113, 0
      %2171 = vmatprep.subr.bf16.mxu0 0
      %2172 = vmatpush1.bf16.msra.mxu0 %v2169
      %2173 = vmatprep.subr.bf16.mxu0 0
      %2174 = vmatpush1.bf16.msra.mxu0 0
      %2175 = vmatprep.subr.bf16.mxu0 0
      %2176 = vmatpush1.bf16.msra.mxu0 0
      %2177 = vmatprep.subr.bf16.mxu0 0
      %2178 = vmatpush1.bf16.msra.mxu0 0
      %2179 = vmatprep.subr.bf16.mxu0 0
      %2180 = vmatpush1.bf16.msra.mxu0 0
      %2181 = vmatprep.subr.bf16.mxu0 0
      %2182 = vmatpush1.bf16.msra.mxu0 0
      %2183 = vmatprep.subr.bf16.mxu0 0
      %2184 = vmatpush1.bf16.msra.mxu0 0
      %2185 = vmatprep.subr.bf16.mxu0 0
      %2186 = vmatpush1.bf16.msra.mxu0 0
      %2187 = vmatprep.subr.bf16.mxu0 0
      %2188 = vmatpush1.bf16.msra.mxu0 0
      %2189 = vmatprep.subr.bf16.mxu0 0
      %2190 = vmatpush1.bf16.msra.mxu0 0
      %2191 = vmatprep.subr.bf16.mxu0 0
      %2192 = vmatpush1.bf16.msra.mxu0 0
      %2193 = vmatprep.subr.bf16.mxu0 0
      %2194 = vmatpush1.bf16.msra.mxu0 0
      %2195 = vmatprep.subr.bf16.mxu0 0
      %2196 = vmatpush1.bf16.msra.mxu0 0
      %2197 = vmatprep.subr.bf16.mxu0 0
      %2198 = vmatpush1.bf16.msra.mxu0 0
      %2199 = vmatprep.subr.bf16.mxu0 0
      %2200 = vmatpush1.bf16.msra.mxu0 0
      %2201 = vmatprep.subr.bf16.mxu0 0
      %2202 = vmatpush1.bf16.msra.mxu0 0
      %2203 = vmatprep.mubr.bf16.mxu0 0
      %2204 = vmatmul.mubr.bf16.gmra.mrb[0].mxu0 %v2115
      %v2205 = vpop.f32.mrb[0].mxu0
      %v2206 = vadd.f32 0.0, %v2205
      %v2207 = vpop.f32.mrb[0].mxu0
      %v2208 = vpop.f32.mrb[0].mxu0
      %v2209 = vadd.f32 0.0, %v2208
      %v2210 = vpop.f32.mrb[0].mxu0
      %2211 = vmatprep.mubr.bf16.mxu0 0
      %2212 = vmatmul.mubr.bf16.gmra.mrb[0].mxu0 %v2118
      %v2213 = vpop.f32.mrb[0].mxu0
      %v2214 = vadd.f32 0.0, %v2213
      %v2215 = vpop.f32.mrb[0].mxu0
      %v2216 = vpop.f32.mrb[0].mxu0
      %v2217 = vadd.f32 0.0, %v2216
      %v2218 = vpop.f32.mrb[0].mxu0
      %2219 = vmatprep.mubr.bf16.mxu0 0
      %2220 = vmatmul.mubr.bf16.gmra.mrb[0].mxu0 %v2121
      %v2221 = vpop.f32.mrb[0].mxu0
      %v2222 = vadd.f32 0.0, %v2221
      %v2223 = vpop.f32.mrb[0].mxu0
      %v2224 = vpop.f32.mrb[0].mxu0
      %v2225 = vadd.f32 0.0, %v2224
      %v2226 = vpop.f32.mrb[0].mxu0
      %2227 = vmatprep.mubr.bf16.mxu0 0
      %2228 = vmatmul.mubr.bf16.gmra.mrb[0].mxu0 %v2124
      %v2229 = vpop.f32.mrb[0].mxu0
      %v2230 = vadd.f32 0.0, %v2229
      %v2231 = vpop.f32.mrb[0].mxu0
      %v2232 = vpop.f32.mrb[0].mxu0
      %v2233 = vadd.f32 0.0, %v2232
      %v2234 = vpop.f32.mrb[0].mxu0
      %2235 = vmatprep.mubr.bf16.mxu0 0
      %2236 = vmatmul.mubr.bf16.gmra.mrb[0].mxu0 %v2127
      %v2237 = vpop.f32.mrb[0].mxu0
      %v2238 = vadd.f32 0.0, %v2237
      %v2239 = vpop.f32.mrb[0].mxu0
      %v2240 = vpop.f32.mrb[0].mxu0
      %v2241 = vadd.f32 0.0, %v2240
      %v2242 = vpop.f32.mrb[0].mxu0
      %2243 = vmatprep.mubr.bf16.mxu0 0
      %2244 = vmatmul.mubr.bf16.gmra.mrb[0].mxu0 %v2130
      %v2245 = vpop.f32.mrb[0].mxu0
      %v2246 = vadd.f32 0.0, %v2245
      %v2247 = vpop.f32.mrb[0].mxu0
      %v2248 = vpop.f32.mrb[0].mxu0
      %v2249 = vadd.f32 0.0, %v2248
      %v2250 = vpop.f32.mrb[0].mxu0
      %2251 = vmatprep.mubr.bf16.mxu0 0
      %2252 = vmatmul.mubr.bf16.gmra.mrb[0].mxu0 %v2133
      %v2253 = vpop.f32.mrb[0].mxu0
      %v2254 = vadd.f32 0.0, %v2253
      %v2255 = vpop.f32.mrb[0].mxu0
      %v2256 = vpop.f32.mrb[0].mxu0
      %v2257 = vadd.f32 0.0, %v2256
      %v2258 = vpop.f32.mrb[0].mxu0
      %2259 = vmatprep.mubr.bf16.mxu0 0
      %2260 = vmatmul.mubr.bf16.gmra.mrb[0].mxu0 %v2136
      %v2261 = vpop.f32.mrb[0].mxu0
      %v2262 = vadd.f32 0.0, %v2261
      %v2263 = vpop.f32.mrb[0].mxu0
      %v2264 = vpop.f32.mrb[0].mxu0
      %v2265 = vadd.f32 0.0, %v2264
      %v2266 = vpop.f32.mrb[0].mxu0
      %2267 = vmatprep.mubr.bf16.mxu0 0
      %2268 = vmatmul.mubr.bf16.gmra.mrb[0].mxu0 %v2139
      %v2269 = vpop.f32.mrb[0].mxu0
      %v2270 = vadd.f32 0.0, %v2269
      %v2271 = vpop.f32.mrb[0].mxu0
      %v2272 = vpop.f32.mrb[0].mxu0
      %v2273 = vadd.f32 0.0, %v2272
      %v2274 = vpop.f32.mrb[0].mxu0
      %2275 = vmatprep.mubr.bf16.mxu0 0
      %2276 = vmatmul.mubr.bf16.gmra.mrb[0].mxu0 %v2142
      %v2277 = vpop.f32.mrb[0].mxu0
      %v2278 = vadd.f32 0.0, %v2277
      %v2279 = vpop.f32.mrb[0].mxu0
      %v2280 = vpop.f32.mrb[0].mxu0
      %v2281 = vadd.f32 0.0, %v2280
      %v2282 = vpop.f32.mrb[0].mxu0
      %2283 = vmatprep.mubr.bf16.mxu0 0
      %2284 = vmatmul.mubr.bf16.gmra.mrb[0].mxu0 %v2145
      %v2285 = vpop.f32.mrb[0].mxu0
      %v2286 = vadd.f32 0.0, %v2285
      %v2287 = vpop.f32.mrb[0].mxu0
      %v2288 = vpop.f32.mrb[0].mxu0
      %v2289 = vadd.f32 0.0, %v2288
      %v2290 = vpop.f32.mrb[0].mxu0
      %2291 = vmatprep.mubr.bf16.mxu0 0
      %2292 = vmatmul.mubr.bf16.gmra.mrb[0].mxu0 %v2148
      %v2293 = vpop.f32.mrb[0].mxu0
      %v2294 = vadd.f32 0.0, %v2293
      %v2295 = vpop.f32.mrb[0].mxu0
      %v2296 = vpop.f32.mrb[0].mxu0
      %v2297 = vadd.f32 0.0, %v2296
      %v2298 = vpop.f32.mrb[0].mxu0
      %2299 = vmatprep.mubr.bf16.mxu0 0
      %2300 = vmatmul.mubr.bf16.gmra.mrb[0].mxu0 %v2151
      %v2301 = vpop.f32.mrb[0].mxu0
      %v2302 = vadd.f32 0.0, %v2301
      %v2303 = vpop.f32.mrb[0].mxu0
      %v2304 = vpop.f32.mrb[0].mxu0
      %v2305 = vadd.f32 0.0, %v2304
      %v2306 = vpop.f32.mrb[0].mxu0
      %2307 = vmatprep.mubr.bf16.mxu0 0
      %2308 = vmatmul.mubr.bf16.gmra.mrb[0].mxu0 %v2154
      %v2309 = vpop.f32.mrb[0].mxu0
      %v2310 = vadd.f32 0.0, %v2309
      %v2311 = vpop.f32.mrb[0].mxu0
      %v2312 = vpop.f32.mrb[0].mxu0
      %v2313 = vadd.f32 0.0, %v2312
      %v2314 = vpop.f32.mrb[0].mxu0
      %2315 = vmatprep.mubr.bf16.mxu0 0
      %2316 = vmatmul.mubr.bf16.gmra.mrb[0].mxu0 %v2157
      %v2317 = vpop.f32.mrb[0].mxu0
      %v2318 = vadd.f32 0.0, %v2317
      %v2319 = vpop.f32.mrb[0].mxu0
      %v2320 = vpop.f32.mrb[0].mxu0
      %v2321 = vadd.f32 0.0, %v2320
      %v2322 = vpop.f32.mrb[0].mxu0
      %2323 = vmatprep.mubr.bf16.mxu0 0
      %2324 = vmatmul.mubr.bf16.gmra.mrb[0].mxu0 %v2160
      %v2325 = vpop.f32.mrb[0].mxu0
      %v2326 = vadd.f32 0.0, %v2325
      %v2327 = vpop.f32.mrb[0].mxu0
      %v2328 = vpop.f32.mrb[0].mxu0
      %v2329 = vadd.f32 0.0, %v2328
      %v2330 = vpop.f32.mrb[0].mxu0
      %2331 = vmatprep.mubr.bf16.mxu0 0
      %2332 = vmatmul.mubr.bf16.gmra.mrb[0].mxu0 %v2163
      %v2333 = vpop.f32.mrb[0].mxu0
      %v2334 = vadd.f32 0.0, %v2333
      %v2335 = vpop.f32.mrb[0].mxu0
      %v2336 = vpop.f32.mrb[0].mxu0
      %v2337 = vadd.f32 0.0, %v2336
      %v2338 = vpop.f32.mrb[0].mxu0
      %2339 = vmatprep.mubr.bf16.mxu0 0
      %2340 = vmatmul.mubr.bf16.gmra.mrb[0].mxu0 %v2166
      %v2341 = vpop.f32.mrb[0].mxu0
      %v2342 = vadd.f32 0.0, %v2341
      %v2343 = vpop.f32.mrb[0].mxu0
      %v2344 = vpop.f32.mrb[0].mxu0
      %v2345 = vadd.f32 0.0, %v2344
      %v2346 = vpop.f32.mrb[0].mxu0
      %2347 = vdwg.mxu0
      %v2348 = vadd.f32 %v2022, %v2206
      %v2349 = vadd.f32 %v2023, %v2209
      %v2350 = vadd.f32 %v2024, %v2214
      %v2351 = vadd.f32 %v2025, %v2217
      %v2352 = vadd.f32 %v2026, %v2222
      %v2353 = vadd.f32 %v2027, %v2225
      %v2354 = vadd.f32 %v2028, %v2230
      %v2355 = vadd.f32 %v2029, %v2233
      %v2356 = vadd.f32 %v2030, %v2238
      %v2357 = vadd.f32 %v2031, %v2241
      %v2358 = vadd.f32 %v2032, %v2246
      %v2359 = vadd.f32 %v2033, %v2249
      %v2360 = vadd.f32 %v2034, %v2254
      %v2361 = vadd.f32 %v2035, %v2257
      %v2362 = vadd.f32 %v2036, %v2262
      %v2363 = vadd.f32 %v2037, %v2265
      %v2364 = vadd.f32 %v2038, %v2270
      %v2365 = vadd.f32 %v2039, %v2273
      %v2366 = vadd.f32 %v2040, %v2278
      %v2367 = vadd.f32 %v2041, %v2281
      %v2368 = vadd.f32 %v2042, %v2286
      %v2369 = vadd.f32 %v2043, %v2289
      %v2370 = vadd.f32 %v2044, %v2294
      %v2371 = vadd.f32 %v2045, %v2297
      %v2372 = vadd.f32 %v2046, %v2302
      %v2373 = vadd.f32 %v2047, %v2305
      %v2374 = vadd.f32 %v2048, %v2310
      %v2375 = vadd.f32 %v2049, %v2313
      %v2376 = vadd.f32 %v2050, %v2318
      %v2377 = vadd.f32 %v2051, %v2321
      %v2378 = vadd.f32 %v2052, %v2326
      %v2379 = vadd.f32 %v2053, %v2329
      %v2380 = vadd.f32 %v2054, %v2334
      %v2381 = vadd.f32 %v2055, %v2337
      %v2382 = vadd.f32 %v2056, %v2342
      %v2383 = vadd.f32 %v2057, %v2345
      %v2384 = vld [vmem:[%s166 + $0x25] sm:$0xff]
      %v2385 = vld [vmem:[%s166 + $0x2d] sm:$0xff]
      %v2386 = vld [vmem:[%s166 + $0x35] sm:$0xff]
      %v2387 = vld [vmem:[%s166 + $0x3d] sm:$0xff]
      %v2388 = vld [vmem:[%s166 + $0x45] sm:$0xff]
      %v2389 = vld [vmem:[%s166 + $0x4d] sm:$0xff]
      %v2390 = vld [vmem:[%s166 + $0x55] sm:$0xff]
      %v2391 = vld [vmem:[%s166 + $0x5d] sm:$0xff]
      %v2392 = vld [vmem:[%s166 + $0x65] sm:$0xff]
      %v2393 = vld [vmem:[%s166 + $0x6d] sm:$0xff]
      %v2394 = vld [vmem:[%s166 + $0x75] sm:$0xff]
      %v2395 = vld [vmem:[%s166 + $0x7d] sm:$0xff]
      %v2396 = vld [vmem:[%s166 + $0x85] sm:$0xff]
      %v2397 = vld [vmem:[%s166 + $0x8d] sm:$0xff]
      %v2398 = vld [vmem:[%s166 + $0x95] sm:$0xff]
      %v2399 = vld [vmem:[%s166 + $0x9d] sm:$0xff]
      %v2400 = vld [vmem:[%s166 + $0xa5] sm:$0xff]
      %v2401 = vld [vmem:[%s166 + $0xad] sm:$0xff]
      %v2402 = vld [vmem:[%s166 + $0xb5] sm:$0xff]
      %v2403 = vld [vmem:[%s166 + $0xbd] sm:$0xff]
      %v2404 = vld [vmem:[%s166 + $0xc5] sm:$0xff]
      %v2405 = vld [vmem:[%s166 + $0xcd] sm:$0xff]
      %v2406 = vld [vmem:[%s166 + $0xd5] sm:$0xff]
      %v2407 = vld [vmem:[%s166 + $0xdd] sm:$0xff]
      %v2408 = vld [vmem:[%s166 + $0xe5] sm:$0xff]
      %v2409 = vld [vmem:[%s166 + $0xed] sm:$0xff]
      %v2410 = vld [vmem:[%s166 + $0xf5] sm:$0xff]
      %v2411 = vld [vmem:[%s166 + $0xfd] sm:$0xff]
      %v2412 = vld [vmem:[%s166 + $0x105] sm:$0xff]
      %v2413 = vld [vmem:[%s166 + $0x10d] sm:$0xff]
      %v2414 = vld [vmem:[%s166 + $0x115] sm:$0xff]
      %v2415 = vld [vmem:[%s166 + $0x11d] sm:$0xff]
      %v2416 = vld [vmem:[%s166 + $0x125] sm:$0xff]
      %v2417 = vld [vmem:[%s166 + $0x12d] sm:$0xff]
      %v2418 = vld [vmem:[%s166 + $0x135] sm:$0xff]
      %v2419 = vld [vmem:[%s166 + $0x13d] sm:$0xff]
      %v2420 = vpack.c.bf16 %v2385, %v2384
      %v2421 = vpack.c.bf16 %v2387, %v2386
      %v2422 = vpack.c.bf16 %v2389, %v2388
      %v2423 = vpack.c.bf16 %v2391, %v2390
      %v2424 = vpack.c.bf16 %v2393, %v2392
      %v2425 = vpack.c.bf16 %v2395, %v2394
      %v2426 = vpack.c.bf16 %v2397, %v2396
      %v2427 = vpack.c.bf16 %v2399, %v2398
      %v2428 = vpack.c.bf16 %v2401, %v2400
      %v2429 = vpack.c.bf16 %v2403, %v2402
      %v2430 = vpack.c.bf16 %v2405, %v2404
      %v2431 = vpack.c.bf16 %v2407, %v2406
      %v2432 = vpack.c.bf16 %v2409, %v2408
      %v2433 = vpack.c.bf16 %v2411, %v2410
      %v2434 = vpack.c.bf16 %v2413, %v2412
      %v2435 = vpack.c.bf16 %v2415, %v2414
      %v2436 = vpack.c.bf16 %v2417, %v2416
      %v2437 = vpack.c.bf16 %v2419, %v2418
      %s2438 = scalar_lea.vmem %s1, 14
      %v2439 = vld [vmem:[%s2438] sm:$0x3]
      %v2441 = vsel %vm284, %v2420, 0
      %v2444 = vsel %vm284, %v2421, 0
      %v2447 = vsel %vm284, %v2422, 0
      %v2450 = vsel %vm284, %v2423, 0
      %v2453 = vsel %vm284, %v2424, 0
      %v2456 = vsel %vm284, %v2425, 0
      %v2459 = vsel %vm284, %v2426, 0
      %v2462 = vsel %vm284, %v2427, 0
      %v2465 = vsel %vm284, %v2428, 0
      %v2468 = vsel %vm284, %v2429, 0
      %v2471 = vsel %vm284, %v2430, 0
      %v2474 = vsel %vm284, %v2431, 0
      %v2477 = vsel %vm284, %v2432, 0
      %v2480 = vsel %vm284, %v2433, 0
      %v2483 = vsel %vm284, %v2434, 0
      %v2486 = vsel %vm284, %v2435, 0
      %v2489 = vsel %vm284, %v2436, 0
      %v2492 = vsel %vm284, %v2437, 0
      %v2495 = vsel %vm339, %v2439, 0
      %2497 = vmatprep.subr.bf16.mxu0 0
      %2498 = vmatpush1.bf16.msra.mxu0 %v2495
      %2499 = vmatprep.subr.bf16.mxu0 0
      %2500 = vmatpush1.bf16.msra.mxu0 0
      %2501 = vmatprep.subr.bf16.mxu0 0
      %2502 = vmatpush1.bf16.msra.mxu0 0
      %2503 = vmatprep.subr.bf16.mxu0 0
      %2504 = vmatpush1.bf16.msra.mxu0 0
      %2505 = vmatprep.subr.bf16.mxu0 0
      %2506 = vmatpush1.bf16.msra.mxu0 0
      %2507 = vmatprep.subr.bf16.mxu0 0
      %2508 = vmatpush1.bf16.msra.mxu0 0
      %2509 = vmatprep.subr.bf16.mxu0 0
      %2510 = vmatpush1.bf16.msra.mxu0 0
      %2511 = vmatprep.subr.bf16.mxu0 0
      %2512 = vmatpush1.bf16.msra.mxu0 0
      %2513 = vmatprep.subr.bf16.mxu0 0
      %2514 = vmatpush1.bf16.msra.mxu0 0
      %2515 = vmatprep.subr.bf16.mxu0 0
      %2516 = vmatpush1.bf16.msra.mxu0 0
      %2517 = vmatprep.subr.bf16.mxu0 0
      %2518 = vmatpush1.bf16.msra.mxu0 0
      %2519 = vmatprep.subr.bf16.mxu0 0
      %2520 = vmatpush1.bf16.msra.mxu0 0
      %2521 = vmatprep.subr.bf16.mxu0 0
      %2522 = vmatpush1.bf16.msra.mxu0 0
      %2523 = vmatprep.subr.bf16.mxu0 0
      %2524 = vmatpush1.bf16.msra.mxu0 0
      %2525 = vmatprep.subr.bf16.mxu0 0
      %2526 = vmatpush1.bf16.msra.mxu0 0
      %2527 = vmatprep.subr.bf16.mxu0 0
      %2528 = vmatpush1.bf16.msra.mxu0 0
      %2529 = vmatprep.mubr.bf16.mxu0 0
      %2530 = vmatmul.mubr.bf16.gmra.mrb[0].mxu0 %v2441
      %v2531 = vpop.f32.mrb[0].mxu0
      %v2532 = vadd.f32 0.0, %v2531
      %v2533 = vpop.f32.mrb[0].mxu0
      %v2534 = vpop.f32.mrb[0].mxu0
      %v2535 = vadd.f32 0.0, %v2534
      %v2536 = vpop.f32.mrb[0].mxu0
      %2537 = vmatprep.mubr.bf16.mxu0 0
      %2538 = vmatmul.mubr.bf16.gmra.mrb[0].mxu0 %v2444
      %v2539 = vpop.f32.mrb[0].mxu0
      %v2540 = vadd.f32 0.0, %v2539
      %v2541 = vpop.f32.mrb[0].mxu0
      %v2542 = vpop.f32.mrb[0].mxu0
      %v2543 = vadd.f32 0.0, %v2542
      %v2544 = vpop.f32.mrb[0].mxu0
      %2545 = vmatprep.mubr.bf16.mxu0 0
      %2546 = vmatmul.mubr.bf16.gmra.mrb[0].mxu0 %v2447
      %v2547 = vpop.f32.mrb[0].mxu0
      %v2548 = vadd.f32 0.0, %v2547
      %v2549 = vpop.f32.mrb[0].mxu0
      %v2550 = vpop.f32.mrb[0].mxu0
      %v2551 = vadd.f32 0.0, %v2550
      %v2552 = vpop.f32.mrb[0].mxu0
      %2553 = vmatprep.mubr.bf16.mxu0 0
      %2554 = vmatmul.mubr.bf16.gmra.mrb[0].mxu0 %v2450
      %v2555 = vpop.f32.mrb[0].mxu0
      %v2556 = vadd.f32 0.0, %v2555
      %v2557 = vpop.f32.mrb[0].mxu0
      %v2558 = vpop.f32.mrb[0].mxu0
      %v2559 = vadd.f32 0.0, %v2558
      %v2560 = vpop.f32.mrb[0].mxu0
      %2561 = vmatprep.mubr.bf16.mxu0 0
      %2562 = vmatmul.mubr.bf16.gmra.mrb[0].mxu0 %v2453
      %v2563 = vpop.f32.mrb[0].mxu0
      %v2564 = vadd.f32 0.0, %v2563
      %v2565 = vpop.f32.mrb[0].mxu0
      %v2566 = vpop.f32.mrb[0].mxu0
      %v2567 = vadd.f32 0.0, %v2566
      %v2568 = vpop.f32.mrb[0].mxu0
      %2569 = vmatprep.mubr.bf16.mxu0 0
      %2570 = vmatmul.mubr.bf16.gmra.mrb[0].mxu0 %v2456
      %v2571 = vpop.f32.mrb[0].mxu0
      %v2572 = vadd.f32 0.0, %v2571
      %v2573 = vpop.f32.mrb[0].mxu0
      %v2574 = vpop.f32.mrb[0].mxu0
      %v2575 = vadd.f32 0.0, %v2574
      %v2576 = vpop.f32.mrb[0].mxu0
      %2577 = vmatprep.mubr.bf16.mxu0 0
      %2578 = vmatmul.mubr.bf16.gmra.mrb[0].mxu0 %v2459
      %v2579 = vpop.f32.mrb[0].mxu0
      %v2580 = vadd.f32 0.0, %v2579
      %v2581 = vpop.f32.mrb[0].mxu0
      %v2582 = vpop.f32.mrb[0].mxu0
      %v2583 = vadd.f32 0.0, %v2582
      %v2584 = vpop.f32.mrb[0].mxu0
      %2585 = vmatprep.mubr.bf16.mxu0 0
      %2586 = vmatmul.mubr.bf16.gmra.mrb[0].mxu0 %v2462
      %v2587 = vpop.f32.mrb[0].mxu0
      %v2588 = vadd.f32 0.0, %v2587
      %v2589 = vpop.f32.mrb[0].mxu0
      %v2590 = vpop.f32.mrb[0].mxu0
      %v2591 = vadd.f32 0.0, %v2590
      %v2592 = vpop.f32.mrb[0].mxu0
      %2593 = vmatprep.mubr.bf16.mxu0 0
      %2594 = vmatmul.mubr.bf16.gmra.mrb[0].mxu0 %v2465
      %v2595 = vpop.f32.mrb[0].mxu0
      %v2596 = vadd.f32 0.0, %v2595
      %v2597 = vpop.f32.mrb[0].mxu0
      %v2598 = vpop.f32.mrb[0].mxu0
      %v2599 = vadd.f32 0.0, %v2598
      %v2600 = vpop.f32.mrb[0].mxu0
      %2601 = vmatprep.mubr.bf16.mxu0 0
      %2602 = vmatmul.mubr.bf16.gmra.mrb[0].mxu0 %v2468
      %v2603 = vpop.f32.mrb[0].mxu0
      %v2604 = vadd.f32 0.0, %v2603
      %v2605 = vpop.f32.mrb[0].mxu0
      %v2606 = vpop.f32.mrb[0].mxu0
      %v2607 = vadd.f32 0.0, %v2606
      %v2608 = vpop.f32.mrb[0].mxu0
      %2609 = vmatprep.mubr.bf16.mxu0 0
      %2610 = vmatmul.mubr.bf16.gmra.mrb[0].mxu0 %v2471
      %v2611 = vpop.f32.mrb[0].mxu0
      %v2612 = vadd.f32 0.0, %v2611
      %v2613 = vpop.f32.mrb[0].mxu0
      %v2614 = vpop.f32.mrb[0].mxu0
      %v2615 = vadd.f32 0.0, %v2614
      %v2616 = vpop.f32.mrb[0].mxu0
      %2617 = vmatprep.mubr.bf16.mxu0 0
      %2618 = vmatmul.mubr.bf16.gmra.mrb[0].mxu0 %v2474
      %v2619 = vpop.f32.mrb[0].mxu0
      %v2620 = vadd.f32 0.0, %v2619
      %v2621 = vpop.f32.mrb[0].mxu0
      %v2622 = vpop.f32.mrb[0].mxu0
      %v2623 = vadd.f32 0.0, %v2622
      %v2624 = vpop.f32.mrb[0].mxu0
      %2625 = vmatprep.mubr.bf16.mxu0 0
      %2626 = vmatmul.mubr.bf16.gmra.mrb[0].mxu0 %v2477
      %v2627 = vpop.f32.mrb[0].mxu0
      %v2628 = vadd.f32 0.0, %v2627
      %v2629 = vpop.f32.mrb[0].mxu0
      %v2630 = vpop.f32.mrb[0].mxu0
      %v2631 = vadd.f32 0.0, %v2630
      %v2632 = vpop.f32.mrb[0].mxu0
      %2633 = vmatprep.mubr.bf16.mxu0 0
      %2634 = vmatmul.mubr.bf16.gmra.mrb[0].mxu0 %v2480
      %v2635 = vpop.f32.mrb[0].mxu0
      %v2636 = vadd.f32 0.0, %v2635
      %v2637 = vpop.f32.mrb[0].mxu0
      %v2638 = vpop.f32.mrb[0].mxu0
      %v2639 = vadd.f32 0.0, %v2638
      %v2640 = vpop.f32.mrb[0].mxu0
      %2641 = vmatprep.mubr.bf16.mxu0 0
      %2642 = vmatmul.mubr.bf16.gmra.mrb[0].mxu0 %v2483
      %v2643 = vpop.f32.mrb[0].mxu0
      %v2644 = vadd.f32 0.0, %v2643
      %v2645 = vpop.f32.mrb[0].mxu0
      %v2646 = vpop.f32.mrb[0].mxu0
      %v2647 = vadd.f32 0.0, %v2646
      %v2648 = vpop.f32.mrb[0].mxu0
      %2649 = vmatprep.mubr.bf16.mxu0 0
      %2650 = vmatmul.mubr.bf16.gmra.mrb[0].mxu0 %v2486
      %v2651 = vpop.f32.mrb[0].mxu0
      %v2652 = vadd.f32 0.0, %v2651
      %v2653 = vpop.f32.mrb[0].mxu0
      %v2654 = vpop.f32.mrb[0].mxu0
      %v2655 = vadd.f32 0.0, %v2654
      %v2656 = vpop.f32.mrb[0].mxu0
      %2657 = vmatprep.mubr.bf16.mxu0 0
      %2658 = vmatmul.mubr.bf16.gmra.mrb[0].mxu0 %v2489
      %v2659 = vpop.f32.mrb[0].mxu0
      %v2660 = vadd.f32 0.0, %v2659
      %v2661 = vpop.f32.mrb[0].mxu0
      %v2662 = vpop.f32.mrb[0].mxu0
      %v2663 = vadd.f32 0.0, %v2662
      %v2664 = vpop.f32.mrb[0].mxu0
      %2665 = vmatprep.mubr.bf16.mxu0 0
      %2666 = vmatmul.mubr.bf16.gmra.mrb[0].mxu0 %v2492
      %v2667 = vpop.f32.mrb[0].mxu0
      %v2668 = vadd.f32 0.0, %v2667
      %v2669 = vpop.f32.mrb[0].mxu0
      %v2670 = vpop.f32.mrb[0].mxu0
      %v2671 = vadd.f32 0.0, %v2670
      %v2672 = vpop.f32.mrb[0].mxu0
      %2673 = vdwg.mxu0
      %v2674 = vadd.f32 %v2348, %v2532
      %v2675 = vadd.f32 %v2349, %v2535
      %v2676 = vadd.f32 %v2350, %v2540
      %v2677 = vadd.f32 %v2351, %v2543
      %v2678 = vadd.f32 %v2352, %v2548
      %v2679 = vadd.f32 %v2353, %v2551
      %v2680 = vadd.f32 %v2354, %v2556
      %v2681 = vadd.f32 %v2355, %v2559
      %v2682 = vadd.f32 %v2356, %v2564
      %v2683 = vadd.f32 %v2357, %v2567
      %v2684 = vadd.f32 %v2358, %v2572
      %v2685 = vadd.f32 %v2359, %v2575
      %v2686 = vadd.f32 %v2360, %v2580
      %v2687 = vadd.f32 %v2361, %v2583
      %v2688 = vadd.f32 %v2362, %v2588
      %v2689 = vadd.f32 %v2363, %v2591
      %v2690 = vadd.f32 %v2364, %v2596
      %v2691 = vadd.f32 %v2365, %v2599
      %v2692 = vadd.f32 %v2366, %v2604
      %v2693 = vadd.f32 %v2367, %v2607
      %v2694 = vadd.f32 %v2368, %v2612
      %v2695 = vadd.f32 %v2369, %v2615
      %v2696 = vadd.f32 %v2370, %v2620
      %v2697 = vadd.f32 %v2371, %v2623
      %v2698 = vadd.f32 %v2372, %v2628
      %v2699 = vadd.f32 %v2373, %v2631
      %v2700 = vadd.f32 %v2374, %v2636
      %v2701 = vadd.f32 %v2375, %v2639
      %v2702 = vadd.f32 %v2376, %v2644
      %v2703 = vadd.f32 %v2377, %v2647
      %v2704 = vadd.f32 %v2378, %v2652
      %v2705 = vadd.f32 %v2379, %v2655
      %v2706 = vadd.f32 %v2380, %v2660
      %v2707 = vadd.f32 %v2381, %v2663
      %v2708 = vadd.f32 %v2382, %v2668
      %v2709 = vadd.f32 %v2383, %v2671
      %v2710 = vld [vmem:[%s166 + $0x26] sm:$0xff]
      %v2711 = vld [vmem:[%s166 + $0x2e] sm:$0xff]
      %v2712 = vld [vmem:[%s166 + $0x36] sm:$0xff]
      %v2713 = vld [vmem:[%s166 + $0x3e] sm:$0xff]
      %v2714 = vld [vmem:[%s166 + $0x46] sm:$0xff]
      %v2715 = vld [vmem:[%s166 + $0x4e] sm:$0xff]
      %v2716 = vld [vmem:[%s166 + $0x56] sm:$0xff]
      %v2717 = vld [vmem:[%s166 + $0x5e] sm:$0xff]
      %v2718 = vld [vmem:[%s166 + $0x66] sm:$0xff]
      %v2719 = vld [vmem:[%s166 + $0x6e] sm:$0xff]
      %v2720 = vld [vmem:[%s166 + $0x76] sm:$0xff]
      %v2721 = vld [vmem:[%s166 + $0x7e] sm:$0xff]
      %v2722 = vld [vmem:[%s166 + $0x86] sm:$0xff]
      %v2723 = vld [vmem:[%s166 + $0x8e] sm:$0xff]
      %v2724 = vld [vmem:[%s166 + $0x96] sm:$0xff]
      %v2725 = vld [vmem:[%s166 + $0x9e] sm:$0xff]
      %v2726 = vld [vmem:[%s166 + $0xa6] sm:$0xff]
      %v2727 = vld [vmem:[%s166 + $0xae] sm:$0xff]
      %v2728 = vld [vmem:[%s166 + $0xb6] sm:$0xff]
      %v2729 = vld [vmem:[%s166 + $0xbe] sm:$0xff]
      %v2730 = vld [vmem:[%s166 + $0xc6] sm:$0xff]
      %v2731 = vld [vmem:[%s166 + $0xce] sm:$0xff]
      %v2732 = vld [vmem:[%s166 + $0xd6] sm:$0xff]
      %v2733 = vld [vmem:[%s166 + $0xde] sm:$0xff]
      %v2734 = vld [vmem:[%s166 + $0xe6] sm:$0xff]
      %v2735 = vld [vmem:[%s166 + $0xee] sm:$0xff]
      %v2736 = vld [vmem:[%s166 + $0xf6] sm:$0xff]
      %v2737 = vld [vmem:[%s166 + $0xfe] sm:$0xff]
      %v2738 = vld [vmem:[%s166 + $0x106] sm:$0xff]
      %v2739 = vld [vmem:[%s166 + $0x10e] sm:$0xff]
      %v2740 = vld [vmem:[%s166 + $0x116] sm:$0xff]
      %v2741 = vld [vmem:[%s166 + $0x11e] sm:$0xff]
      %v2742 = vld [vmem:[%s166 + $0x126] sm:$0xff]
      %v2743 = vld [vmem:[%s166 + $0x12e] sm:$0xff]
      %v2744 = vld [vmem:[%s166 + $0x136] sm:$0xff]
      %v2745 = vld [vmem:[%s166 + $0x13e] sm:$0xff]
      %v2746 = vpack.c.bf16 %v2711, %v2710
      %v2747 = vpack.c.bf16 %v2713, %v2712
      %v2748 = vpack.c.bf16 %v2715, %v2714
      %v2749 = vpack.c.bf16 %v2717, %v2716
      %v2750 = vpack.c.bf16 %v2719, %v2718
      %v2751 = vpack.c.bf16 %v2721, %v2720
      %v2752 = vpack.c.bf16 %v2723, %v2722
      %v2753 = vpack.c.bf16 %v2725, %v2724
      %v2754 = vpack.c.bf16 %v2727, %v2726
      %v2755 = vpack.c.bf16 %v2729, %v2728
      %v2756 = vpack.c.bf16 %v2731, %v2730
      %v2757 = vpack.c.bf16 %v2733, %v2732
      %v2758 = vpack.c.bf16 %v2735, %v2734
      %v2759 = vpack.c.bf16 %v2737, %v2736
      %v2760 = vpack.c.bf16 %v2739, %v2738
      %v2761 = vpack.c.bf16 %v2741, %v2740
      %v2762 = vpack.c.bf16 %v2743, %v2742
      %v2763 = vpack.c.bf16 %v2745, %v2744
      %s2764 = scalar_lea.vmem %s1, 16
      %v2765 = vld [vmem:[%s2764] sm:$0x3]
      %v2767 = vsel %vm284, %v2746, 0
      %v2770 = vsel %vm284, %v2747, 0
      %v2773 = vsel %vm284, %v2748, 0
      %v2776 = vsel %vm284, %v2749, 0
      %v2779 = vsel %vm284, %v2750, 0
      %v2782 = vsel %vm284, %v2751, 0
      %v2785 = vsel %vm284, %v2752, 0
      %v2788 = vsel %vm284, %v2753, 0
      %v2791 = vsel %vm284, %v2754, 0
      %v2794 = vsel %vm284, %v2755, 0
      %v2797 = vsel %vm284, %v2756, 0
      %v2800 = vsel %vm284, %v2757, 0
      %v2803 = vsel %vm284, %v2758, 0
      %v2806 = vsel %vm284, %v2759, 0
      %v2809 = vsel %vm284, %v2760, 0
      %v2812 = vsel %vm284, %v2761, 0
      %v2815 = vsel %vm284, %v2762, 0
      %v2818 = vsel %vm284, %v2763, 0
      %v2821 = vsel %vm339, %v2765, 0
      %2823 = vmatprep.subr.bf16.mxu0 0
      %2824 = vmatpush1.bf16.msra.mxu0 %v2821
      %2825 = vmatprep.subr.bf16.mxu0 0
      %2826 = vmatpush1.bf16.msra.mxu0 0
      %2827 = vmatprep.subr.bf16.mxu0 0
      %2828 = vmatpush1.bf16.msra.mxu0 0
      %2829 = vmatprep.subr.bf16.mxu0 0
      %2830 = vmatpush1.bf16.msra.mxu0 0
      %2831 = vmatprep.subr.bf16.mxu0 0
      %2832 = vmatpush1.bf16.msra.mxu0 0
      %2833 = vmatprep.subr.bf16.mxu0 0
      %2834 = vmatpush1.bf16.msra.mxu0 0
      %2835 = vmatprep.subr.bf16.mxu0 0
      %2836 = vmatpush1.bf16.msra.mxu0 0
      %2837 = vmatprep.subr.bf16.mxu0 0
      %2838 = vmatpush1.bf16.msra.mxu0 0
      %2839 = vmatprep.subr.bf16.mxu0 0
      %2840 = vmatpush1.bf16.msra.mxu0 0
      %2841 = vmatprep.subr.bf16.mxu0 0
      %2842 = vmatpush1.bf16.msra.mxu0 0
      %2843 = vmatprep.subr.bf16.mxu0 0
      %2844 = vmatpush1.bf16.msra.mxu0 0
      %2845 = vmatprep.subr.bf16.mxu0 0
      %2846 = vmatpush1.bf16.msra.mxu0 0
      %2847 = vmatprep.subr.bf16.mxu0 0
      %2848 = vmatpush1.bf16.msra.mxu0 0
      %2849 = vmatprep.subr.bf16.mxu0 0
      %2850 = vmatpush1.bf16.msra.mxu0 0
      %2851 = vmatprep.subr.bf16.mxu0 0
      %2852 = vmatpush1.bf16.msra.mxu0 0
      %2853 = vmatprep.subr.bf16.mxu0 0
      %2854 = vmatpush1.bf16.msra.mxu0 0
      %2855 = vmatprep.mubr.bf16.mxu0 0
      %2856 = vmatmul.mubr.bf16.gmra.mrb[0].mxu0 %v2767
      %v2857 = vpop.f32.mrb[0].mxu0
      %v2858 = vadd.f32 0.0, %v2857
      %v2859 = vpop.f32.mrb[0].mxu0
      %v2860 = vpop.f32.mrb[0].mxu0
      %v2861 = vadd.f32 0.0, %v2860
      %v2862 = vpop.f32.mrb[0].mxu0
      %2863 = vmatprep.mubr.bf16.mxu0 0
      %2864 = vmatmul.mubr.bf16.gmra.mrb[0].mxu0 %v2770
      %v2865 = vpop.f32.mrb[0].mxu0
      %v2866 = vadd.f32 0.0, %v2865
      %v2867 = vpop.f32.mrb[0].mxu0
      %v2868 = vpop.f32.mrb[0].mxu0
      %v2869 = vadd.f32 0.0, %v2868
      %v2870 = vpop.f32.mrb[0].mxu0
      %2871 = vmatprep.mubr.bf16.mxu0 0
      %2872 = vmatmul.mubr.bf16.gmra.mrb[0].mxu0 %v2773
      %v2873 = vpop.f32.mrb[0].mxu0
      %v2874 = vadd.f32 0.0, %v2873
      %v2875 = vpop.f32.mrb[0].mxu0
      %v2876 = vpop.f32.mrb[0].mxu0
      %v2877 = vadd.f32 0.0, %v2876
      %v2878 = vpop.f32.mrb[0].mxu0
      %2879 = vmatprep.mubr.bf16.mxu0 0
      %2880 = vmatmul.mubr.bf16.gmra.mrb[0].mxu0 %v2776
      %v2881 = vpop.f32.mrb[0].mxu0
      %v2882 = vadd.f32 0.0, %v2881
      %v2883 = vpop.f32.mrb[0].mxu0
      %v2884 = vpop.f32.mrb[0].mxu0
      %v2885 = vadd.f32 0.0, %v2884
      %v2886 = vpop.f32.mrb[0].mxu0
      %2887 = vmatprep.mubr.bf16.mxu0 0
      %2888 = vmatmul.mubr.bf16.gmra.mrb[0].mxu0 %v2779
      %v2889 = vpop.f32.mrb[0].mxu0
      %v2890 = vadd.f32 0.0, %v2889
      %v2891 = vpop.f32.mrb[0].mxu0
      %v2892 = vpop.f32.mrb[0].mxu0
      %v2893 = vadd.f32 0.0, %v2892
      %v2894 = vpop.f32.mrb[0].mxu0
      %2895 = vmatprep.mubr.bf16.mxu0 0
      %2896 = vmatmul.mubr.bf16.gmra.mrb[0].mxu0 %v2782
      %v2897 = vpop.f32.mrb[0].mxu0
      %v2898 = vadd.f32 0.0, %v2897
      %v2899 = vpop.f32.mrb[0].mxu0
      %v2900 = vpop.f32.mrb[0].mxu0
      %v2901 = vadd.f32 0.0, %v2900
      %v2902 = vpop.f32.mrb[0].mxu0
      %2903 = vmatprep.mubr.bf16.mxu0 0
      %2904 = vmatmul.mubr.bf16.gmra.mrb[0].mxu0 %v2785
      %v2905 = vpop.f32.mrb[0].mxu0
      %v2906 = vadd.f32 0.0, %v2905
      %v2907 = vpop.f32.mrb[0].mxu0
      %v2908 = vpop.f32.mrb[0].mxu0
      %v2909 = vadd.f32 0.0, %v2908
      %v2910 = vpop.f32.mrb[0].mxu0
      %2911 = vmatprep.mubr.bf16.mxu0 0
      %2912 = vmatmul.mubr.bf16.gmra.mrb[0].mxu0 %v2788
      %v2913 = vpop.f32.mrb[0].mxu0
      %v2914 = vadd.f32 0.0, %v2913
      %v2915 = vpop.f32.mrb[0].mxu0
      %v2916 = vpop.f32.mrb[0].mxu0
      %v2917 = vadd.f32 0.0, %v2916
      %v2918 = vpop.f32.mrb[0].mxu0
      %2919 = vmatprep.mubr.bf16.mxu0 0
      %2920 = vmatmul.mubr.bf16.gmra.mrb[0].mxu0 %v2791
      %v2921 = vpop.f32.mrb[0].mxu0
      %v2922 = vadd.f32 0.0, %v2921
      %v2923 = vpop.f32.mrb[0].mxu0
      %v2924 = vpop.f32.mrb[0].mxu0
      %v2925 = vadd.f32 0.0, %v2924
      %v2926 = vpop.f32.mrb[0].mxu0
      %2927 = vmatprep.mubr.bf16.mxu0 0
      %2928 = vmatmul.mubr.bf16.gmra.mrb[0].mxu0 %v2794
      %v2929 = vpop.f32.mrb[0].mxu0
      %v2930 = vadd.f32 0.0, %v2929
      %v2931 = vpop.f32.mrb[0].mxu0
      %v2932 = vpop.f32.mrb[0].mxu0
      %v2933 = vadd.f32 0.0, %v2932
      %v2934 = vpop.f32.mrb[0].mxu0
      %2935 = vmatprep.mubr.bf16.mxu0 0
      %2936 = vmatmul.mubr.bf16.gmra.mrb[0].mxu0 %v2797
      %v2937 = vpop.f32.mrb[0].mxu0
      %v2938 = vadd.f32 0.0, %v2937
      %v2939 = vpop.f32.mrb[0].mxu0
      %v2940 = vpop.f32.mrb[0].mxu0
      %v2941 = vadd.f32 0.0, %v2940
      %v2942 = vpop.f32.mrb[0].mxu0
      %2943 = vmatprep.mubr.bf16.mxu0 0
      %2944 = vmatmul.mubr.bf16.gmra.mrb[0].mxu0 %v2800
      %v2945 = vpop.f32.mrb[0].mxu0
      %v2946 = vadd.f32 0.0, %v2945
      %v2947 = vpop.f32.mrb[0].mxu0
      %v2948 = vpop.f32.mrb[0].mxu0
      %v2949 = vadd.f32 0.0, %v2948
      %v2950 = vpop.f32.mrb[0].mxu0
      %2951 = vmatprep.mubr.bf16.mxu0 0
      %2952 = vmatmul.mubr.bf16.gmra.mrb[0].mxu0 %v2803
      %v2953 = vpop.f32.mrb[0].mxu0
      %v2954 = vadd.f32 0.0, %v2953
      %v2955 = vpop.f32.mrb[0].mxu0
      %v2956 = vpop.f32.mrb[0].mxu0
      %v2957 = vadd.f32 0.0, %v2956
      %v2958 = vpop.f32.mrb[0].mxu0
      %2959 = vmatprep.mubr.bf16.mxu0 0
      %2960 = vmatmul.mubr.bf16.gmra.mrb[0].mxu0 %v2806
      %v2961 = vpop.f32.mrb[0].mxu0
      %v2962 = vadd.f32 0.0, %v2961
      %v2963 = vpop.f32.mrb[0].mxu0
      %v2964 = vpop.f32.mrb[0].mxu0
      %v2965 = vadd.f32 0.0, %v2964
      %v2966 = vpop.f32.mrb[0].mxu0
      %2967 = vmatprep.mubr.bf16.mxu0 0
      %2968 = vmatmul.mubr.bf16.gmra.mrb[0].mxu0 %v2809
      %v2969 = vpop.f32.mrb[0].mxu0
      %v2970 = vadd.f32 0.0, %v2969
      %v2971 = vpop.f32.mrb[0].mxu0
      %v2972 = vpop.f32.mrb[0].mxu0
      %v2973 = vadd.f32 0.0, %v2972
      %v2974 = vpop.f32.mrb[0].mxu0
      %2975 = vmatprep.mubr.bf16.mxu0 0
      %2976 = vmatmul.mubr.bf16.gmra.mrb[0].mxu0 %v2812
      %v2977 = vpop.f32.mrb[0].mxu0
      %v2978 = vadd.f32 0.0, %v2977
      %v2979 = vpop.f32.mrb[0].mxu0
      %v2980 = vpop.f32.mrb[0].mxu0
      %v2981 = vadd.f32 0.0, %v2980
      %v2982 = vpop.f32.mrb[0].mxu0
      %2983 = vmatprep.mubr.bf16.mxu0 0
      %2984 = vmatmul.mubr.bf16.gmra.mrb[0].mxu0 %v2815
      %v2985 = vpop.f32.mrb[0].mxu0
      %v2986 = vadd.f32 0.0, %v2985
      %v2987 = vpop.f32.mrb[0].mxu0
      %v2988 = vpop.f32.mrb[0].mxu0
      %v2989 = vadd.f32 0.0, %v2988
      %v2990 = vpop.f32.mrb[0].mxu0
      %2991 = vmatprep.mubr.bf16.mxu0 0
      %2992 = vmatmul.mubr.bf16.gmra.mrb[0].mxu0 %v2818
      %v2993 = vpop.f32.mrb[0].mxu0
      %v2994 = vadd.f32 0.0, %v2993
      %v2995 = vpop.f32.mrb[0].mxu0
      %v2996 = vpop.f32.mrb[0].mxu0
      %v2997 = vadd.f32 0.0, %v2996
      %v2998 = vpop.f32.mrb[0].mxu0
      %2999 = vdwg.mxu0
      %v3000 = vadd.f32 %v2674, %v2858
      %v3001 = vadd.f32 %v2675, %v2861
      %v3002 = vadd.f32 %v2676, %v2866
      %v3003 = vadd.f32 %v2677, %v2869
      %v3004 = vadd.f32 %v2678, %v2874
      %v3005 = vadd.f32 %v2679, %v2877
      %v3006 = vadd.f32 %v2680, %v2882
      %v3007 = vadd.f32 %v2681, %v2885
      %v3008 = vadd.f32 %v2682, %v2890
      %v3009 = vadd.f32 %v2683, %v2893
      %v3010 = vadd.f32 %v2684, %v2898
      %v3011 = vadd.f32 %v2685, %v2901
      %v3012 = vadd.f32 %v2686, %v2906
      %v3013 = vadd.f32 %v2687, %v2909
      %v3014 = vadd.f32 %v2688, %v2914
      %v3015 = vadd.f32 %v2689, %v2917
      %v3016 = vadd.f32 %v2690, %v2922
      %v3017 = vadd.f32 %v2691, %v2925
      %v3018 = vadd.f32 %v2692, %v2930
      %v3019 = vadd.f32 %v2693, %v2933
      %v3020 = vadd.f32 %v2694, %v2938
      %v3021 = vadd.f32 %v2695, %v2941
      %v3022 = vadd.f32 %v2696, %v2946
      %v3023 = vadd.f32 %v2697, %v2949
      %v3024 = vadd.f32 %v2698, %v2954
      %v3025 = vadd.f32 %v2699, %v2957
      %v3026 = vadd.f32 %v2700, %v2962
      %v3027 = vadd.f32 %v2701, %v2965
      %v3028 = vadd.f32 %v2702, %v2970
      %v3029 = vadd.f32 %v2703, %v2973
      %v3030 = vadd.f32 %v2704, %v2978
      %v3031 = vadd.f32 %v2705, %v2981
      %v3032 = vadd.f32 %v2706, %v2986
      %v3033 = vadd.f32 %v2707, %v2989
      %v3034 = vadd.f32 %v2708, %v2994
      %v3035 = vadd.f32 %v2709, %v2997
      %s3036 = sld [smem:[#allocation2]]
      %vm3037 = vcmp.ge.f32.partialorder %v3000, 0.0
      %vm3038 = vcmp.ge.f32.partialorder %v3001, 0.0
      %vm3039 = vcmp.ge.f32.partialorder %v3002, 0.0
      %vm3040 = vcmp.ge.f32.partialorder %v3003, 0.0
      %vm3041 = vcmp.ge.f32.partialorder %v3004, 0.0
      %vm3042 = vcmp.ge.f32.partialorder %v3005, 0.0
      %vm3043 = vcmp.ge.f32.partialorder %v3006, 0.0
      %vm3044 = vcmp.ge.f32.partialorder %v3007, 0.0
      %vm3045 = vcmp.ge.f32.partialorder %v3008, 0.0
      %vm3046 = vcmp.ge.f32.partialorder %v3009, 0.0
      %vm3047 = vcmp.ge.f32.partialorder %v3010, 0.0
      %vm3048 = vcmp.ge.f32.partialorder %v3011, 0.0
      %vm3049 = vcmp.ge.f32.partialorder %v3012, 0.0
      %vm3050 = vcmp.ge.f32.partialorder %v3013, 0.0
      %vm3051 = vcmp.ge.f32.partialorder %v3014, 0.0
      %vm3052 = vcmp.ge.f32.partialorder %v3015, 0.0
      %vm3053 = vcmp.ge.f32.partialorder %v3016, 0.0
      %vm3054 = vcmp.ge.f32.partialorder %v3017, 0.0
      %vm3055 = vcmp.ge.f32.partialorder %v3018, 0.0
      %vm3056 = vcmp.ge.f32.partialorder %v3019, 0.0
      %vm3057 = vcmp.ge.f32.partialorder %v3020, 0.0
      %vm3058 = vcmp.ge.f32.partialorder %v3021, 0.0
      %vm3059 = vcmp.ge.f32.partialorder %v3022, 0.0
      %vm3060 = vcmp.ge.f32.partialorder %v3023, 0.0
      %vm3061 = vcmp.ge.f32.partialorder %v3024, 0.0
      %vm3062 = vcmp.ge.f32.partialorder %v3025, 0.0
      %vm3063 = vcmp.ge.f32.partialorder %v3026, 0.0
      %vm3064 = vcmp.ge.f32.partialorder %v3027, 0.0
      %vm3065 = vcmp.ge.f32.partialorder %v3028, 0.0
      %vm3066 = vcmp.ge.f32.partialorder %v3029, 0.0
      %vm3067 = vcmp.ge.f32.partialorder %v3030, 0.0
      %vm3068 = vcmp.ge.f32.partialorder %v3031, 0.0
      %vm3069 = vcmp.ge.f32.partialorder %v3032, 0.0
      %vm3070 = vcmp.ge.f32.partialorder %v3033, 0.0
      %vm3071 = vcmp.ge.f32.partialorder %v3034, 0.0
      %vm3072 = vcmp.ge.f32.partialorder %v3035, 0.0
      %v3073 = vstv %s3036
      %v3074 = vmul.f32 %v3073, %v3000
      %v3075 = vmul.f32 %v3073, %v3001
      %v3076 = vmul.f32 %v3073, %v3002
      %v3077 = vmul.f32 %v3073, %v3003
      %v3078 = vmul.f32 %v3073, %v3004
      %v3079 = vmul.f32 %v3073, %v3005
      %v3080 = vmul.f32 %v3073, %v3006
      %v3081 = vmul.f32 %v3073, %v3007
      %v3082 = vmul.f32 %v3073, %v3008
      %v3083 = vmul.f32 %v3073, %v3009
      %v3084 = vmul.f32 %v3073, %v3010
      %v3085 = vmul.f32 %v3073, %v3011
      %v3086 = vmul.f32 %v3073, %v3012
      %v3087 = vmul.f32 %v3073, %v3013
      %v3088 = vmul.f32 %v3073, %v3014
      %v3089 = vmul.f32 %v3073, %v3015
      %v3090 = vmul.f32 %v3073, %v3016
      %v3091 = vmul.f32 %v3073, %v3017
      %v3092 = vmul.f32 %v3073, %v3018
      %v3093 = vmul.f32 %v3073, %v3019
      %v3094 = vmul.f32 %v3073, %v3020
      %v3095 = vmul.f32 %v3073, %v3021
      %v3096 = vmul.f32 %v3073, %v3022
      %v3097 = vmul.f32 %v3073, %v3023
      %v3098 = vmul.f32 %v3073, %v3024
      %v3099 = vmul.f32 %v3073, %v3025
      %v3100 = vmul.f32 %v3073, %v3026
      %v3101 = vmul.f32 %v3073, %v3027
      %v3102 = vmul.f32 %v3073, %v3028
      %v3103 = vmul.f32 %v3073, %v3029
      %v3104 = vmul.f32 %v3073, %v3030
      %v3105 = vmul.f32 %v3073, %v3031
      %v3106 = vmul.f32 %v3073, %v3032
      %v3107 = vmul.f32 %v3073, %v3033
      %v3108 = vmul.f32 %v3073, %v3034
      %v3109 = vmul.f32 %v3073, %v3035
      %v3110 = vsel %vm3037, %v3000, %v3074
      %v3111 = vsel %vm3038, %v3001, %v3075
      %v3112 = vsel %vm3039, %v3002, %v3076
      %v3113 = vsel %vm3040, %v3003, %v3077
      %v3114 = vsel %vm3041, %v3004, %v3078
      %v3115 = vsel %vm3042, %v3005, %v3079
      %v3116 = vsel %vm3043, %v3006, %v3080
      %v3117 = vsel %vm3044, %v3007, %v3081
      %v3118 = vsel %vm3045, %v3008, %v3082
      %v3119 = vsel %vm3046, %v3009, %v3083
      %v3120 = vsel %vm3047, %v3010, %v3084
      %v3121 = vsel %vm3048, %v3011, %v3085
      %v3122 = vsel %vm3049, %v3012, %v3086
      %v3123 = vsel %vm3050, %v3013, %v3087
      %v3124 = vsel %vm3051, %v3014, %v3088
      %v3125 = vsel %vm3052, %v3015, %v3089
      %v3126 = vsel %vm3053, %v3016, %v3090
      %v3127 = vsel %vm3054, %v3017, %v3091
      %v3128 = vsel %vm3055, %v3018, %v3092
      %v3129 = vsel %vm3056, %v3019, %v3093
      %v3130 = vsel %vm3057, %v3020, %v3094
      %v3131 = vsel %vm3058, %v3021, %v3095
      %v3132 = vsel %vm3059, %v3022, %v3096
      %v3133 = vsel %vm3060, %v3023, %v3097
      %v3134 = vsel %vm3061, %v3024, %v3098
      %v3135 = vsel %vm3062, %v3025, %v3099
      %v3136 = vsel %vm3063, %v3026, %v3100
      %v3137 = vsel %vm3064, %v3027, %v3101
      %v3138 = vsel %vm3065, %v3028, %v3102
      %v3139 = vsel %vm3066, %v3029, %v3103
      %v3140 = vsel %vm3067, %v3030, %v3104
      %v3141 = vsel %vm3068, %v3031, %v3105
      %v3142 = vsel %vm3069, %v3032, %v3106
      %v3143 = vsel %vm3070, %v3033, %v3107
      %v3144 = vsel %vm3071, %v3034, %v3108
      %v3145 = vsel %vm3072, %v3035, %v3109
      %vm3146 = vcmask 523264
      %3147 = vst.msk [vmem:[%s171] sm:$0xff] %vm3146, %v3110
      %3148 = vst.msk [vmem:[%s171 + $0x8] sm:$0xff] %vm3146, %v3111
      %3149 = vst.msk [vmem:[%s171 + $0x10] sm:$0xff] %vm3146, %v3112
      %3150 = vst.msk [vmem:[%s171 + $0x18] sm:$0xff] %vm3146, %v3113
      %3151 = vst.msk [vmem:[%s171 + $0x20] sm:$0xff] %vm3146, %v3114
      %3152 = vst.msk [vmem:[%s171 + $0x28] sm:$0xff] %vm3146, %v3115
      %3153 = vst.msk [vmem:[%s171 + $0x30] sm:$0xff] %vm3146, %v3116
      %3154 = vst.msk [vmem:[%s171 + $0x38] sm:$0xff] %vm3146, %v3117
      %3155 = vst.msk [vmem:[%s171 + $0x40] sm:$0xff] %vm3146, %v3118
      %3156 = vst.msk [vmem:[%s171 + $0x48] sm:$0xff] %vm3146, %v3119
      %3157 = vst.msk [vmem:[%s171 + $0x50] sm:$0xff] %vm3146, %v3120
      %3158 = vst.msk [vmem:[%s171 + $0x58] sm:$0xff] %vm3146, %v3121
      %3159 = vst.msk [vmem:[%s171 + $0x60] sm:$0xff] %vm3146, %v3122
      %3160 = vst.msk [vmem:[%s171 + $0x68] sm:$0xff] %vm3146, %v3123
      %3161 = vst.msk [vmem:[%s171 + $0x70] sm:$0xff] %vm3146, %v3124
      %3162 = vst.msk [vmem:[%s171 + $0x78] sm:$0xff] %vm3146, %v3125
      %3163 = vst.msk [vmem:[%s171 + $0x80] sm:$0xff] %vm3146, %v3126
      %3164 = vst.msk [vmem:[%s171 + $0x88] sm:$0xff] %vm3146, %v3127
      %3165 = vst.msk [vmem:[%s171 + $0x90] sm:$0xff] %vm3146, %v3128
      %3166 = vst.msk [vmem:[%s171 + $0x98] sm:$0xff] %vm3146, %v3129
      %3167 = vst.msk [vmem:[%s171 + $0xa0] sm:$0xff] %vm3146, %v3130
      %3168 = vst.msk [vmem:[%s171 + $0xa8] sm:$0xff] %vm3146, %v3131
      %3169 = vst.msk [vmem:[%s171 + $0xb0] sm:$0xff] %vm3146, %v3132
      %3170 = vst.msk [vmem:[%s171 + $0xb8] sm:$0xff] %vm3146, %v3133
      %3171 = vst.msk [vmem:[%s171 + $0xc0] sm:$0xff] %vm3146, %v3134
      %3172 = vst.msk [vmem:[%s171 + $0xc8] sm:$0xff] %vm3146, %v3135
      %3173 = vst.msk [vmem:[%s171 + $0xd0] sm:$0xff] %vm3146, %v3136
      %3174 = vst.msk [vmem:[%s171 + $0xd8] sm:$0xff] %vm3146, %v3137
      %3175 = vst.msk [vmem:[%s171 + $0xe0] sm:$0xff] %vm3146, %v3138
      %3176 = vst.msk [vmem:[%s171 + $0xe8] sm:$0xff] %vm3146, %v3139
      %3177 = vst.msk [vmem:[%s171 + $0xf0] sm:$0xff] %vm3146, %v3140
      %3178 = vst.msk [vmem:[%s171 + $0xf8] sm:$0xff] %vm3146, %v3141
      %3179 = vst.msk [vmem:[%s171 + $0x100] sm:$0xff] %vm3146, %v3142
      %3180 = vst.msk [vmem:[%s171 + $0x108] sm:$0xff] %vm3146, %v3143
      %3181 = vst.msk [vmem:[%s171 + $0x110] sm:$0xff] %vm3146, %v3144
      %3182 = vst.msk [vmem:[%s171 + $0x118] sm:$0xff] %vm3146, %v3145
      %p3183 = scmp.lt.s32.totalorder %s15, 1
      %s3184 = scalar_select %p3183, %s15, 1
      %s3185 = smul.addr %s3184, 36
      %s3186 = smul.addr %s3185, 8
      %s3187 = scalar_lea.vmem %s3, %s3186
      // Predicated region
      $region33: #{_head_fwd.2} parent=31 // pred_check
        %p3188 = pneg %p101
      $region34: #{_head_fwd.2} parent=31 // pred_check_branch
        %3190 = sbr.rel (%p3188) target = $region36
      $region35: #{_head_fwd.2} parent=31 // pred_region
        _
      $region36: #{_head_fwd.2} parent=31 // pred_fallthru
        _
    $region32: #{_head_fwd.2} parent=5 // pred_fallthru
      _
    %p3191 = scmp.le.s32.totalorder 2, %s10
    // Predicated region
    $region37: #{_head_fwd.2} parent=5 // pred_check
      %p3192 = pneg %p3191
    $region38: #{_head_fwd.2} parent=5 // pred_check_branch
      %3194 = sbr.rel (%p3192) target = $region40
    $region39: #{_head_fwd.2} parent=5 // pred_region
      %s3195 = ssub.s32 %s10, 2
      // Predicated region
      $region41: #{_head_fwd.2} parent=39 // pred_check
        %p3196 = pneg %p107
      $region42: #{_head_fwd.2} parent=39 // pred_check_branch
        %3198 = sbr.rel (%p3196) target = $region44
      $region43: #{_head_fwd.2} parent=39 // pred_region
        %p3199 = scmp.lt.s32.totalorder %s16, 1
        %s3200 = scalar_select %p3199, %s16, 1
        %s3201 = smul.addr %s3200, 36
        %s3202 = smul.addr %s3201, 8
        %s3203 = scalar_lea.vmem %s3, %s3202
      $region44: #{_head_fwd.2} parent=39 // pred_fallthru
        _
    $region40: #{_head_fwd.2} parent=5 // pred_fallthru
      _
  $region6: #{_head_fwd.2} parent=0 // loop_footer
    %s14 = sadd.s32 1, %s10
  $region7: #{_head_fwd.2} parent=0 // loop_footer_branch
    %9 = sbr.rel target = $region3
  $region8: #{_head_fwd.2} parent=0 // loop_exit
    _

// kernel: _head_fwd.3
$region0: #{_head_fwd.3}
  #allocation0 [shape = 'u32[]', space=smem, size = 0x4, offset = 0x4, fixed_abs, tag = 'smem constant byte address 0x4 - core index']
  #allocation1 [shape = 'u32[144,128]{1,0:T(1,128)}', space=vmem, size = 0x12000, scoped, tag = 'internal scratch']
  #allocation2 [shape = 'f32[1]{0:T(128)S(6)}', space=smem, size = 0x200, scoped, tag = 'scoped memory for _head_fwd.3']
  %s0 = inlined_call_operand.vmem [shape: f32[2,2,163,64], index: 0, kind: input, shape index: {}]
  %s1 = inlined_call_operand.vmem [shape: bf16[9,64,64], index: 1, kind: input, shape index: {}]
  %s2 = inlined_call_operand.<no memory space> [shape: f32[1], index: 2, kind: input, shape index: {}]
  %s3 = inlined_call_operand.vmem [shape: f32[2,144,64], index: 3, kind: output, shape index: {}]
  %s4 = sld [smem:[#allocation0]]
  $region45: #{_head_fwd.3} parent=0
    _
  %s6 = ssub.s32 1, %s4
  %s7 = scalar_select 0, %s6, %s4
  %8 = sst [smem:[#allocation2]] %s2
  loop: start=0, step=1, limit=4
  $region2: #{_head_fwd.3} parent=0 // loop_pre_header
    _
  $region3: #{_head_fwd.3} parent=0 // loop_header
    %s10 = sphi 0, %s14
    %p11 = scmp.ge.s32.totalorder %s10, 4
    %s20 = sphi 0, %s22
    %s23 = sphi 0, %s20
    %s24 = sphi 0, %s23
    %s40 = sphi 0, %s24
    %s44 = sphi 0, %s44
    %s46 = sphi 0, %s44
    %s47 = sphi 0, %s46
    %s61 = sphi 0, %s47
    %s65 = sphi 0, %s65
    %s67 = sphi 0, %s65
    %s68 = sphi 0, %s67
    %s82 = sphi 0, %s68
    %s88 = sphi 0, %s90
    %s91 = sphi 0, %s88
    %s92 = sphi 0, %s91
    %s108 = sphi 0, %s92
  $region4: #{_head_fwd.3} parent=0 // loop_header_branch
    %13 = sbr.rel (%p11) target = $region8
  $region5: #{_head_fwd.3} parent=0 // loop_body
    %s15 = ssub.s32 %s10, 1
    %s16 = ssub.s32 %s10, 2
    %s17 = sadd.s32 %s10, 1
    %s18 = ssub.s32 %s10, %s17
    %p19 = scmp.eq.s32.totalorder %s18, 0
    %s21 = sadd.s32 %s20, 1
    %s22 = scalar_select %p19, %s20, %s21
    %p25 = pneg %p19
    %p26 = scmp.eq.s32.totalorder %s10, 1
    %p27 = por %p25, %p26
    %p28 = scmp.ne.s32.totalorder %s20, %s23
    %p29 = scmp.eq.s32.totalorder %s10, 0
    %p30 = por %p28, %p29
    %p31 = scmp.ne.s32.totalorder %s20, %s23
    %p32 = scmp.eq.s32.totalorder %s15, 1
    %p33 = por %p31, %p32
    %p34 = scmp.ne.s32.totalorder %s23, %s24
    %p35 = scmp.eq.s32.totalorder %s15, 0
    %p36 = por %p34, %p35
    %p37 = scmp.ne.s32.totalorder %s23, %s24
    %p38 = scmp.eq.s32.totalorder %s16, 1
    %p39 = por %p37, %p38
    %p41 = scmp.ne.s32.totalorder %s24, %s40
    %p42 = scmp.eq.s32.totalorder %s16, 0
    %p43 = por %p41, %p42
    %s45 = sadd.s32 %s44, 1
    %p48 = scmp.eq.s32.totalorder %s10, 1
    %p49 = scmp.ne.s32.totalorder %s44, %s46
    %p50 = scmp.eq.s32.totalorder %s10, 0
    %p51 = por %p49, %p50
    %p52 = scmp.ne.s32.totalorder %s44, %s46
    %p53 = scmp.eq.s32.totalorder %s15, 1
    %p54 = por %p52, %p53
    %p55 = scmp.ne.s32.totalorder %s46, %s47
    %p56 = scmp.eq.s32.totalorder %s15, 0
    %p57 = por %p55, %p56
    %p58 = scmp.ne.s32.totalorder %s46, %s47
    %p59 = scmp.eq.s32.totalorder %s16, 1
    %p60 = por %p58, %p59
    %p62 = scmp.ne.s32.totalorder %s47, %s61
    %p63 = scmp.eq.s32.totalorder %s16, 0
    %p64 = por %p62, %p63
    %s66 = sadd.s32 %s65, 1
    %p69 = scmp.eq.s32.totalorder %s10, 1
    %p70 = scmp.ne.s32.totalorder %s65, %s67
    %p71 = scmp.eq.s32.totalorder %s10, 0
    %p72 = por %p70, %p71
    %p73 = scmp.ne.s32.totalorder %s65, %s67
    %p74 = scmp.eq.s32.totalorder %s15, 1
    %p75 = por %p73, %p74
    %p76 = scmp.ne.s32.totalorder %s67, %s68
    %p77 = scmp.eq.s32.totalorder %s15, 0
    %p78 = por %p76, %p77
    %p79 = scmp.ne.s32.totalorder %s67, %s68
    %p80 = scmp.eq.s32.totalorder %s16, 1
    %p81 = por %p79, %p80
    %p83 = scmp.ne.s32.totalorder %s68, %s82
    %p84 = scmp.eq.s32.totalorder %s16, 0
    %p85 = por %p83, %p84
    %s86 = ssub.s32 %s10, %s17
    %p87 = scmp.eq.s32.totalorder %s86, 0
    %s89 = sadd.s32 %s88, 1
    %s90 = scalar_select %p87, %s88, %s89
    %p93 = pneg %p87
    %p94 = scmp.eq.s32.totalorder %s10, 1
    %p95 = por %p93, %p94
    %p96 = scmp.ne.s32.totalorder %s88, %s91
    %p97 = scmp.eq.s32.totalorder %s10, 0
    %p98 = por %p96, %p97
    %p99 = scmp.ne.s32.totalorder %s88, %s91
    %p100 = scmp.eq.s32.totalorder %s15, 1
    %p101 = por %p99, %p100
    %p102 = scmp.ne.s32.totalorder %s91, %s92
    %p103 = scmp.eq.s32.totalorder %s15, 0
    %p104 = por %p102, %p103
    %p105 = scmp.ne.s32.totalorder %s91, %s92
    %p106 = scmp.eq.s32.totalorder %s16, 1
    %p107 = por %p105, %p106
    %p109 = scmp.ne.s32.totalorder %s92, %s108
    %p110 = scmp.eq.s32.totalorder %s16, 0
    %p111 = por %p109, %p110
    %p112 = scmp.le.s32.totalorder 1, %s10
    %p113 = scmp.lt.s32.totalorder %s10, 3
    %p114 = pnand %p112, %p113
    %p115 = pneg %p114
    // Predicated region
    $region9: #{_head_fwd.3} parent=5 // pred_check
      _
    $region10: #{_head_fwd.3} parent=5 // pred_check_branch
      %117 = sbr.rel (%p114) target = $region12
    $region11: #{_head_fwd.3} parent=5 // pred_region
      %s118 = ssub.s32 %s10, 1
      // Predicated region
      $region13: #{_head_fwd.3} parent=11 // pred_check
        %p119 = pneg %p57
      $region14: #{_head_fwd.3} parent=11 // pred_check_branch
        %121 = sbr.rel (%p119) target = $region16
      $region15: #{_head_fwd.3} parent=11 // pred_region
        _
      $region16: #{_head_fwd.3} parent=11 // pred_fallthru
        _
      // Predicated region
      $region17: #{_head_fwd.3} parent=11 // pred_check
        %p122 = pneg %p78
      $region18: #{_head_fwd.3} parent=11 // pred_check_branch
        %124 = sbr.rel (%p122) target = $region20
      $region19: #{_head_fwd.3} parent=11 // pred_region
        _
      $region20: #{_head_fwd.3} parent=11 // pred_fallthru
        _
    $region12: #{_head_fwd.3} parent=5 // pred_fallthru
      _
    %p125 = scmp.lt.s32.totalorder %s10, 2
    // Predicated region
    $region21: #{_head_fwd.3} parent=5 // pred_check
      %p126 = pneg %p125
    $region22: #{_head_fwd.3} parent=5 // pred_check_branch
      %128 = sbr.rel (%p126) target = $region24
    $region23: #{_head_fwd.3} parent=5 // pred_region
      // Predicated region
      $region25: #{_head_fwd.3} parent=23 // pred_check
        %p129 = pneg %p30
      $region26: #{_head_fwd.3} parent=23 // pred_check_branch
        %131 = sbr.rel (%p129) target = $region28
      $region27: #{_head_fwd.3} parent=23 // pred_region
        %p132 = scmp.lt.s32.totalorder %s10, 1
        %s133 = scalar_select %p132, %s10, 1
        %s134 = smul.addr %s133, 42
        %s135 = smul.addr %s134, 8
        %s136 = scalar_lea.vmem %s0, %s135
      $region28: #{_head_fwd.3} parent=23 // pred_fallthru
        _
    $region24: #{_head_fwd.3} parent=5 // pred_fallthru
      _
    %p137 = scmp.le.s32.totalorder 1, %s10
    %p138 = scmp.lt.s32.totalorder %s10, 3
    %p139 = pnand %p137, %p138
    %p140 = pneg %p139
    // Predicated region
    $region29: #{_head_fwd.3} parent=5 // pred_check
      _
    $region30: #{_head_fwd.3} parent=5 // pred_check_branch
      %142 = sbr.rel (%p139) target = $region32
    $region31: #{_head_fwd.3} parent=5 // pred_region
      %s143 = ssub.s32 %s10, 1
      %p144 = scmp.lt.s32.totalorder %s15, 1
      %s145 = scalar_select %p144, %s15, 1
      %s146 = smul.addr %s145, 42
      %s147 = smul.addr %s146, 8
      %s148 = scalar_lea.vmem %s0, %s147
      %p149 = pneg %p36
      %p150 = pneg %p33
      %p151 = pneg %p57
      %p152 = pneg %p54
      %p153 = pneg %p78
      %p154 = pneg %p75
      %p155 = pneg %p104
      %p156 = pneg %p101
      %p157 = scmp.lt.s32.totalorder %s15, 1
      %s158 = scalar_select %p157, %s15, 1
      %s159 = smul.addr %s158, 18
      %s160 = smul.addr %s159, 8
      %s161 = scalar_lea.vmem %s3, %s160
      %p162 = scmp.lt.s32.totalorder %s15, 1
      %s163 = scalar_select %p162, %s15, 1
      %s164 = smul.addr %s163, 42
      %s165 = smul.addr %s164, 8
      %s166 = scalar_lea.vmem %s0, %s165
      %p167 = scmp.lt.s32.totalorder %s15, 1
      %s168 = scalar_select %p167, %s15, 1
      %s169 = smul.addr %s168, 18
      %s170 = smul.addr %s169, 8
      %s171 = scalar_lea.vmem %s3, %s170
      %v173 = vld [vmem:[%s166] sm:$0xff]
      %v174 = vld [vmem:[%s166 + $0x8] sm:$0xff]
      %v175 = vld [vmem:[%s166 + $0x10] sm:$0xff]
      %v176 = vld [vmem:[%s166 + $0x18] sm:$0xff]
      %v177 = vld [vmem:[%s166 + $0x20] sm:$0xff]
      %v178 = vld [vmem:[%s166 + $0x28] sm:$0xff]
      %v179 = vld [vmem:[%s166 + $0x30] sm:$0xff]
      %v180 = vld [vmem:[%s166 + $0x38] sm:$0xff]
      %v181 = vld [vmem:[%s166 + $0x40] sm:$0xff]
      %v182 = vld [vmem:[%s166 + $0x48] sm:$0xff]
      %v183 = vld [vmem:[%s166 + $0x50] sm:$0xff]
      %v184 = vld [vmem:[%s166 + $0x58] sm:$0xff]
      %v185 = vld [vmem:[%s166 + $0x60] sm:$0xff]
      %v186 = vld [vmem:[%s166 + $0x68] sm:$0xff]
      %v187 = vld [vmem:[%s166 + $0x70] sm:$0xff]
      %v188 = vld [vmem:[%s166 + $0x78] sm:$0xff]
      %v189 = vld [vmem:[%s166 + $0x80] sm:$0xff]
      %v190 = vld [vmem:[%s166 + $0x88] sm:$0xff]
      %v191 = vpack.c.bf16 %v174, %v173
      %v192 = vpack.c.bf16 %v176, %v175
      %v193 = vpack.c.bf16 %v178, %v177
      %v194 = vpack.c.bf16 %v180, %v179
      %v195 = vpack.c.bf16 %v182, %v181
      %v196 = vpack.c.bf16 %v184, %v183
      %v197 = vpack.c.bf16 %v186, %v185
      %v198 = vpack.c.bf16 %v188, %v187
      %v199 = vpack.c.bf16 %v190, %v189
      %v200 = vld [vmem:[%s1] sm:$0xf]
      %v201 = vld [vmem:[%s1 + $0x4] sm:$0xf]
      %v202 = vld [vmem:[%s1 + $0x8] sm:$0xf]
      %v203 = vld [vmem:[%s1 + $0xc] sm:$0xf]
      %v204 = vld [vmem:[%s1 + $0x10] sm:$0xf]
      %v205 = vld [vmem:[%s1 + $0x14] sm:$0xf]
      %v206 = vld [vmem:[%s1 + $0x18] sm:$0xf]
      %v207 = vld [vmem:[%s1 + $0x1c] sm:$0xf]
      %s208 = scalar_lea.vmem %s166, 168
      %v209 = vld [vmem:[%s208] sm:$0xff]
      %v210 = vld [vmem:[%s208 + $0x8] sm:$0xff]
      %v211 = vld [vmem:[%s208 + $0x10] sm:$0xff]
      %v212 = vld [vmem:[%s208 + $0x18] sm:$0xff]
      %v213 = vld [vmem:[%s208 + $0x20] sm:$0xff]
      %v214 = vld [vmem:[%s208 + $0x28] sm:$0xff]
      %v215 = vld [vmem:[%s208 + $0x30] sm:$0xff]
      %v216 = vld [vmem:[%s208 + $0x38] sm:$0xff]
      %v217 = vld [vmem:[%s208 + $0x40] sm:$0xff]
      %v218 = vld [vmem:[%s208 + $0x48] sm:$0xff]
      %v219 = vld [vmem:[%s208 + $0x50] sm:$0xff]
      %v220 = vld [vmem:[%s208 + $0x58] sm:$0xff]
      %v221 = vld [vmem:[%s208 + $0x60] sm:$0xff]
      %v222 = vld [vmem:[%s208 + $0x68] sm:$0xff]
      %v223 = vld [vmem:[%s208 + $0x70] sm:$0xff]
      %v224 = vld [vmem:[%s208 + $0x78] sm:$0xff]
      %v225 = vld [vmem:[%s208 + $0x80] sm:$0xff]
      %v226 = vld [vmem:[%s208 + $0x88] sm:$0xff]
      %v227 = vpack.c.bf16 %v210, %v209
      %v228 = vpack.c.bf16 %v212, %v211
      %v229 = vpack.c.bf16 %v214, %v213
      %v230 = vpack.c.bf16 %v216, %v215
      %v231 = vpack.c.bf16 %v218, %v217
      %v232 = vpack.c.bf16 %v220, %v219
      %v233 = vpack.c.bf16 %v222, %v221
      %v234 = vpack.c.bf16 %v224, %v223
      %v235 = vpack.c.bf16 %v226, %v225
      %s236 = scalar_lea.vmem %s1, 32
      %v237 = vld [vmem:[%s236] sm:$0xf]
      %v238 = vld [vmem:[%s236 + $0x4] sm:$0xf]
      %v239 = vld [vmem:[%s236 + $0x8] sm:$0xf]
      %v240 = vld [vmem:[%s236 + $0xc] sm:$0xf]
      %v241 = vld [vmem:[%s236 + $0x10] sm:$0xf]
      %v242 = vld [vmem:[%s236 + $0x14] sm:$0xf]
      %v243 = vld [vmem:[%s236 + $0x18] sm:$0xf]
      %v244 = vld [vmem:[%s236 + $0x1c] sm:$0xf]
      %v253 = vunpack.c.l.b16 %v237
      %v254 = vunpack.c.l.b16 %v238
      %v255 = vunpack.c.l.b16 %v239
      %v256 = vunpack.c.l.b16 %v240
      %v257 = vunpack.c.l.b16 %v241
      %v258 = vunpack.c.l.b16 %v242
      %v259 = vunpack.c.l.b16 %v243
      %v260 = vunpack.c.l.b16 %v244
      %v261 = vpack.c.b16 %v254, %v253
      %v262 = vpack.c.b16 %v256, %v255
      %v263 = vpack.c.b16 %v258, %v257
      %v264 = vpack.c.b16 %v260, %v259
      %vm269 = vcmask 523264
      %v271 = vsel %vm269, %v227, 0
      %v274 = vsel %vm269, %v228, 0
      %v277 = vsel %vm269, %v229, 0
      %v280 = vsel %vm269, %v230, 0
      %v283 = vsel %vm269, %v231, 0
      %v286 = vsel %vm269, %v232, 0
      %v289 = vsel %vm269, %v233, 0
      %v292 = vsel %vm269, %v234, 0
      %v295 = vsel %vm269, %v235, 0
      %297 = vmatprep.subr.bf16.mxu0 0
      %298 = vmatpush1.bf16.msra.mxu0 %v261
      %299 = vmatprep.subr.bf16.mxu0 0
      %300 = vmatpush1.bf16.msra.mxu0 %v262
      %301 = vmatprep.subr.bf16.mxu0 0
      %302 = vmatpush1.bf16.msra.mxu0 %v263
      %303 = vmatprep.subr.bf16.mxu0 0
      %304 = vmatpush1.bf16.msra.mxu0 %v264
      %305 = vmatprep.subr.bf16.mxu0 0
      %306 = vmatpush1.bf16.msra.mxu0 0
      %307 = vmatprep.subr.bf16.mxu0 0
      %308 = vmatpush1.bf16.msra.mxu0 0
      %309 = vmatprep.subr.bf16.mxu0 0
      %310 = vmatpush1.bf16.msra.mxu0 0
      %311 = vmatprep.subr.bf16.mxu0 0
      %312 = vmatpush1.bf16.msra.mxu0 0
      %313 = vmatprep.subr.bf16.mxu0 0
      %314 = vmatpush1.bf16.msra.mxu0 0
      %315 = vmatprep.subr.bf16.mxu0 0
      %316 = vmatpush1.bf16.msra.mxu0 0
      %317 = vmatprep.subr.bf16.mxu0 0
      %318 = vmatpush1.bf16.msra.mxu0 0
      %319 = vmatprep.subr.bf16.mxu0 0
      %320 = vmatpush1.bf16.msra.mxu0 0
      %321 = vmatprep.subr.bf16.mxu0 0
      %322 = vmatpush1.bf16.msra.mxu0 0
      %323 = vmatprep.subr.bf16.mxu0 0
      %324 = vmatpush1.bf16.msra.mxu0 0
      %325 = vmatprep.subr.bf16.mxu0 0
      %326 = vmatpush1.bf16.msra.mxu0 0
      %327 = vmatprep.subr.bf16.mxu0 0
      %328 = vmatpush1.bf16.msra.mxu0 0
      %329 = vmatprep.mubr.bf16.mxu0 0
      %330 = vmatmul.mubr.bf16.gmra.mrb[0].mxu0 %v271
      %v331 = vpop.f32.mrb[0].mxu0
      %v332 = vadd.f32 0.0, %v331
      %v333 = vpop.f32.mrb[0].mxu0
      %v334 = vpop.f32.mrb[0].mxu0
      %v335 = vadd.f32 0.0, %v334
      %v336 = vpop.f32.mrb[0].mxu0
      %337 = vmatprep.mubr.bf16.mxu0 0
      %338 = vmatmul.mubr.bf16.gmra.mrb[0].mxu0 %v274
      %v339 = vpop.f32.mrb[0].mxu0
      %v340 = vadd.f32 0.0, %v339
      %v341 = vpop.f32.mrb[0].mxu0
      %v342 = vpop.f32.mrb[0].mxu0
      %v343 = vadd.f32 0.0, %v342
      %v344 = vpop.f32.mrb[0].mxu0
      %345 = vmatprep.mubr.bf16.mxu0 0
      %346 = vmatmul.mubr.bf16.gmra.mrb[0].mxu0 %v277
      %v347 = vpop.f32.mrb[0].mxu0
      %v348 = vadd.f32 0.0, %v347
      %v349 = vpop.f32.mrb[0].mxu0
      %v350 = vpop.f32.mrb[0].mxu0
      %v351 = vadd.f32 0.0, %v350
      %v352 = vpop.f32.mrb[0].mxu0
      %353 = vmatprep.mubr.bf16.mxu0 0
      %354 = vmatmul.mubr.bf16.gmra.mrb[0].mxu0 %v280
      %v355 = vpop.f32.mrb[0].mxu0
      %v356 = vadd.f32 0.0, %v355
      %v357 = vpop.f32.mrb[0].mxu0
      %v358 = vpop.f32.mrb[0].mxu0
      %v359 = vadd.f32 0.0, %v358
      %v360 = vpop.f32.mrb[0].mxu0
      %361 = vmatprep.mubr.bf16.mxu0 0
      %362 = vmatmul.mubr.bf16.gmra.mrb[0].mxu0 %v283
      %v363 = vpop.f32.mrb[0].mxu0
      %v364 = vadd.f32 0.0, %v363
      %v365 = vpop.f32.mrb[0].mxu0
      %v366 = vpop.f32.mrb[0].mxu0
      %v367 = vadd.f32 0.0, %v366
      %v368 = vpop.f32.mrb[0].mxu0
      %369 = vmatprep.mubr.bf16.mxu0 0
      %370 = vmatmul.mubr.bf16.gmra.mrb[0].mxu0 %v286
      %v371 = vpop.f32.mrb[0].mxu0
      %v372 = vadd.f32 0.0, %v371
      %v373 = vpop.f32.mrb[0].mxu0
      %v374 = vpop.f32.mrb[0].mxu0
      %v375 = vadd.f32 0.0, %v374
      %v376 = vpop.f32.mrb[0].mxu0
      %377 = vmatprep.mubr.bf16.mxu0 0
      %378 = vmatmul.mubr.bf16.gmra.mrb[0].mxu0 %v289
      %v379 = vpop.f32.mrb[0].mxu0
      %v380 = vadd.f32 0.0, %v379
      %v381 = vpop.f32.mrb[0].mxu0
      %v382 = vpop.f32.mrb[0].mxu0
      %v383 = vadd.f32 0.0, %v382
      %v384 = vpop.f32.mrb[0].mxu0
      %385 = vmatprep.mubr.bf16.mxu0 0
      %386 = vmatmul.mubr.bf16.gmra.mrb[0].mxu0 %v292
      %v387 = vpop.f32.mrb[0].mxu0
      %v388 = vadd.f32 0.0, %v387
      %v389 = vpop.f32.mrb[0].mxu0
      %v390 = vpop.f32.mrb[0].mxu0
      %v391 = vadd.f32 0.0, %v390
      %v392 = vpop.f32.mrb[0].mxu0
      %393 = vmatprep.mubr.bf16.mxu0 0
      %394 = vmatmul.mubr.bf16.gmra.mrb[0].mxu0 %v295
      %v395 = vpop.f32.mrb[0].mxu0
      %v396 = vadd.f32 0.0, %v395
      %v397 = vpop.f32.mrb[0].mxu0
      %v398 = vpop.f32.mrb[0].mxu0
      %v399 = vadd.f32 0.0, %v398
      %v400 = vpop.f32.mrb[0].mxu0
      %401 = vdwg.mxu0
      %v410 = vunpack.c.l.b16 %v200
      %v411 = vunpack.c.l.b16 %v201
      %v412 = vunpack.c.l.b16 %v202
      %v413 = vunpack.c.l.b16 %v203
      %v414 = vunpack.c.l.b16 %v204
      %v415 = vunpack.c.l.b16 %v205
      %v416 = vunpack.c.l.b16 %v206
      %v417 = vunpack.c.l.b16 %v207
      %v418 = vpack.c.b16 %v411, %v410
      %v419 = vpack.c.b16 %v413, %v412
      %v420 = vpack.c.b16 %v415, %v414
      %v421 = vpack.c.b16 %v417, %v416
      %v427 = vsel %vm269, %v191, 0
      %v430 = vsel %vm269, %v192, 0
      %v433 = vsel %vm269, %v193, 0
      %v436 = vsel %vm269, %v194, 0
      %v439 = vsel %vm269, %v195, 0
      %v442 = vsel %vm269, %v196, 0
      %v445 = vsel %vm269, %v197, 0
      %v448 = vsel %vm269, %v198, 0
      %v451 = vsel %vm269, %v199, 0
      %453 = vmatprep.subr.bf16.mxu0 0
      %454 = vmatpush1.bf16.msra.mxu0 %v418
      %455 = vmatprep.subr.bf16.mxu0 0
      %456 = vmatpush1.bf16.msra.mxu0 %v419
      %457 = vmatprep.subr.bf16.mxu0 0
      %458 = vmatpush1.bf16.msra.mxu0 %v420
      %459 = vmatprep.subr.bf16.mxu0 0
      %460 = vmatpush1.bf16.msra.mxu0 %v421
      %461 = vmatprep.subr.bf16.mxu0 0
      %462 = vmatpush1.bf16.msra.mxu0 0
      %463 = vmatprep.subr.bf16.mxu0 0
      %464 = vmatpush1.bf16.msra.mxu0 0
      %465 = vmatprep.subr.bf16.mxu0 0
      %466 = vmatpush1.bf16.msra.mxu0 0
      %467 = vmatprep.subr.bf16.mxu0 0
      %468 = vmatpush1.bf16.msra.mxu0 0
      %469 = vmatprep.subr.bf16.mxu0 0
      %470 = vmatpush1.bf16.msra.mxu0 0
      %471 = vmatprep.subr.bf16.mxu0 0
      %472 = vmatpush1.bf16.msra.mxu0 0
      %473 = vmatprep.subr.bf16.mxu0 0
      %474 = vmatpush1.bf16.msra.mxu0 0
      %475 = vmatprep.subr.bf16.mxu0 0
      %476 = vmatpush1.bf16.msra.mxu0 0
      %477 = vmatprep.subr.bf16.mxu0 0
      %478 = vmatpush1.bf16.msra.mxu0 0
      %479 = vmatprep.subr.bf16.mxu0 0
      %480 = vmatpush1.bf16.msra.mxu0 0
      %481 = vmatprep.subr.bf16.mxu0 0
      %482 = vmatpush1.bf16.msra.mxu0 0
      %483 = vmatprep.subr.bf16.mxu0 0
      %484 = vmatpush1.bf16.msra.mxu0 0
      %485 = vmatprep.mubr.bf16.mxu0 0
      %486 = vmatmul.mubr.bf16.gmra.mrb[0].mxu0 %v427
      %v487 = vpop.f32.mrb[0].mxu0
      %v488 = vadd.f32 %v332, %v487
      %v489 = vpop.f32.mrb[0].mxu0
      %v490 = vpop.f32.mrb[0].mxu0
      %v491 = vadd.f32 %v335, %v490
      %v492 = vpop.f32.mrb[0].mxu0
      %493 = vmatprep.mubr.bf16.mxu0 0
      %494 = vmatmul.mubr.bf16.gmra.mrb[0].mxu0 %v430
      %v495 = vpop.f32.mrb[0].mxu0
      %v496 = vadd.f32 %v340, %v495
      %v497 = vpop.f32.mrb[0].mxu0
      %v498 = vpop.f32.mrb[0].mxu0
      %v499 = vadd.f32 %v343, %v498
      %v500 = vpop.f32.mrb[0].mxu0
      %501 = vmatprep.mubr.bf16.mxu0 0
      %502 = vmatmul.mubr.bf16.gmra.mrb[0].mxu0 %v433
      %v503 = vpop.f32.mrb[0].mxu0
      %v504 = vadd.f32 %v348, %v503
      %v505 = vpop.f32.mrb[0].mxu0
      %v506 = vpop.f32.mrb[0].mxu0
      %v507 = vadd.f32 %v351, %v506
      %v508 = vpop.f32.mrb[0].mxu0
      %509 = vmatprep.mubr.bf16.mxu0 0
      %510 = vmatmul.mubr.bf16.gmra.mrb[0].mxu0 %v436
      %v511 = vpop.f32.mrb[0].mxu0
      %v512 = vadd.f32 %v356, %v511
      %v513 = vpop.f32.mrb[0].mxu0
      %v514 = vpop.f32.mrb[0].mxu0
      %v515 = vadd.f32 %v359, %v514
      %v516 = vpop.f32.mrb[0].mxu0
      %517 = vmatprep.mubr.bf16.mxu0 0
      %518 = vmatmul.mubr.bf16.gmra.mrb[0].mxu0 %v439
      %v519 = vpop.f32.mrb[0].mxu0
      %v520 = vadd.f32 %v364, %v519
      %v521 = vpop.f32.mrb[0].mxu0
      %v522 = vpop.f32.mrb[0].mxu0
      %v523 = vadd.f32 %v367, %v522
      %v524 = vpop.f32.mrb[0].mxu0
      %525 = vmatprep.mubr.bf16.mxu0 0
      %526 = vmatmul.mubr.bf16.gmra.mrb[0].mxu0 %v442
      %v527 = vpop.f32.mrb[0].mxu0
      %v528 = vadd.f32 %v372, %v527
      %v529 = vpop.f32.mrb[0].mxu0
      %v530 = vpop.f32.mrb[0].mxu0
      %v531 = vadd.f32 %v375, %v530
      %v532 = vpop.f32.mrb[0].mxu0
      %533 = vmatprep.mubr.bf16.mxu0 0
      %534 = vmatmul.mubr.bf16.gmra.mrb[0].mxu0 %v445
      %v535 = vpop.f32.mrb[0].mxu0
      %v536 = vadd.f32 %v380, %v535
      %v537 = vpop.f32.mrb[0].mxu0
      %v538 = vpop.f32.mrb[0].mxu0
      %v539 = vadd.f32 %v383, %v538
      %v540 = vpop.f32.mrb[0].mxu0
      %541 = vmatprep.mubr.bf16.mxu0 0
      %542 = vmatmul.mubr.bf16.gmra.mrb[0].mxu0 %v448
      %v543 = vpop.f32.mrb[0].mxu0
      %v544 = vadd.f32 %v388, %v543
      %v545 = vpop.f32.mrb[0].mxu0
      %v546 = vpop.f32.mrb[0].mxu0
      %v547 = vadd.f32 %v391, %v546
      %v548 = vpop.f32.mrb[0].mxu0
      %549 = vmatprep.mubr.bf16.mxu0 0
      %550 = vmatmul.mubr.bf16.gmra.mrb[0].mxu0 %v451
      %v551 = vpop.f32.mrb[0].mxu0
      %v552 = vadd.f32 %v396, %v551
      %v553 = vpop.f32.mrb[0].mxu0
      %v554 = vpop.f32.mrb[0].mxu0
      %v555 = vadd.f32 %v399, %v554
      %v556 = vpop.f32.mrb[0].mxu0
      %557 = vdwg.mxu0
      %v558 = vld [vmem:[%s166 + $0x1] sm:$0xff]
      %v559 = vld [vmem:[%s166 + $0x9] sm:$0xff]
      %v560 = vld [vmem:[%s166 + $0x11] sm:$0xff]
      %v561 = vld [vmem:[%s166 + $0x19] sm:$0xff]
      %v562 = vld [vmem:[%s166 + $0x21] sm:$0xff]
      %v563 = vld [vmem:[%s166 + $0x29] sm:$0xff]
      %v564 = vld [vmem:[%s166 + $0x31] sm:$0xff]
      %v565 = vld [vmem:[%s166 + $0x39] sm:$0xff]
      %v566 = vld [vmem:[%s166 + $0x41] sm:$0xff]
      %v567 = vld [vmem:[%s166 + $0x49] sm:$0xff]
      %v568 = vld [vmem:[%s166 + $0x51] sm:$0xff]
      %v569 = vld [vmem:[%s166 + $0x59] sm:$0xff]
      %v570 = vld [vmem:[%s166 + $0x61] sm:$0xff]
      %v571 = vld [vmem:[%s166 + $0x69] sm:$0xff]
      %v572 = vld [vmem:[%s166 + $0x71] sm:$0xff]
      %v573 = vld [vmem:[%s166 + $0x79] sm:$0xff]
      %v574 = vld [vmem:[%s166 + $0x81] sm:$0xff]
      %v575 = vld [vmem:[%s166 + $0x89] sm:$0xff]
      %v576 = vpack.c.bf16 %v559, %v558
      %v577 = vpack.c.bf16 %v561, %v560
      %v578 = vpack.c.bf16 %v563, %v562
      %v579 = vpack.c.bf16 %v565, %v564
      %v580 = vpack.c.bf16 %v567, %v566
      %v581 = vpack.c.bf16 %v569, %v568
      %v582 = vpack.c.bf16 %v571, %v570
      %v583 = vpack.c.bf16 %v573, %v572
      %v584 = vpack.c.bf16 %v575, %v574
      %s585 = scalar_lea.vmem %s1, 64
      %v586 = vld [vmem:[%s585] sm:$0xf]
      %v587 = vld [vmem:[%s585 + $0x4] sm:$0xf]
      %v588 = vld [vmem:[%s585 + $0x8] sm:$0xf]
      %v589 = vld [vmem:[%s585 + $0xc] sm:$0xf]
      %v590 = vld [vmem:[%s585 + $0x10] sm:$0xf]
      %v591 = vld [vmem:[%s585 + $0x14] sm:$0xf]
      %v592 = vld [vmem:[%s585 + $0x18] sm:$0xf]
      %v593 = vld [vmem:[%s585 + $0x1c] sm:$0xf]
      %v602 = vunpack.c.l.b16 %v586
      %v603 = vunpack.c.l.b16 %v587
      %v604 = vunpack.c.l.b16 %v588
      %v605 = vunpack.c.l.b16 %v589
      %v606 = vunpack.c.l.b16 %v590
      %v607 = vunpack.c.l.b16 %v591
      %v608 = vunpack.c.l.b16 %v592
      %v609 = vunpack.c.l.b16 %v593
      %v610 = vpack.c.b16 %v603, %v602
      %v611 = vpack.c.b16 %v605, %v604
      %v612 = vpack.c.b16 %v607, %v606
      %v613 = vpack.c.b16 %v609, %v608
      %v619 = vsel %vm269, %v576, 0
      %v622 = vsel %vm269, %v577, 0
      %v625 = vsel %vm269, %v578, 0
      %v628 = vsel %vm269, %v579, 0
      %v631 = vsel %vm269, %v580, 0
      %v634 = vsel %vm269, %v581, 0
      %v637 = vsel %vm269, %v582, 0
      %v640 = vsel %vm269, %v583, 0
      %v643 = vsel %vm269, %v584, 0
      %645 = vmatprep.subr.bf16.mxu0 0
      %646 = vmatpush1.bf16.msra.mxu0 %v610
      %647 = vmatprep.subr.bf16.mxu0 0
      %648 = vmatpush1.bf16.msra.mxu0 %v611
      %649 = vmatprep.subr.bf16.mxu0 0
      %650 = vmatpush1.bf16.msra.mxu0 %v612
      %651 = vmatprep.subr.bf16.mxu0 0
      %652 = vmatpush1.bf16.msra.mxu0 %v613
      %653 = vmatprep.subr.bf16.mxu0 0
      %654 = vmatpush1.bf16.msra.mxu0 0
      %655 = vmatprep.subr.bf16.mxu0 0
      %656 = vmatpush1.bf16.msra.mxu0 0
      %657 = vmatprep.subr.bf16.mxu0 0
      %658 = vmatpush1.bf16.msra.mxu0 0
      %659 = vmatprep.subr.bf16.mxu0 0
      %660 = vmatpush1.bf16.msra.mxu0 0
      %661 = vmatprep.subr.bf16.mxu0 0
      %662 = vmatpush1.bf16.msra.mxu0 0
      %663 = vmatprep.subr.bf16.mxu0 0
      %664 = vmatpush1.bf16.msra.mxu0 0
      %665 = vmatprep.subr.bf16.mxu0 0
      %666 = vmatpush1.bf16.msra.mxu0 0
      %667 = vmatprep.subr.bf16.mxu0 0
      %668 = vmatpush1.bf16.msra.mxu0 0
      %669 = vmatprep.subr.bf16.mxu0 0
      %670 = vmatpush1.bf16.msra.mxu0 0
      %671 = vmatprep.subr.bf16.mxu0 0
      %672 = vmatpush1.bf16.msra.mxu0 0
      %673 = vmatprep.subr.bf16.mxu0 0
      %674 = vmatpush1.bf16.msra.mxu0 0
      %675 = vmatprep.subr.bf16.mxu0 0
      %676 = vmatpush1.bf16.msra.mxu0 0
      %677 = vmatprep.mubr.bf16.mxu0 0
      %678 = vmatmul.mubr.bf16.gmra.mrb[0].mxu0 %v619
      %v679 = vpop.f32.mrb[0].mxu0
      %v680 = vadd.f32 0.0, %v679
      %v681 = vpop.f32.mrb[0].mxu0
      %v682 = vpop.f32.mrb[0].mxu0
      %v683 = vadd.f32 0.0, %v682
      %v684 = vpop.f32.mrb[0].mxu0
      %685 = vmatprep.mubr.bf16.mxu0 0
      %686 = vmatmul.mubr.bf16.gmra.mrb[0].mxu0 %v622
      %v687 = vpop.f32.mrb[0].mxu0
      %v688 = vadd.f32 0.0, %v687
      %v689 = vpop.f32.mrb[0].mxu0
      %v690 = vpop.f32.mrb[0].mxu0
      %v691 = vadd.f32 0.0, %v690
      %v692 = vpop.f32.mrb[0].mxu0
      %693 = vmatprep.mubr.bf16.mxu0 0
      %694 = vmatmul.mubr.bf16.gmra.mrb[0].mxu0 %v625
      %v695 = vpop.f32.mrb[0].mxu0
      %v696 = vadd.f32 0.0, %v695
      %v697 = vpop.f32.mrb[0].mxu0
      %v698 = vpop.f32.mrb[0].mxu0
      %v699 = vadd.f32 0.0, %v698
      %v700 = vpop.f32.mrb[0].mxu0
      %701 = vmatprep.mubr.bf16.mxu0 0
      %702 = vmatmul.mubr.bf16.gmra.mrb[0].mxu0 %v628
      %v703 = vpop.f32.mrb[0].mxu0
      %v704 = vadd.f32 0.0, %v703
      %v705 = vpop.f32.mrb[0].mxu0
      %v706 = vpop.f32.mrb[0].mxu0
      %v707 = vadd.f32 0.0, %v706
      %v708 = vpop.f32.mrb[0].mxu0
      %709 = vmatprep.mubr.bf16.mxu0 0
      %710 = vmatmul.mubr.bf16.gmra.mrb[0].mxu0 %v631
      %v711 = vpop.f32.mrb[0].mxu0
      %v712 = vadd.f32 0.0, %v711
      %v713 = vpop.f32.mrb[0].mxu0
      %v714 = vpop.f32.mrb[0].mxu0
      %v715 = vadd.f32 0.0, %v714
      %v716 = vpop.f32.mrb[0].mxu0
      %717 = vmatprep.mubr.bf16.mxu0 0
      %718 = vmatmul.mubr.bf16.gmra.mrb[0].mxu0 %v634
      %v719 = vpop.f32.mrb[0].mxu0
      %v720 = vadd.f32 0.0, %v719
      %v721 = vpop.f32.mrb[0].mxu0
      %v722 = vpop.f32.mrb[0].mxu0
      %v723 = vadd.f32 0.0, %v722
      %v724 = vpop.f32.mrb[0].mxu0
      %725 = vmatprep.mubr.bf16.mxu0 0
      %726 = vmatmul.mubr.bf16.gmra.mrb[0].mxu0 %v637
      %v727 = vpop.f32.mrb[0].mxu0
      %v728 = vadd.f32 0.0, %v727
      %v729 = vpop.f32.mrb[0].mxu0
      %v730 = vpop.f32.mrb[0].mxu0
      %v731 = vadd.f32 0.0, %v730
      %v732 = vpop.f32.mrb[0].mxu0
      %733 = vmatprep.mubr.bf16.mxu0 0
      %734 = vmatmul.mubr.bf16.gmra.mrb[0].mxu0 %v640
      %v735 = vpop.f32.mrb[0].mxu0
      %v736 = vadd.f32 0.0, %v735
      %v737 = vpop.f32.mrb[0].mxu0
      %v738 = vpop.f32.mrb[0].mxu0
      %v739 = vadd.f32 0.0, %v738
      %v740 = vpop.f32.mrb[0].mxu0
      %741 = vmatprep.mubr.bf16.mxu0 0
      %742 = vmatmul.mubr.bf16.gmra.mrb[0].mxu0 %v643
      %v743 = vpop.f32.mrb[0].mxu0
      %v744 = vadd.f32 0.0, %v743
      %v745 = vpop.f32.mrb[0].mxu0
      %v746 = vpop.f32.mrb[0].mxu0
      %v747 = vadd.f32 0.0, %v746
      %v748 = vpop.f32.mrb[0].mxu0
      %749 = vdwg.mxu0
      %v750 = vadd.f32 %v488, %v680
      %v751 = vadd.f32 %v491, %v683
      %v752 = vadd.f32 %v496, %v688
      %v753 = vadd.f32 %v499, %v691
      %v754 = vadd.f32 %v504, %v696
      %v755 = vadd.f32 %v507, %v699
      %v756 = vadd.f32 %v512, %v704
      %v757 = vadd.f32 %v515, %v707
      %v758 = vadd.f32 %v520, %v712
      %v759 = vadd.f32 %v523, %v715
      %v760 = vadd.f32 %v528, %v720
      %v761 = vadd.f32 %v531, %v723
      %v762 = vadd.f32 %v536, %v728
      %v763 = vadd.f32 %v539, %v731
      %v764 = vadd.f32 %v544, %v736
      %v765 = vadd.f32 %v547, %v739
      %v766 = vadd.f32 %v552, %v744
      %v767 = vadd.f32 %v555, %v747
      %v768 = vld [vmem:[%s166 + $0x9] sm:$0xff]
      %v769 = vld [vmem:[%s166 + $0x11] sm:$0xff]
      %v770 = vld [vmem:[%s166 + $0x19] sm:$0xff]
      %v771 = vld [vmem:[%s166 + $0x21] sm:$0xff]
      %v772 = vld [vmem:[%s166 + $0x29] sm:$0xff]
      %v773 = vld [vmem:[%s166 + $0x31] sm:$0xff]
      %v774 = vld [vmem:[%s166 + $0x39] sm:$0xff]
      %v775 = vld [vmem:[%s166 + $0x41] sm:$0xff]
      %v776 = vld [vmem:[%s166 + $0x49] sm:$0xff]
      %v777 = vld [vmem:[%s166 + $0x51] sm:$0xff]
      %v778 = vld [vmem:[%s166 + $0x59] sm:$0xff]
      %v779 = vld [vmem:[%s166 + $0x61] sm:$0xff]
      %v780 = vld [vmem:[%s166 + $0x69] sm:$0xff]
      %v781 = vld [vmem:[%s166 + $0x71] sm:$0xff]
      %v782 = vld [vmem:[%s166 + $0x79] sm:$0xff]
      %v783 = vld [vmem:[%s166 + $0x81] sm:$0xff]
      %v784 = vld [vmem:[%s166 + $0x89] sm:$0xff]
      %v785 = vld [vmem:[%s166 + $0x91] sm:$0xff]
      %v786 = vpack.c.bf16 %v769, %v768
      %v787 = vpack.c.bf16 %v771, %v770
      %v788 = vpack.c.bf16 %v773, %v772
      %v789 = vpack.c.bf16 %v775, %v774
      %v790 = vpack.c.bf16 %v777, %v776
      %v791 = vpack.c.bf16 %v779, %v778
      %v792 = vpack.c.bf16 %v781, %v780
      %v793 = vpack.c.bf16 %v783, %v782
      %v794 = vpack.c.bf16 %v785, %v784
      %s795 = scalar_lea.vmem %s1, 96
      %v796 = vld [vmem:[%s795] sm:$0xf]
      %v797 = vld [vmem:[%s795 + $0x4] sm:$0xf]
      %v798 = vld [vmem:[%s795 + $0x8] sm:$0xf]
      %v799 = vld [vmem:[%s795 + $0xc] sm:$0xf]
      %v800 = vld [vmem:[%s795 + $0x10] sm:$0xf]
      %v801 = vld [vmem:[%s795 + $0x14] sm:$0xf]
      %v802 = vld [vmem:[%s795 + $0x18] sm:$0xf]
      %v803 = vld [vmem:[%s795 + $0x1c] sm:$0xf]
      %v812 = vunpack.c.l.b16 %v796
      %v813 = vunpack.c.l.b16 %v797
      %v814 = vunpack.c.l.b16 %v798
      %v815 = vunpack.c.l.b16 %v799
      %v816 = vunpack.c.l.b16 %v800
      %v817 = vunpack.c.l.b16 %v801
      %v818 = vunpack.c.l.b16 %v802
      %v819 = vunpack.c.l.b16 %v803
      %v820 = vpack.c.b16 %v813, %v812
      %v821 = vpack.c.b16 %v815, %v814
      %v822 = vpack.c.b16 %v817, %v816
      %v823 = vpack.c.b16 %v819, %v818
      %v829 = vsel %vm269, %v786, 0
      %v832 = vsel %vm269, %v787, 0
      %v835 = vsel %vm269, %v788, 0
      %v838 = vsel %vm269, %v789, 0
      %v841 = vsel %vm269, %v790, 0
      %v844 = vsel %vm269, %v791, 0
      %v847 = vsel %vm269, %v792, 0
      %v850 = vsel %vm269, %v793, 0
      %v853 = vsel %vm269, %v794, 0
      %855 = vmatprep.subr.bf16.mxu0 0
      %856 = vmatpush1.bf16.msra.mxu0 %v820
      %857 = vmatprep.subr.bf16.mxu0 0
      %858 = vmatpush1.bf16.msra.mxu0 %v821
      %859 = vmatprep.subr.bf16.mxu0 0
      %860 = vmatpush1.bf16.msra.mxu0 %v822
      %861 = vmatprep.subr.bf16.mxu0 0
      %862 = vmatpush1.bf16.msra.mxu0 %v823
      %863 = vmatprep.subr.bf16.mxu0 0
      %864 = vmatpush1.bf16.msra.mxu0 0
      %865 = vmatprep.subr.bf16.mxu0 0
      %866 = vmatpush1.bf16.msra.mxu0 0
      %867 = vmatprep.subr.bf16.mxu0 0
      %868 = vmatpush1.bf16.msra.mxu0 0
      %869 = vmatprep.subr.bf16.mxu0 0
      %870 = vmatpush1.bf16.msra.mxu0 0
      %871 = vmatprep.subr.bf16.mxu0 0
      %872 = vmatpush1.bf16.msra.mxu0 0
      %873 = vmatprep.subr.bf16.mxu0 0
      %874 = vmatpush1.bf16.msra.mxu0 0
      %875 = vmatprep.subr.bf16.mxu0 0
      %876 = vmatpush1.bf16.msra.mxu0 0
      %877 = vmatprep.subr.bf16.mxu0 0
      %878 = vmatpush1.bf16.msra.mxu0 0
      %879 = vmatprep.subr.bf16.mxu0 0
      %880 = vmatpush1.bf16.msra.mxu0 0
      %881 = vmatprep.subr.bf16.mxu0 0
      %882 = vmatpush1.bf16.msra.mxu0 0
      %883 = vmatprep.subr.bf16.mxu0 0
      %884 = vmatpush1.bf16.msra.mxu0 0
      %885 = vmatprep.subr.bf16.mxu0 0
      %886 = vmatpush1.bf16.msra.mxu0 0
      %887 = vmatprep.mubr.bf16.mxu0 0
      %888 = vmatmul.mubr.bf16.gmra.mrb[0].mxu0 %v829
      %v889 = vpop.f32.mrb[0].mxu0
      %v890 = vadd.f32 0.0, %v889
      %v891 = vpop.f32.mrb[0].mxu0
      %v892 = vpop.f32.mrb[0].mxu0
      %v893 = vadd.f32 0.0, %v892
      %v894 = vpop.f32.mrb[0].mxu0
      %895 = vmatprep.mubr.bf16.mxu0 0
      %896 = vmatmul.mubr.bf16.gmra.mrb[0].mxu0 %v832
      %v897 = vpop.f32.mrb[0].mxu0
      %v898 = vadd.f32 0.0, %v897
      %v899 = vpop.f32.mrb[0].mxu0
      %v900 = vpop.f32.mrb[0].mxu0
      %v901 = vadd.f32 0.0, %v900
      %v902 = vpop.f32.mrb[0].mxu0
      %903 = vmatprep.mubr.bf16.mxu0 0
      %904 = vmatmul.mubr.bf16.gmra.mrb[0].mxu0 %v835
      %v905 = vpop.f32.mrb[0].mxu0
      %v906 = vadd.f32 0.0, %v905
      %v907 = vpop.f32.mrb[0].mxu0
      %v908 = vpop.f32.mrb[0].mxu0
      %v909 = vadd.f32 0.0, %v908
      %v910 = vpop.f32.mrb[0].mxu0
      %911 = vmatprep.mubr.bf16.mxu0 0
      %912 = vmatmul.mubr.bf16.gmra.mrb[0].mxu0 %v838
      %v913 = vpop.f32.mrb[0].mxu0
      %v914 = vadd.f32 0.0, %v913
      %v915 = vpop.f32.mrb[0].mxu0
      %v916 = vpop.f32.mrb[0].mxu0
      %v917 = vadd.f32 0.0, %v916
      %v918 = vpop.f32.mrb[0].mxu0
      %919 = vmatprep.mubr.bf16.mxu0 0
      %920 = vmatmul.mubr.bf16.gmra.mrb[0].mxu0 %v841
      %v921 = vpop.f32.mrb[0].mxu0
      %v922 = vadd.f32 0.0, %v921
      %v923 = vpop.f32.mrb[0].mxu0
      %v924 = vpop.f32.mrb[0].mxu0
      %v925 = vadd.f32 0.0, %v924
      %v926 = vpop.f32.mrb[0].mxu0
      %927 = vmatprep.mubr.bf16.mxu0 0
      %928 = vmatmul.mubr.bf16.gmra.mrb[0].mxu0 %v844
      %v929 = vpop.f32.mrb[0].mxu0
      %v930 = vadd.f32 0.0, %v929
      %v931 = vpop.f32.mrb[0].mxu0
      %v932 = vpop.f32.mrb[0].mxu0
      %v933 = vadd.f32 0.0, %v932
      %v934 = vpop.f32.mrb[0].mxu0
      %935 = vmatprep.mubr.bf16.mxu0 0
      %936 = vmatmul.mubr.bf16.gmra.mrb[0].mxu0 %v847
      %v937 = vpop.f32.mrb[0].mxu0
      %v938 = vadd.f32 0.0, %v937
      %v939 = vpop.f32.mrb[0].mxu0
      %v940 = vpop.f32.mrb[0].mxu0
      %v941 = vadd.f32 0.0, %v940
      %v942 = vpop.f32.mrb[0].mxu0
      %943 = vmatprep.mubr.bf16.mxu0 0
      %944 = vmatmul.mubr.bf16.gmra.mrb[0].mxu0 %v850
      %v945 = vpop.f32.mrb[0].mxu0
      %v946 = vadd.f32 0.0, %v945
      %v947 = vpop.f32.mrb[0].mxu0
      %v948 = vpop.f32.mrb[0].mxu0
      %v949 = vadd.f32 0.0, %v948
      %v950 = vpop.f32.mrb[0].mxu0
      %951 = vmatprep.mubr.bf16.mxu0 0
      %952 = vmatmul.mubr.bf16.gmra.mrb[0].mxu0 %v853
      %v953 = vpop.f32.mrb[0].mxu0
      %v954 = vadd.f32 0.0, %v953
      %v955 = vpop.f32.mrb[0].mxu0
      %v956 = vpop.f32.mrb[0].mxu0
      %v957 = vadd.f32 0.0, %v956
      %v958 = vpop.f32.mrb[0].mxu0
      %959 = vdwg.mxu0
      %v960 = vadd.f32 %v750, %v890
      %v961 = vadd.f32 %v751, %v893
      %v962 = vadd.f32 %v752, %v898
      %v963 = vadd.f32 %v753, %v901
      %v964 = vadd.f32 %v754, %v906
      %v965 = vadd.f32 %v755, %v909
      %v966 = vadd.f32 %v756, %v914
      %v967 = vadd.f32 %v757, %v917
      %v968 = vadd.f32 %v758, %v922
      %v969 = vadd.f32 %v759, %v925
      %v970 = vadd.f32 %v760, %v930
      %v971 = vadd.f32 %v761, %v933
      %v972 = vadd.f32 %v762, %v938
      %v973 = vadd.f32 %v763, %v941
      %v974 = vadd.f32 %v764, %v946
      %v975 = vadd.f32 %v765, %v949
      %v976 = vadd.f32 %v766, %v954
      %v977 = vadd.f32 %v767, %v957
      %v978 = vld [vmem:[%s208 + $0x9] sm:$0xff]
      %v979 = vld [vmem:[%s208 + $0x11] sm:$0xff]
      %v980 = vld [vmem:[%s208 + $0x19] sm:$0xff]
      %v981 = vld [vmem:[%s208 + $0x21] sm:$0xff]
      %v982 = vld [vmem:[%s208 + $0x29] sm:$0xff]
      %v983 = vld [vmem:[%s208 + $0x31] sm:$0xff]
      %v984 = vld [vmem:[%s208 + $0x39] sm:$0xff]
      %v985 = vld [vmem:[%s208 + $0x41] sm:$0xff]
      %v986 = vld [vmem:[%s208 + $0x49] sm:$0xff]
      %v987 = vld [vmem:[%s208 + $0x51] sm:$0xff]
      %v988 = vld [vmem:[%s208 + $0x59] sm:$0xff]
      %v989 = vld [vmem:[%s208 + $0x61] sm:$0xff]
      %v990 = vld [vmem:[%s208 + $0x69] sm:$0xff]
      %v991 = vld [vmem:[%s208 + $0x71] sm:$0xff]
      %v992 = vld [vmem:[%s208 + $0x79] sm:$0xff]
      %v993 = vld [vmem:[%s208 + $0x81] sm:$0xff]
      %v994 = vld [vmem:[%s208 + $0x89] sm:$0xff]
      %v995 = vld [vmem:[%s208 + $0x91] sm:$0xff]
      %v996 = vpack.c.bf16 %v979, %v978
      %v997 = vpack.c.bf16 %v981, %v980
      %v998 = vpack.c.bf16 %v983, %v982
      %v999 = vpack.c.bf16 %v985, %v984
      %v1000 = vpack.c.bf16 %v987, %v986
      %v1001 = vpack.c.bf16 %v989, %v988
      %v1002 = vpack.c.bf16 %v991, %v990
      %v1003 = vpack.c.bf16 %v993, %v992
      %v1004 = vpack.c.bf16 %v995, %v994
      %s1005 = scalar_lea.vmem %s1, 128
      %v1006 = vld [vmem:[%s1005] sm:$0xf]
      %v1007 = vld [vmem:[%s1005 + $0x4] sm:$0xf]
      %v1008 = vld [vmem:[%s1005 + $0x8] sm:$0xf]
      %v1009 = vld [vmem:[%s1005 + $0xc] sm:$0xf]
      %v1010 = vld [vmem:[%s1005 + $0x10] sm:$0xf]
      %v1011 = vld [vmem:[%s1005 + $0x14] sm:$0xf]
      %v1012 = vld [vmem:[%s1005 + $0x18] sm:$0xf]
      %v1013 = vld [vmem:[%s1005 + $0x1c] sm:$0xf]
      %v1022 = vunpack.c.l.b16 %v1006
      %v1023 = vunpack.c.l.b16 %v1007
      %v1024 = vunpack.c.l.b16 %v1008
      %v1025 = vunpack.c.l.b16 %v1009
      %v1026 = vunpack.c.l.b16 %v1010
      %v1027 = vunpack.c.l.b16 %v1011
      %v1028 = vunpack.c.l.b16 %v1012
      %v1029 = vunpack.c.l.b16 %v1013
      %v1030 = vpack.c.b16 %v1023, %v1022
      %v1031 = vpack.c.b16 %v1025, %v1024
      %v1032 = vpack.c.b16 %v1027, %v1026
      %v1033 = vpack.c.b16 %v1029, %v1028
      %v1039 = vsel %vm269, %v996, 0
      %v1042 = vsel %vm269, %v997, 0
      %v1045 = vsel %vm269, %v998, 0
      %v1048 = vsel %vm269, %v999, 0
      %v1051 = vsel %vm269, %v1000, 0
      %v1054 = vsel %vm269, %v1001, 0
      %v1057 = vsel %vm269, %v1002, 0
      %v1060 = vsel %vm269, %v1003, 0
      %v1063 = vsel %vm269, %v1004, 0
      %1065 = vmatprep.subr.bf16.mxu0 0
      %1066 = vmatpush1.bf16.msra.mxu0 %v1030
      %1067 = vmatprep.subr.bf16.mxu0 0
      %1068 = vmatpush1.bf16.msra.mxu0 %v1031
      %1069 = vmatprep.subr.bf16.mxu0 0
      %1070 = vmatpush1.bf16.msra.mxu0 %v1032
      %1071 = vmatprep.subr.bf16.mxu0 0
      %1072 = vmatpush1.bf16.msra.mxu0 %v1033
      %1073 = vmatprep.subr.bf16.mxu0 0
      %1074 = vmatpush1.bf16.msra.mxu0 0
      %1075 = vmatprep.subr.bf16.mxu0 0
      %1076 = vmatpush1.bf16.msra.mxu0 0
      %1077 = vmatprep.subr.bf16.mxu0 0
      %1078 = vmatpush1.bf16.msra.mxu0 0
      %1079 = vmatprep.subr.bf16.mxu0 0
      %1080 = vmatpush1.bf16.msra.mxu0 0
      %1081 = vmatprep.subr.bf16.mxu0 0
      %1082 = vmatpush1.bf16.msra.mxu0 0
      %1083 = vmatprep.subr.bf16.mxu0 0
      %1084 = vmatpush1.bf16.msra.mxu0 0
      %1085 = vmatprep.subr.bf16.mxu0 0
      %1086 = vmatpush1.bf16.msra.mxu0 0
      %1087 = vmatprep.subr.bf16.mxu0 0
      %1088 = vmatpush1.bf16.msra.mxu0 0
      %1089 = vmatprep.subr.bf16.mxu0 0
      %1090 = vmatpush1.bf16.msra.mxu0 0
      %1091 = vmatprep.subr.bf16.mxu0 0
      %1092 = vmatpush1.bf16.msra.mxu0 0
      %1093 = vmatprep.subr.bf16.mxu0 0
      %1094 = vmatpush1.bf16.msra.mxu0 0
      %1095 = vmatprep.subr.bf16.mxu0 0
      %1096 = vmatpush1.bf16.msra.mxu0 0
      %1097 = vmatprep.mubr.bf16.mxu0 0
      %1098 = vmatmul.mubr.bf16.gmra.mrb[0].mxu0 %v1039
      %v1099 = vpop.f32.mrb[0].mxu0
      %v1100 = vadd.f32 0.0, %v1099
      %v1101 = vpop.f32.mrb[0].mxu0
      %v1102 = vpop.f32.mrb[0].mxu0
      %v1103 = vadd.f32 0.0, %v1102
      %v1104 = vpop.f32.mrb[0].mxu0
      %1105 = vmatprep.mubr.bf16.mxu0 0
      %1106 = vmatmul.mubr.bf16.gmra.mrb[0].mxu0 %v1042
      %v1107 = vpop.f32.mrb[0].mxu0
      %v1108 = vadd.f32 0.0, %v1107
      %v1109 = vpop.f32.mrb[0].mxu0
      %v1110 = vpop.f32.mrb[0].mxu0
      %v1111 = vadd.f32 0.0, %v1110
      %v1112 = vpop.f32.mrb[0].mxu0
      %1113 = vmatprep.mubr.bf16.mxu0 0
      %1114 = vmatmul.mubr.bf16.gmra.mrb[0].mxu0 %v1045
      %v1115 = vpop.f32.mrb[0].mxu0
      %v1116 = vadd.f32 0.0, %v1115
      %v1117 = vpop.f32.mrb[0].mxu0
      %v1118 = vpop.f32.mrb[0].mxu0
      %v1119 = vadd.f32 0.0, %v1118
      %v1120 = vpop.f32.mrb[0].mxu0
      %1121 = vmatprep.mubr.bf16.mxu0 0
      %1122 = vmatmul.mubr.bf16.gmra.mrb[0].mxu0 %v1048
      %v1123 = vpop.f32.mrb[0].mxu0
      %v1124 = vadd.f32 0.0, %v1123
      %v1125 = vpop.f32.mrb[0].mxu0
      %v1126 = vpop.f32.mrb[0].mxu0
      %v1127 = vadd.f32 0.0, %v1126
      %v1128 = vpop.f32.mrb[0].mxu0
      %1129 = vmatprep.mubr.bf16.mxu0 0
      %1130 = vmatmul.mubr.bf16.gmra.mrb[0].mxu0 %v1051
      %v1131 = vpop.f32.mrb[0].mxu0
      %v1132 = vadd.f32 0.0, %v1131
      %v1133 = vpop.f32.mrb[0].mxu0
      %v1134 = vpop.f32.mrb[0].mxu0
      %v1135 = vadd.f32 0.0, %v1134
      %v1136 = vpop.f32.mrb[0].mxu0
      %1137 = vmatprep.mubr.bf16.mxu0 0
      %1138 = vmatmul.mubr.bf16.gmra.mrb[0].mxu0 %v1054
      %v1139 = vpop.f32.mrb[0].mxu0
      %v1140 = vadd.f32 0.0, %v1139
      %v1141 = vpop.f32.mrb[0].mxu0
      %v1142 = vpop.f32.mrb[0].mxu0
      %v1143 = vadd.f32 0.0, %v1142
      %v1144 = vpop.f32.mrb[0].mxu0
      %1145 = vmatprep.mubr.bf16.mxu0 0
      %1146 = vmatmul.mubr.bf16.gmra.mrb[0].mxu0 %v1057
      %v1147 = vpop.f32.mrb[0].mxu0
      %v1148 = vadd.f32 0.0, %v1147
      %v1149 = vpop.f32.mrb[0].mxu0
      %v1150 = vpop.f32.mrb[0].mxu0
      %v1151 = vadd.f32 0.0, %v1150
      %v1152 = vpop.f32.mrb[0].mxu0
      %1153 = vmatprep.mubr.bf16.mxu0 0
      %1154 = vmatmul.mubr.bf16.gmra.mrb[0].mxu0 %v1060
      %v1155 = vpop.f32.mrb[0].mxu0
      %v1156 = vadd.f32 0.0, %v1155
      %v1157 = vpop.f32.mrb[0].mxu0
      %v1158 = vpop.f32.mrb[0].mxu0
      %v1159 = vadd.f32 0.0, %v1158
      %v1160 = vpop.f32.mrb[0].mxu0
      %1161 = vmatprep.mubr.bf16.mxu0 0
      %1162 = vmatmul.mubr.bf16.gmra.mrb[0].mxu0 %v1063
      %v1163 = vpop.f32.mrb[0].mxu0
      %v1164 = vadd.f32 0.0, %v1163
      %v1165 = vpop.f32.mrb[0].mxu0
      %v1166 = vpop.f32.mrb[0].mxu0
      %v1167 = vadd.f32 0.0, %v1166
      %v1168 = vpop.f32.mrb[0].mxu0
      %1169 = vdwg.mxu0
      %v1170 = vadd.f32 %v960, %v1100
      %v1171 = vadd.f32 %v961, %v1103
      %v1172 = vadd.f32 %v962, %v1108
      %v1173 = vadd.f32 %v963, %v1111
      %v1174 = vadd.f32 %v964, %v1116
      %v1175 = vadd.f32 %v965, %v1119
      %v1176 = vadd.f32 %v966, %v1124
      %v1177 = vadd.f32 %v967, %v1127
      %v1178 = vadd.f32 %v968, %v1132
      %v1179 = vadd.f32 %v969, %v1135
      %v1180 = vadd.f32 %v970, %v1140
      %v1181 = vadd.f32 %v971, %v1143
      %v1182 = vadd.f32 %v972, %v1148
      %v1183 = vadd.f32 %v973, %v1151
      %v1184 = vadd.f32 %v974, %v1156
      %v1185 = vadd.f32 %v975, %v1159
      %v1186 = vadd.f32 %v976, %v1164
      %v1187 = vadd.f32 %v977, %v1167
      %v1188 = vld [vmem:[%s166 + $0xa] sm:$0xff]
      %v1189 = vld [vmem:[%s166 + $0x12] sm:$0xff]
      %v1190 = vld [vmem:[%s166 + $0x1a] sm:$0xff]
      %v1191 = vld [vmem:[%s166 + $0x22] sm:$0xff]
      %v1192 = vld [vmem:[%s166 + $0x2a] sm:$0xff]
      %v1193 = vld [vmem:[%s166 + $0x32] sm:$0xff]
      %v1194 = vld [vmem:[%s166 + $0x3a] sm:$0xff]
      %v1195 = vld [vmem:[%s166 + $0x42] sm:$0xff]
      %v1196 = vld [vmem:[%s166 + $0x4a] sm:$0xff]
      %v1197 = vld [vmem:[%s166 + $0x52] sm:$0xff]
      %v1198 = vld [vmem:[%s166 + $0x5a] sm:$0xff]
      %v1199 = vld [vmem:[%s166 + $0x62] sm:$0xff]
      %v1200 = vld [vmem:[%s166 + $0x6a] sm:$0xff]
      %v1201 = vld [vmem:[%s166 + $0x72] sm:$0xff]
      %v1202 = vld [vmem:[%s166 + $0x7a] sm:$0xff]
      %v1203 = vld [vmem:[%s166 + $0x82] sm:$0xff]
      %v1204 = vld [vmem:[%s166 + $0x8a] sm:$0xff]
      %v1205 = vld [vmem:[%s166 + $0x92] sm:$0xff]
      %v1206 = vpack.c.bf16 %v1189, %v1188
      %v1207 = vpack.c.bf16 %v1191, %v1190
      %v1208 = vpack.c.bf16 %v1193, %v1192
      %v1209 = vpack.c.bf16 %v1195, %v1194
      %v1210 = vpack.c.bf16 %v1197, %v1196
      %v1211 = vpack.c.bf16 %v1199, %v1198
      %v1212 = vpack.c.bf16 %v1201, %v1200
      %v1213 = vpack.c.bf16 %v1203, %v1202
      %v1214 = vpack.c.bf16 %v1205, %v1204
      %s1215 = scalar_lea.vmem %s1, 160
      %v1216 = vld [vmem:[%s1215] sm:$0xf]
      %v1217 = vld [vmem:[%s1215 + $0x4] sm:$0xf]
      %v1218 = vld [vmem:[%s1215 + $0x8] sm:$0xf]
      %v1219 = vld [vmem:[%s1215 + $0xc] sm:$0xf]
      %v1220 = vld [vmem:[%s1215 + $0x10] sm:$0xf]
      %v1221 = vld [vmem:[%s1215 + $0x14] sm:$0xf]
      %v1222 = vld [vmem:[%s1215 + $0x18] sm:$0xf]
      %v1223 = vld [vmem:[%s1215 + $0x1c] sm:$0xf]
      %v1232 = vunpack.c.l.b16 %v1216
      %v1233 = vunpack.c.l.b16 %v1217
      %v1234 = vunpack.c.l.b16 %v1218
      %v1235 = vunpack.c.l.b16 %v1219
      %v1236 = vunpack.c.l.b16 %v1220
      %v1237 = vunpack.c.l.b16 %v1221
      %v1238 = vunpack.c.l.b16 %v1222
      %v1239 = vunpack.c.l.b16 %v1223
      %v1240 = vpack.c.b16 %v1233, %v1232
      %v1241 = vpack.c.b16 %v1235, %v1234
      %v1242 = vpack.c.b16 %v1237, %v1236
      %v1243 = vpack.c.b16 %v1239, %v1238
      %v1249 = vsel %vm269, %v1206, 0
      %v1252 = vsel %vm269, %v1207, 0
      %v1255 = vsel %vm269, %v1208, 0
      %v1258 = vsel %vm269, %v1209, 0
      %v1261 = vsel %vm269, %v1210, 0
      %v1264 = vsel %vm269, %v1211, 0
      %v1267 = vsel %vm269, %v1212, 0
      %v1270 = vsel %vm269, %v1213, 0
      %v1273 = vsel %vm269, %v1214, 0
      %1275 = vmatprep.subr.bf16.mxu0 0
      %1276 = vmatpush1.bf16.msra.mxu0 %v1240
      %1277 = vmatprep.subr.bf16.mxu0 0
      %1278 = vmatpush1.bf16.msra.mxu0 %v1241
      %1279 = vmatprep.subr.bf16.mxu0 0
      %1280 = vmatpush1.bf16.msra.mxu0 %v1242
      %1281 = vmatprep.subr.bf16.mxu0 0
      %1282 = vmatpush1.bf16.msra.mxu0 %v1243
      %1283 = vmatprep.subr.bf16.mxu0 0
      %1284 = vmatpush1.bf16.msra.mxu0 0
      %1285 = vmatprep.subr.bf16.mxu0 0
      %1286 = vmatpush1.bf16.msra.mxu0 0
      %1287 = vmatprep.subr.bf16.mxu0 0
      %1288 = vmatpush1.bf16.msra.mxu0 0
      %1289 = vmatprep.subr.bf16.mxu0 0
      %1290 = vmatpush1.bf16.msra.mxu0 0
      %1291 = vmatprep.subr.bf16.mxu0 0
      %1292 = vmatpush1.bf16.msra.mxu0 0
      %1293 = vmatprep.subr.bf16.mxu0 0
      %1294 = vmatpush1.bf16.msra.mxu0 0
      %1295 = vmatprep.subr.bf16.mxu0 0
      %1296 = vmatpush1.bf16.msra.mxu0 0
      %1297 = vmatprep.subr.bf16.mxu0 0
      %1298 = vmatpush1.bf16.msra.mxu0 0
      %1299 = vmatprep.subr.bf16.mxu0 0
      %1300 = vmatpush1.bf16.msra.mxu0 0
      %1301 = vmatprep.subr.bf16.mxu0 0
      %1302 = vmatpush1.bf16.msra.mxu0 0
      %1303 = vmatprep.subr.bf16.mxu0 0
      %1304 = vmatpush1.bf16.msra.mxu0 0
      %1305 = vmatprep.subr.bf16.mxu0 0
      %1306 = vmatpush1.bf16.msra.mxu0 0
      %1307 = vmatprep.mubr.bf16.mxu0 0
      %1308 = vmatmul.mubr.bf16.gmra.mrb[0].mxu0 %v1249
      %v1309 = vpop.f32.mrb[0].mxu0
      %v1310 = vadd.f32 0.0, %v1309
      %v1311 = vpop.f32.mrb[0].mxu0
      %v1312 = vpop.f32.mrb[0].mxu0
      %v1313 = vadd.f32 0.0, %v1312
      %v1314 = vpop.f32.mrb[0].mxu0
      %1315 = vmatprep.mubr.bf16.mxu0 0
      %1316 = vmatmul.mubr.bf16.gmra.mrb[0].mxu0 %v1252
      %v1317 = vpop.f32.mrb[0].mxu0
      %v1318 = vadd.f32 0.0, %v1317
      %v1319 = vpop.f32.mrb[0].mxu0
      %v1320 = vpop.f32.mrb[0].mxu0
      %v1321 = vadd.f32 0.0, %v1320
      %v1322 = vpop.f32.mrb[0].mxu0
      %1323 = vmatprep.mubr.bf16.mxu0 0
      %1324 = vmatmul.mubr.bf16.gmra.mrb[0].mxu0 %v1255
      %v1325 = vpop.f32.mrb[0].mxu0
      %v1326 = vadd.f32 0.0, %v1325
      %v1327 = vpop.f32.mrb[0].mxu0
      %v1328 = vpop.f32.mrb[0].mxu0
      %v1329 = vadd.f32 0.0, %v1328
      %v1330 = vpop.f32.mrb[0].mxu0
      %1331 = vmatprep.mubr.bf16.mxu0 0
      %1332 = vmatmul.mubr.bf16.gmra.mrb[0].mxu0 %v1258
      %v1333 = vpop.f32.mrb[0].mxu0
      %v1334 = vadd.f32 0.0, %v1333
      %v1335 = vpop.f32.mrb[0].mxu0
      %v1336 = vpop.f32.mrb[0].mxu0
      %v1337 = vadd.f32 0.0, %v1336
      %v1338 = vpop.f32.mrb[0].mxu0
      %1339 = vmatprep.mubr.bf16.mxu0 0
      %1340 = vmatmul.mubr.bf16.gmra.mrb[0].mxu0 %v1261
      %v1341 = vpop.f32.mrb[0].mxu0
      %v1342 = vadd.f32 0.0, %v1341
      %v1343 = vpop.f32.mrb[0].mxu0
      %v1344 = vpop.f32.mrb[0].mxu0
      %v1345 = vadd.f32 0.0, %v1344
      %v1346 = vpop.f32.mrb[0].mxu0
      %1347 = vmatprep.mubr.bf16.mxu0 0
      %1348 = vmatmul.mubr.bf16.gmra.mrb[0].mxu0 %v1264
      %v1349 = vpop.f32.mrb[0].mxu0
      %v1350 = vadd.f32 0.0, %v1349
      %v1351 = vpop.f32.mrb[0].mxu0
      %v1352 = vpop.f32.mrb[0].mxu0
      %v1353 = vadd.f32 0.0, %v1352
      %v1354 = vpop.f32.mrb[0].mxu0
      %1355 = vmatprep.mubr.bf16.mxu0 0
      %1356 = vmatmul.mubr.bf16.gmra.mrb[0].mxu0 %v1267
      %v1357 = vpop.f32.mrb[0].mxu0
      %v1358 = vadd.f32 0.0, %v1357
      %v1359 = vpop.f32.mrb[0].mxu0
      %v1360 = vpop.f32.mrb[0].mxu0
      %v1361 = vadd.f32 0.0, %v1360
      %v1362 = vpop.f32.mrb[0].mxu0
      %1363 = vmatprep.mubr.bf16.mxu0 0
      %1364 = vmatmul.mubr.bf16.gmra.mrb[0].mxu0 %v1270
      %v1365 = vpop.f32.mrb[0].mxu0
      %v1366 = vadd.f32 0.0, %v1365
      %v1367 = vpop.f32.mrb[0].mxu0
      %v1368 = vpop.f32.mrb[0].mxu0
      %v1369 = vadd.f32 0.0, %v1368
      %v1370 = vpop.f32.mrb[0].mxu0
      %1371 = vmatprep.mubr.bf16.mxu0 0
      %1372 = vmatmul.mubr.bf16.gmra.mrb[0].mxu0 %v1273
      %v1373 = vpop.f32.mrb[0].mxu0
      %v1374 = vadd.f32 0.0, %v1373
      %v1375 = vpop.f32.mrb[0].mxu0
      %v1376 = vpop.f32.mrb[0].mxu0
      %v1377 = vadd.f32 0.0, %v1376
      %v1378 = vpop.f32.mrb[0].mxu0
      %1379 = vdwg.mxu0
      %v1380 = vadd.f32 %v1170, %v1310
      %v1381 = vadd.f32 %v1171, %v1313
      %v1382 = vadd.f32 %v1172, %v1318
      %v1383 = vadd.f32 %v1173, %v1321
      %v1384 = vadd.f32 %v1174, %v1326
      %v1385 = vadd.f32 %v1175, %v1329
      %v1386 = vadd.f32 %v1176, %v1334
      %v1387 = vadd.f32 %v1177, %v1337
      %v1388 = vadd.f32 %v1178, %v1342
      %v1389 = vadd.f32 %v1179, %v1345
      %v1390 = vadd.f32 %v1180, %v1350
      %v1391 = vadd.f32 %v1181, %v1353
      %v1392 = vadd.f32 %v1182, %v1358
      %v1393 = vadd.f32 %v1183, %v1361
      %v1394 = vadd.f32 %v1184, %v1366
      %v1395 = vadd.f32 %v1185, %v1369
      %v1396 = vadd.f32 %v1186, %v1374
      %v1397 = vadd.f32 %v1187, %v1377
      %v1398 = vld [vmem:[%s166 + $0x12] sm:$0xff]
      %v1399 = vld [vmem:[%s166 + $0x1a] sm:$0xff]
      %v1400 = vld [vmem:[%s166 + $0x22] sm:$0xff]
      %v1401 = vld [vmem:[%s166 + $0x2a] sm:$0xff]
      %v1402 = vld [vmem:[%s166 + $0x32] sm:$0xff]
      %v1403 = vld [vmem:[%s166 + $0x3a] sm:$0xff]
      %v1404 = vld [vmem:[%s166 + $0x42] sm:$0xff]
      %v1405 = vld [vmem:[%s166 + $0x4a] sm:$0xff]
      %v1406 = vld [vmem:[%s166 + $0x52] sm:$0xff]
      %v1407 = vld [vmem:[%s166 + $0x5a] sm:$0xff]
      %v1408 = vld [vmem:[%s166 + $0x62] sm:$0xff]
      %v1409 = vld [vmem:[%s166 + $0x6a] sm:$0xff]
      %v1410 = vld [vmem:[%s166 + $0x72] sm:$0xff]
      %v1411 = vld [vmem:[%s166 + $0x7a] sm:$0xff]
      %v1412 = vld [vmem:[%s166 + $0x82] sm:$0xff]
      %v1413 = vld [vmem:[%s166 + $0x8a] sm:$0xff]
      %v1414 = vld [vmem:[%s166 + $0x92] sm:$0xff]
      %v1415 = vld [vmem:[%s166 + $0x9a] sm:$0xff]
      %v1416 = vpack.c.bf16 %v1399, %v1398
      %v1417 = vpack.c.bf16 %v1401, %v1400
      %v1418 = vpack.c.bf16 %v1403, %v1402
      %v1419 = vpack.c.bf16 %v1405, %v1404
      %v1420 = vpack.c.bf16 %v1407, %v1406
      %v1421 = vpack.c.bf16 %v1409, %v1408
      %v1422 = vpack.c.bf16 %v1411, %v1410
      %v1423 = vpack.c.bf16 %v1413, %v1412
      %v1424 = vpack.c.bf16 %v1415, %v1414
      %s1425 = scalar_lea.vmem %s1, 192
      %v1426 = vld [vmem:[%s1425] sm:$0xf]
      %v1427 = vld [vmem:[%s1425 + $0x4] sm:$0xf]
      %v1428 = vld [vmem:[%s1425 + $0x8] sm:$0xf]
      %v1429 = vld [vmem:[%s1425 + $0xc] sm:$0xf]
      %v1430 = vld [vmem:[%s1425 + $0x10] sm:$0xf]
      %v1431 = vld [vmem:[%s1425 + $0x14] sm:$0xf]
      %v1432 = vld [vmem:[%s1425 + $0x18] sm:$0xf]
      %v1433 = vld [vmem:[%s1425 + $0x1c] sm:$0xf]
      %v1442 = vunpack.c.l.b16 %v1426
      %v1443 = vunpack.c.l.b16 %v1427
      %v1444 = vunpack.c.l.b16 %v1428
      %v1445 = vunpack.c.l.b16 %v1429
      %v1446 = vunpack.c.l.b16 %v1430
      %v1447 = vunpack.c.l.b16 %v1431
      %v1448 = vunpack.c.l.b16 %v1432
      %v1449 = vunpack.c.l.b16 %v1433
      %v1450 = vpack.c.b16 %v1443, %v1442
      %v1451 = vpack.c.b16 %v1445, %v1444
      %v1452 = vpack.c.b16 %v1447, %v1446
      %v1453 = vpack.c.b16 %v1449, %v1448
      %v1459 = vsel %vm269, %v1416, 0
      %v1462 = vsel %vm269, %v1417, 0
      %v1465 = vsel %vm269, %v1418, 0
      %v1468 = vsel %vm269, %v1419, 0
      %v1471 = vsel %vm269, %v1420, 0
      %v1474 = vsel %vm269, %v1421, 0
      %v1477 = vsel %vm269, %v1422, 0
      %v1480 = vsel %vm269, %v1423, 0
      %v1483 = vsel %vm269, %v1424, 0
      %1485 = vmatprep.subr.bf16.mxu0 0
      %1486 = vmatpush1.bf16.msra.mxu0 %v1450
      %1487 = vmatprep.subr.bf16.mxu0 0
      %1488 = vmatpush1.bf16.msra.mxu0 %v1451
      %1489 = vmatprep.subr.bf16.mxu0 0
      %1490 = vmatpush1.bf16.msra.mxu0 %v1452
      %1491 = vmatprep.subr.bf16.mxu0 0
      %1492 = vmatpush1.bf16.msra.mxu0 %v1453
      %1493 = vmatprep.subr.bf16.mxu0 0
      %1494 = vmatpush1.bf16.msra.mxu0 0
      %1495 = vmatprep.subr.bf16.mxu0 0
      %1496 = vmatpush1.bf16.msra.mxu0 0
      %1497 = vmatprep.subr.bf16.mxu0 0
      %1498 = vmatpush1.bf16.msra.mxu0 0
      %1499 = vmatprep.subr.bf16.mxu0 0
      %1500 = vmatpush1.bf16.msra.mxu0 0
      %1501 = vmatprep.subr.bf16.mxu0 0
      %1502 = vmatpush1.bf16.msra.mxu0 0
      %1503 = vmatprep.subr.bf16.mxu0 0
      %1504 = vmatpush1.bf16.msra.mxu0 0
      %1505 = vmatprep.subr.bf16.mxu0 0
      %1506 = vmatpush1.bf16.msra.mxu0 0
      %1507 = vmatprep.subr.bf16.mxu0 0
      %1508 = vmatpush1.bf16.msra.mxu0 0
      %1509 = vmatprep.subr.bf16.mxu0 0
      %1510 = vmatpush1.bf16.msra.mxu0 0
      %1511 = vmatprep.subr.bf16.mxu0 0
      %1512 = vmatpush1.bf16.msra.mxu0 0
      %1513 = vmatprep.subr.bf16.mxu0 0
      %1514 = vmatpush1.bf16.msra.mxu0 0
      %1515 = vmatprep.subr.bf16.mxu0 0
      %1516 = vmatpush1.bf16.msra.mxu0 0
      %1517 = vmatprep.mubr.bf16.mxu0 0
      %1518 = vmatmul.mubr.bf16.gmra.mrb[0].mxu0 %v1459
      %v1519 = vpop.f32.mrb[0].mxu0
      %v1520 = vadd.f32 0.0, %v1519
      %v1521 = vpop.f32.mrb[0].mxu0
      %v1522 = vpop.f32.mrb[0].mxu0
      %v1523 = vadd.f32 0.0, %v1522
      %v1524 = vpop.f32.mrb[0].mxu0
      %1525 = vmatprep.mubr.bf16.mxu0 0
      %1526 = vmatmul.mubr.bf16.gmra.mrb[0].mxu0 %v1462
      %v1527 = vpop.f32.mrb[0].mxu0
      %v1528 = vadd.f32 0.0, %v1527
      %v1529 = vpop.f32.mrb[0].mxu0
      %v1530 = vpop.f32.mrb[0].mxu0
      %v1531 = vadd.f32 0.0, %v1530
      %v1532 = vpop.f32.mrb[0].mxu0
      %1533 = vmatprep.mubr.bf16.mxu0 0
      %1534 = vmatmul.mubr.bf16.gmra.mrb[0].mxu0 %v1465
      %v1535 = vpop.f32.mrb[0].mxu0
      %v1536 = vadd.f32 0.0, %v1535
      %v1537 = vpop.f32.mrb[0].mxu0
      %v1538 = vpop.f32.mrb[0].mxu0
      %v1539 = vadd.f32 0.0, %v1538
      %v1540 = vpop.f32.mrb[0].mxu0
      %1541 = vmatprep.mubr.bf16.mxu0 0
      %1542 = vmatmul.mubr.bf16.gmra.mrb[0].mxu0 %v1468
      %v1543 = vpop.f32.mrb[0].mxu0
      %v1544 = vadd.f32 0.0, %v1543
      %v1545 = vpop.f32.mrb[0].mxu0
      %v1546 = vpop.f32.mrb[0].mxu0
      %v1547 = vadd.f32 0.0, %v1546
      %v1548 = vpop.f32.mrb[0].mxu0
      %1549 = vmatprep.mubr.bf16.mxu0 0
      %1550 = vmatmul.mubr.bf16.gmra.mrb[0].mxu0 %v1471
      %v1551 = vpop.f32.mrb[0].mxu0
      %v1552 = vadd.f32 0.0, %v1551
      %v1553 = vpop.f32.mrb[0].mxu0
      %v1554 = vpop.f32.mrb[0].mxu0
      %v1555 = vadd.f32 0.0, %v1554
      %v1556 = vpop.f32.mrb[0].mxu0
      %1557 = vmatprep.mubr.bf16.mxu0 0
      %1558 = vmatmul.mubr.bf16.gmra.mrb[0].mxu0 %v1474
      %v1559 = vpop.f32.mrb[0].mxu0
      %v1560 = vadd.f32 0.0, %v1559
      %v1561 = vpop.f32.mrb[0].mxu0
      %v1562 = vpop.f32.mrb[0].mxu0
      %v1563 = vadd.f32 0.0, %v1562
      %v1564 = vpop.f32.mrb[0].mxu0
      %1565 = vmatprep.mubr.bf16.mxu0 0
      %1566 = vmatmul.mubr.bf16.gmra.mrb[0].mxu0 %v1477
      %v1567 = vpop.f32.mrb[0].mxu0
      %v1568 = vadd.f32 0.0, %v1567
      %v1569 = vpop.f32.mrb[0].mxu0
      %v1570 = vpop.f32.mrb[0].mxu0
      %v1571 = vadd.f32 0.0, %v1570
      %v1572 = vpop.f32.mrb[0].mxu0
      %1573 = vmatprep.mubr.bf16.mxu0 0
      %1574 = vmatmul.mubr.bf16.gmra.mrb[0].mxu0 %v1480
      %v1575 = vpop.f32.mrb[0].mxu0
      %v1576 = vadd.f32 0.0, %v1575
      %v1577 = vpop.f32.mrb[0].mxu0
      %v1578 = vpop.f32.mrb[0].mxu0
      %v1579 = vadd.f32 0.0, %v1578
      %v1580 = vpop.f32.mrb[0].mxu0
      %1581 = vmatprep.mubr.bf16.mxu0 0
      %1582 = vmatmul.mubr.bf16.gmra.mrb[0].mxu0 %v1483
      %v1583 = vpop.f32.mrb[0].mxu0
      %v1584 = vadd.f32 0.0, %v1583
      %v1585 = vpop.f32.mrb[0].mxu0
      %v1586 = vpop.f32.mrb[0].mxu0
      %v1587 = vadd.f32 0.0, %v1586
      %v1588 = vpop.f32.mrb[0].mxu0
      %1589 = vdwg.mxu0
      %v1590 = vadd.f32 %v1380, %v1520
      %v1591 = vadd.f32 %v1381, %v1523
      %v1592 = vadd.f32 %v1382, %v1528
      %v1593 = vadd.f32 %v1383, %v1531
      %v1594 = vadd.f32 %v1384, %v1536
      %v1595 = vadd.f32 %v1385, %v1539
      %v1596 = vadd.f32 %v1386, %v1544
      %v1597 = vadd.f32 %v1387, %v1547
      %v1598 = vadd.f32 %v1388, %v1552
      %v1599 = vadd.f32 %v1389, %v1555
      %v1600 = vadd.f32 %v1390, %v1560
      %v1601 = vadd.f32 %v1391, %v1563
      %v1602 = vadd.f32 %v1392, %v1568
      %v1603 = vadd.f32 %v1393, %v1571
      %v1604 = vadd.f32 %v1394, %v1576
      %v1605 = vadd.f32 %v1395, %v1579
      %v1606 = vadd.f32 %v1396, %v1584
      %v1607 = vadd.f32 %v1397, %v1587
      %v1608 = vld [vmem:[%s208 + $0x12] sm:$0xff]
      %v1609 = vld [vmem:[%s208 + $0x1a] sm:$0xff]
      %v1610 = vld [vmem:[%s208 + $0x22] sm:$0xff]
      %v1611 = vld [vmem:[%s208 + $0x2a] sm:$0xff]
      %v1612 = vld [vmem:[%s208 + $0x32] sm:$0xff]
      %v1613 = vld [vmem:[%s208 + $0x3a] sm:$0xff]
      %v1614 = vld [vmem:[%s208 + $0x42] sm:$0xff]
      %v1615 = vld [vmem:[%s208 + $0x4a] sm:$0xff]
      %v1616 = vld [vmem:[%s208 + $0x52] sm:$0xff]
      %v1617 = vld [vmem:[%s208 + $0x5a] sm:$0xff]
      %v1618 = vld [vmem:[%s208 + $0x62] sm:$0xff]
      %v1619 = vld [vmem:[%s208 + $0x6a] sm:$0xff]
      %v1620 = vld [vmem:[%s208 + $0x72] sm:$0xff]
      %v1621 = vld [vmem:[%s208 + $0x7a] sm:$0xff]
      %v1622 = vld [vmem:[%s208 + $0x82] sm:$0xff]
      %v1623 = vld [vmem:[%s208 + $0x8a] sm:$0xff]
      %v1624 = vld [vmem:[%s208 + $0x92] sm:$0xff]
      %v1625 = vld [vmem:[%s208 + $0x9a] sm:$0xff]
      %v1626 = vpack.c.bf16 %v1609, %v1608
      %v1627 = vpack.c.bf16 %v1611, %v1610
      %v1628 = vpack.c.bf16 %v1613, %v1612
      %v1629 = vpack.c.bf16 %v1615, %v1614
      %v1630 = vpack.c.bf16 %v1617, %v1616
      %v1631 = vpack.c.bf16 %v1619, %v1618
      %v1632 = vpack.c.bf16 %v1621, %v1620
      %v1633 = vpack.c.bf16 %v1623, %v1622
      %v1634 = vpack.c.bf16 %v1625, %v1624
      %s1635 = scalar_lea.vmem %s1, 224
      %v1636 = vld [vmem:[%s1635] sm:$0xf]
      %v1637 = vld [vmem:[%s1635 + $0x4] sm:$0xf]
      %v1638 = vld [vmem:[%s1635 + $0x8] sm:$0xf]
      %v1639 = vld [vmem:[%s1635 + $0xc] sm:$0xf]
      %v1640 = vld [vmem:[%s1635 + $0x10] sm:$0xf]
      %v1641 = vld [vmem:[%s1635 + $0x14] sm:$0xf]
      %v1642 = vld [vmem:[%s1635 + $0x18] sm:$0xf]
      %v1643 = vld [vmem:[%s1635 + $0x1c] sm:$0xf]
      %v1652 = vunpack.c.l.b16 %v1636
      %v1653 = vunpack.c.l.b16 %v1637
      %v1654 = vunpack.c.l.b16 %v1638
      %v1655 = vunpack.c.l.b16 %v1639
      %v1656 = vunpack.c.l.b16 %v1640
      %v1657 = vunpack.c.l.b16 %v1641
      %v1658 = vunpack.c.l.b16 %v1642
      %v1659 = vunpack.c.l.b16 %v1643
      %v1660 = vpack.c.b16 %v1653, %v1652
      %v1661 = vpack.c.b16 %v1655, %v1654
      %v1662 = vpack.c.b16 %v1657, %v1656
      %v1663 = vpack.c.b16 %v1659, %v1658
      %v1669 = vsel %vm269, %v1626, 0
      %v1672 = vsel %vm269, %v1627, 0
      %v1675 = vsel %vm269, %v1628, 0
      %v1678 = vsel %vm269, %v1629, 0
      %v1681 = vsel %vm269, %v1630, 0
      %v1684 = vsel %vm269, %v1631, 0
      %v1687 = vsel %vm269, %v1632, 0
      %v1690 = vsel %vm269, %v1633, 0
      %v1693 = vsel %vm269, %v1634, 0
      %1695 = vmatprep.subr.bf16.mxu0 0
      %1696 = vmatpush1.bf16.msra.mxu0 %v1660
      %1697 = vmatprep.subr.bf16.mxu0 0
      %1698 = vmatpush1.bf16.msra.mxu0 %v1661
      %1699 = vmatprep.subr.bf16.mxu0 0
      %1700 = vmatpush1.bf16.msra.mxu0 %v1662
      %1701 = vmatprep.subr.bf16.mxu0 0
      %1702 = vmatpush1.bf16.msra.mxu0 %v1663
      %1703 = vmatprep.subr.bf16.mxu0 0
      %1704 = vmatpush1.bf16.msra.mxu0 0
      %1705 = vmatprep.subr.bf16.mxu0 0
      %1706 = vmatpush1.bf16.msra.mxu0 0
      %1707 = vmatprep.subr.bf16.mxu0 0
      %1708 = vmatpush1.bf16.msra.mxu0 0
      %1709 = vmatprep.subr.bf16.mxu0 0
      %1710 = vmatpush1.bf16.msra.mxu0 0
      %1711 = vmatprep.subr.bf16.mxu0 0
      %1712 = vmatpush1.bf16.msra.mxu0 0
      %1713 = vmatprep.subr.bf16.mxu0 0
      %1714 = vmatpush1.bf16.msra.mxu0 0
      %1715 = vmatprep.subr.bf16.mxu0 0
      %1716 = vmatpush1.bf16.msra.mxu0 0
      %1717 = vmatprep.subr.bf16.mxu0 0
      %1718 = vmatpush1.bf16.msra.mxu0 0
      %1719 = vmatprep.subr.bf16.mxu0 0
      %1720 = vmatpush1.bf16.msra.mxu0 0
      %1721 = vmatprep.subr.bf16.mxu0 0
      %1722 = vmatpush1.bf16.msra.mxu0 0
      %1723 = vmatprep.subr.bf16.mxu0 0
      %1724 = vmatpush1.bf16.msra.mxu0 0
      %1725 = vmatprep.subr.bf16.mxu0 0
      %1726 = vmatpush1.bf16.msra.mxu0 0
      %1727 = vmatprep.mubr.bf16.mxu0 0
      %1728 = vmatmul.mubr.bf16.gmra.mrb[0].mxu0 %v1669
      %v1729 = vpop.f32.mrb[0].mxu0
      %v1730 = vadd.f32 0.0, %v1729
      %v1731 = vpop.f32.mrb[0].mxu0
      %v1732 = vpop.f32.mrb[0].mxu0
      %v1733 = vadd.f32 0.0, %v1732
      %v1734 = vpop.f32.mrb[0].mxu0
      %1735 = vmatprep.mubr.bf16.mxu0 0
      %1736 = vmatmul.mubr.bf16.gmra.mrb[0].mxu0 %v1672
      %v1737 = vpop.f32.mrb[0].mxu0
      %v1738 = vadd.f32 0.0, %v1737
      %v1739 = vpop.f32.mrb[0].mxu0
      %v1740 = vpop.f32.mrb[0].mxu0
      %v1741 = vadd.f32 0.0, %v1740
      %v1742 = vpop.f32.mrb[0].mxu0
      %1743 = vmatprep.mubr.bf16.mxu0 0
      %1744 = vmatmul.mubr.bf16.gmra.mrb[0].mxu0 %v1675
      %v1745 = vpop.f32.mrb[0].mxu0
      %v1746 = vadd.f32 0.0, %v1745
      %v1747 = vpop.f32.mrb[0].mxu0
      %v1748 = vpop.f32.mrb[0].mxu0
      %v1749 = vadd.f32 0.0, %v1748
      %v1750 = vpop.f32.mrb[0].mxu0
      %1751 = vmatprep.mubr.bf16.mxu0 0
      %1752 = vmatmul.mubr.bf16.gmra.mrb[0].mxu0 %v1678
      %v1753 = vpop.f32.mrb[0].mxu0
      %v1754 = vadd.f32 0.0, %v1753
      %v1755 = vpop.f32.mrb[0].mxu0
      %v1756 = vpop.f32.mrb[0].mxu0
      %v1757 = vadd.f32 0.0, %v1756
      %v1758 = vpop.f32.mrb[0].mxu0
      %1759 = vmatprep.mubr.bf16.mxu0 0
      %1760 = vmatmul.mubr.bf16.gmra.mrb[0].mxu0 %v1681
      %v1761 = vpop.f32.mrb[0].mxu0
      %v1762 = vadd.f32 0.0, %v1761
      %v1763 = vpop.f32.mrb[0].mxu0
      %v1764 = vpop.f32.mrb[0].mxu0
      %v1765 = vadd.f32 0.0, %v1764
      %v1766 = vpop.f32.mrb[0].mxu0
      %1767 = vmatprep.mubr.bf16.mxu0 0
      %1768 = vmatmul.mubr.bf16.gmra.mrb[0].mxu0 %v1684
      %v1769 = vpop.f32.mrb[0].mxu0
      %v1770 = vadd.f32 0.0, %v1769
      %v1771 = vpop.f32.mrb[0].mxu0
      %v1772 = vpop.f32.mrb[0].mxu0
      %v1773 = vadd.f32 0.0, %v1772
      %v1774 = vpop.f32.mrb[0].mxu0
      %1775 = vmatprep.mubr.bf16.mxu0 0
      %1776 = vmatmul.mubr.bf16.gmra.mrb[0].mxu0 %v1687
      %v1777 = vpop.f32.mrb[0].mxu0
      %v1778 = vadd.f32 0.0, %v1777
      %v1779 = vpop.f32.mrb[0].mxu0
      %v1780 = vpop.f32.mrb[0].mxu0
      %v1781 = vadd.f32 0.0, %v1780
      %v1782 = vpop.f32.mrb[0].mxu0
      %1783 = vmatprep.mubr.bf16.mxu0 0
      %1784 = vmatmul.mubr.bf16.gmra.mrb[0].mxu0 %v1690
      %v1785 = vpop.f32.mrb[0].mxu0
      %v1786 = vadd.f32 0.0, %v1785
      %v1787 = vpop.f32.mrb[0].mxu0
      %v1788 = vpop.f32.mrb[0].mxu0
      %v1789 = vadd.f32 0.0, %v1788
      %v1790 = vpop.f32.mrb[0].mxu0
      %1791 = vmatprep.mubr.bf16.mxu0 0
      %1792 = vmatmul.mubr.bf16.gmra.mrb[0].mxu0 %v1693
      %v1793 = vpop.f32.mrb[0].mxu0
      %v1794 = vadd.f32 0.0, %v1793
      %v1795 = vpop.f32.mrb[0].mxu0
      %v1796 = vpop.f32.mrb[0].mxu0
      %v1797 = vadd.f32 0.0, %v1796
      %v1798 = vpop.f32.mrb[0].mxu0
      %1799 = vdwg.mxu0
      %v1800 = vadd.f32 %v1590, %v1730
      %v1801 = vadd.f32 %v1591, %v1733
      %v1802 = vadd.f32 %v1592, %v1738
      %v1803 = vadd.f32 %v1593, %v1741
      %v1804 = vadd.f32 %v1594, %v1746
      %v1805 = vadd.f32 %v1595, %v1749
      %v1806 = vadd.f32 %v1596, %v1754
      %v1807 = vadd.f32 %v1597, %v1757
      %v1808 = vadd.f32 %v1598, %v1762
      %v1809 = vadd.f32 %v1599, %v1765
      %v1810 = vadd.f32 %v1600, %v1770
      %v1811 = vadd.f32 %v1601, %v1773
      %v1812 = vadd.f32 %v1602, %v1778
      %v1813 = vadd.f32 %v1603, %v1781
      %v1814 = vadd.f32 %v1604, %v1786
      %v1815 = vadd.f32 %v1605, %v1789
      %v1816 = vadd.f32 %v1606, %v1794
      %v1817 = vadd.f32 %v1607, %v1797
      %v1818 = vld [vmem:[%s166 + $0x13] sm:$0xff]
      %v1819 = vld [vmem:[%s166 + $0x1b] sm:$0xff]
      %v1820 = vld [vmem:[%s166 + $0x23] sm:$0xff]
      %v1821 = vld [vmem:[%s166 + $0x2b] sm:$0xff]
      %v1822 = vld [vmem:[%s166 + $0x33] sm:$0xff]
      %v1823 = vld [vmem:[%s166 + $0x3b] sm:$0xff]
      %v1824 = vld [vmem:[%s166 + $0x43] sm:$0xff]
      %v1825 = vld [vmem:[%s166 + $0x4b] sm:$0xff]
      %v1826 = vld [vmem:[%s166 + $0x53] sm:$0xff]
      %v1827 = vld [vmem:[%s166 + $0x5b] sm:$0xff]
      %v1828 = vld [vmem:[%s166 + $0x63] sm:$0xff]
      %v1829 = vld [vmem:[%s166 + $0x6b] sm:$0xff]
      %v1830 = vld [vmem:[%s166 + $0x73] sm:$0xff]
      %v1831 = vld [vmem:[%s166 + $0x7b] sm:$0xff]
      %v1832 = vld [vmem:[%s166 + $0x83] sm:$0xff]
      %v1833 = vld [vmem:[%s166 + $0x8b] sm:$0xff]
      %v1834 = vld [vmem:[%s166 + $0x93] sm:$0xff]
      %v1835 = vld [vmem:[%s166 + $0x9b] sm:$0xff]
      %v1836 = vpack.c.bf16 %v1819, %v1818
      %v1837 = vpack.c.bf16 %v1821, %v1820
      %v1838 = vpack.c.bf16 %v1823, %v1822
      %v1839 = vpack.c.bf16 %v1825, %v1824
      %v1840 = vpack.c.bf16 %v1827, %v1826
      %v1841 = vpack.c.bf16 %v1829, %v1828
      %v1842 = vpack.c.bf16 %v1831, %v1830
      %v1843 = vpack.c.bf16 %v1833, %v1832
      %v1844 = vpack.c.bf16 %v1835, %v1834
      %s1845 = scalar_lea.vmem %s1, 256
      %v1846 = vld [vmem:[%s1845] sm:$0xf]
      %v1847 = vld [vmem:[%s1845 + $0x4] sm:$0xf]
      %v1848 = vld [vmem:[%s1845 + $0x8] sm:$0xf]
      %v1849 = vld [vmem:[%s1845 + $0xc] sm:$0xf]
      %v1850 = vld [vmem:[%s1845 + $0x10] sm:$0xf]
      %v1851 = vld [vmem:[%s1845 + $0x14] sm:$0xf]
      %v1852 = vld [vmem:[%s1845 + $0x18] sm:$0xf]
      %v1853 = vld [vmem:[%s1845 + $0x1c] sm:$0xf]
      %v1862 = vunpack.c.l.b16 %v1846
      %v1863 = vunpack.c.l.b16 %v1847
      %v1864 = vunpack.c.l.b16 %v1848
      %v1865 = vunpack.c.l.b16 %v1849
      %v1866 = vunpack.c.l.b16 %v1850
      %v1867 = vunpack.c.l.b16 %v1851
      %v1868 = vunpack.c.l.b16 %v1852
      %v1869 = vunpack.c.l.b16 %v1853
      %v1870 = vpack.c.b16 %v1863, %v1862
      %v1871 = vpack.c.b16 %v1865, %v1864
      %v1872 = vpack.c.b16 %v1867, %v1866
      %v1873 = vpack.c.b16 %v1869, %v1868
      %v1879 = vsel %vm269, %v1836, 0
      %v1882 = vsel %vm269, %v1837, 0
      %v1885 = vsel %vm269, %v1838, 0
      %v1888 = vsel %vm269, %v1839, 0
      %v1891 = vsel %vm269, %v1840, 0
      %v1894 = vsel %vm269, %v1841, 0
      %v1897 = vsel %vm269, %v1842, 0
      %v1900 = vsel %vm269, %v1843, 0
      %v1903 = vsel %vm269, %v1844, 0
      %1905 = vmatprep.subr.bf16.mxu0 0
      %1906 = vmatpush1.bf16.msra.mxu0 %v1870
      %1907 = vmatprep.subr.bf16.mxu0 0
      %1908 = vmatpush1.bf16.msra.mxu0 %v1871
      %1909 = vmatprep.subr.bf16.mxu0 0
      %1910 = vmatpush1.bf16.msra.mxu0 %v1872
      %1911 = vmatprep.subr.bf16.mxu0 0
      %1912 = vmatpush1.bf16.msra.mxu0 %v1873
      %1913 = vmatprep.subr.bf16.mxu0 0
      %1914 = vmatpush1.bf16.msra.mxu0 0
      %1915 = vmatprep.subr.bf16.mxu0 0
      %1916 = vmatpush1.bf16.msra.mxu0 0
      %1917 = vmatprep.subr.bf16.mxu0 0
      %1918 = vmatpush1.bf16.msra.mxu0 0
      %1919 = vmatprep.subr.bf16.mxu0 0
      %1920 = vmatpush1.bf16.msra.mxu0 0
      %1921 = vmatprep.subr.bf16.mxu0 0
      %1922 = vmatpush1.bf16.msra.mxu0 0
      %1923 = vmatprep.subr.bf16.mxu0 0
      %1924 = vmatpush1.bf16.msra.mxu0 0
      %1925 = vmatprep.subr.bf16.mxu0 0
      %1926 = vmatpush1.bf16.msra.mxu0 0
      %1927 = vmatprep.subr.bf16.mxu0 0
      %1928 = vmatpush1.bf16.msra.mxu0 0
      %1929 = vmatprep.subr.bf16.mxu0 0
      %1930 = vmatpush1.bf16.msra.mxu0 0
      %1931 = vmatprep.subr.bf16.mxu0 0
      %1932 = vmatpush1.bf16.msra.mxu0 0
      %1933 = vmatprep.subr.bf16.mxu0 0
      %1934 = vmatpush1.bf16.msra.mxu0 0
      %1935 = vmatprep.subr.bf16.mxu0 0
      %1936 = vmatpush1.bf16.msra.mxu0 0
      %1937 = vmatprep.mubr.bf16.mxu0 0
      %1938 = vmatmul.mubr.bf16.gmra.mrb[0].mxu0 %v1879
      %v1939 = vpop.f32.mrb[0].mxu0
      %v1940 = vadd.f32 0.0, %v1939
      %v1941 = vpop.f32.mrb[0].mxu0
      %v1942 = vpop.f32.mrb[0].mxu0
      %v1943 = vadd.f32 0.0, %v1942
      %v1944 = vpop.f32.mrb[0].mxu0
      %1945 = vmatprep.mubr.bf16.mxu0 0
      %1946 = vmatmul.mubr.bf16.gmra.mrb[0].mxu0 %v1882
      %v1947 = vpop.f32.mrb[0].mxu0
      %v1948 = vadd.f32 0.0, %v1947
      %v1949 = vpop.f32.mrb[0].mxu0
      %v1950 = vpop.f32.mrb[0].mxu0
      %v1951 = vadd.f32 0.0, %v1950
      %v1952 = vpop.f32.mrb[0].mxu0
      %1953 = vmatprep.mubr.bf16.mxu0 0
      %1954 = vmatmul.mubr.bf16.gmra.mrb[0].mxu0 %v1885
      %v1955 = vpop.f32.mrb[0].mxu0
      %v1956 = vadd.f32 0.0, %v1955
      %v1957 = vpop.f32.mrb[0].mxu0
      %v1958 = vpop.f32.mrb[0].mxu0
      %v1959 = vadd.f32 0.0, %v1958
      %v1960 = vpop.f32.mrb[0].mxu0
      %1961 = vmatprep.mubr.bf16.mxu0 0
      %1962 = vmatmul.mubr.bf16.gmra.mrb[0].mxu0 %v1888
      %v1963 = vpop.f32.mrb[0].mxu0
      %v1964 = vadd.f32 0.0, %v1963
      %v1965 = vpop.f32.mrb[0].mxu0
      %v1966 = vpop.f32.mrb[0].mxu0
      %v1967 = vadd.f32 0.0, %v1966
      %v1968 = vpop.f32.mrb[0].mxu0
      %1969 = vmatprep.mubr.bf16.mxu0 0
      %1970 = vmatmul.mubr.bf16.gmra.mrb[0].mxu0 %v1891
      %v1971 = vpop.f32.mrb[0].mxu0
      %v1972 = vadd.f32 0.0, %v1971
      %v1973 = vpop.f32.mrb[0].mxu0
      %v1974 = vpop.f32.mrb[0].mxu0
      %v1975 = vadd.f32 0.0, %v1974
      %v1976 = vpop.f32.mrb[0].mxu0
      %1977 = vmatprep.mubr.bf16.mxu0 0
      %1978 = vmatmul.mubr.bf16.gmra.mrb[0].mxu0 %v1894
      %v1979 = vpop.f32.mrb[0].mxu0
      %v1980 = vadd.f32 0.0, %v1979
      %v1981 = vpop.f32.mrb[0].mxu0
      %v1982 = vpop.f32.mrb[0].mxu0
      %v1983 = vadd.f32 0.0, %v1982
      %v1984 = vpop.f32.mrb[0].mxu0
      %1985 = vmatprep.mubr.bf16.mxu0 0
      %1986 = vmatmul.mubr.bf16.gmra.mrb[0].mxu0 %v1897
      %v1987 = vpop.f32.mrb[0].mxu0
      %v1988 = vadd.f32 0.0, %v1987
      %v1989 = vpop.f32.mrb[0].mxu0
      %v1990 = vpop.f32.mrb[0].mxu0
      %v1991 = vadd.f32 0.0, %v1990
      %v1992 = vpop.f32.mrb[0].mxu0
      %1993 = vmatprep.mubr.bf16.mxu0 0
      %1994 = vmatmul.mubr.bf16.gmra.mrb[0].mxu0 %v1900
      %v1995 = vpop.f32.mrb[0].mxu0
      %v1996 = vadd.f32 0.0, %v1995
      %v1997 = vpop.f32.mrb[0].mxu0
      %v1998 = vpop.f32.mrb[0].mxu0
      %v1999 = vadd.f32 0.0, %v1998
      %v2000 = vpop.f32.mrb[0].mxu0
      %2001 = vmatprep.mubr.bf16.mxu0 0
      %2002 = vmatmul.mubr.bf16.gmra.mrb[0].mxu0 %v1903
      %v2003 = vpop.f32.mrb[0].mxu0
      %v2004 = vadd.f32 0.0, %v2003
      %v2005 = vpop.f32.mrb[0].mxu0
      %v2006 = vpop.f32.mrb[0].mxu0
      %v2007 = vadd.f32 0.0, %v2006
      %v2008 = vpop.f32.mrb[0].mxu0
      %2009 = vdwg.mxu0
      %v2010 = vadd.f32 %v1800, %v1940
      %v2011 = vadd.f32 %v1801, %v1943
      %v2012 = vadd.f32 %v1802, %v1948
      %v2013 = vadd.f32 %v1803, %v1951
      %v2014 = vadd.f32 %v1804, %v1956
      %v2015 = vadd.f32 %v1805, %v1959
      %v2016 = vadd.f32 %v1806, %v1964
      %v2017 = vadd.f32 %v1807, %v1967
      %v2018 = vadd.f32 %v1808, %v1972
      %v2019 = vadd.f32 %v1809, %v1975
      %v2020 = vadd.f32 %v1810, %v1980
      %v2021 = vadd.f32 %v1811, %v1983
      %v2022 = vadd.f32 %v1812, %v1988
      %v2023 = vadd.f32 %v1813, %v1991
      %v2024 = vadd.f32 %v1814, %v1996
      %v2025 = vadd.f32 %v1815, %v1999
      %v2026 = vadd.f32 %v1816, %v2004
      %v2027 = vadd.f32 %v1817, %v2007
      %s2028 = sld [smem:[#allocation2]]
      %vm2029 = vcmp.ge.f32.partialorder %v2010, 0.0
      %vm2030 = vcmp.ge.f32.partialorder %v2011, 0.0
      %vm2031 = vcmp.ge.f32.partialorder %v2012, 0.0
      %vm2032 = vcmp.ge.f32.partialorder %v2013, 0.0
      %vm2033 = vcmp.ge.f32.partialorder %v2014, 0.0
      %vm2034 = vcmp.ge.f32.partialorder %v2015, 0.0
      %vm2035 = vcmp.ge.f32.partialorder %v2016, 0.0
      %vm2036 = vcmp.ge.f32.partialorder %v2017, 0.0
      %vm2037 = vcmp.ge.f32.partialorder %v2018, 0.0
      %vm2038 = vcmp.ge.f32.partialorder %v2019, 0.0
      %vm2039 = vcmp.ge.f32.partialorder %v2020, 0.0
      %vm2040 = vcmp.ge.f32.partialorder %v2021, 0.0
      %vm2041 = vcmp.ge.f32.partialorder %v2022, 0.0
      %vm2042 = vcmp.ge.f32.partialorder %v2023, 0.0
      %vm2043 = vcmp.ge.f32.partialorder %v2024, 0.0
      %vm2044 = vcmp.ge.f32.partialorder %v2025, 0.0
      %vm2045 = vcmp.ge.f32.partialorder %v2026, 0.0
      %vm2046 = vcmp.ge.f32.partialorder %v2027, 0.0
      %v2047 = vstv %s2028
      %v2048 = vmul.f32 %v2047, %v2010
      %v2049 = vmul.f32 %v2047, %v2011
      %v2050 = vmul.f32 %v2047, %v2012
      %v2051 = vmul.f32 %v2047, %v2013
      %v2052 = vmul.f32 %v2047, %v2014
      %v2053 = vmul.f32 %v2047, %v2015
      %v2054 = vmul.f32 %v2047, %v2016
      %v2055 = vmul.f32 %v2047, %v2017
      %v2056 = vmul.f32 %v2047, %v2018
      %v2057 = vmul.f32 %v2047, %v2019
      %v2058 = vmul.f32 %v2047, %v2020
      %v2059 = vmul.f32 %v2047, %v2021
      %v2060 = vmul.f32 %v2047, %v2022
      %v2061 = vmul.f32 %v2047, %v2023
      %v2062 = vmul.f32 %v2047, %v2024
      %v2063 = vmul.f32 %v2047, %v2025
      %v2064 = vmul.f32 %v2047, %v2026
      %v2065 = vmul.f32 %v2047, %v2027
      %v2066 = vsel %vm2029, %v2010, %v2048
      %v2067 = vsel %vm2030, %v2011, %v2049
      %v2068 = vsel %vm2031, %v2012, %v2050
      %v2069 = vsel %vm2032, %v2013, %v2051
      %v2070 = vsel %vm2033, %v2014, %v2052
      %v2071 = vsel %vm2034, %v2015, %v2053
      %v2072 = vsel %vm2035, %v2016, %v2054
      %v2073 = vsel %vm2036, %v2017, %v2055
      %v2074 = vsel %vm2037, %v2018, %v2056
      %v2075 = vsel %vm2038, %v2019, %v2057
      %v2076 = vsel %vm2039, %v2020, %v2058
      %v2077 = vsel %vm2040, %v2021, %v2059
      %v2078 = vsel %vm2041, %v2022, %v2060
      %v2079 = vsel %vm2042, %v2023, %v2061
      %v2080 = vsel %vm2043, %v2024, %v2062
      %v2081 = vsel %vm2044, %v2025, %v2063
      %v2082 = vsel %vm2045, %v2026, %v2064
      %v2083 = vsel %vm2046, %v2027, %v2065
      %2084 = vst.msk [vmem:[%s171] sm:$0xff] %vm269, %v2066
      %2085 = vst.msk [vmem:[%s171 + $0x8] sm:$0xff] %vm269, %v2067
      %2086 = vst.msk [vmem:[%s171 + $0x10] sm:$0xff] %vm269, %v2068
      %2087 = vst.msk [vmem:[%s171 + $0x18] sm:$0xff] %vm269, %v2069
      %2088 = vst.msk [vmem:[%s171 + $0x20] sm:$0xff] %vm269, %v2070
      %2089 = vst.msk [vmem:[%s171 + $0x28] sm:$0xff] %vm269, %v2071
      %2090 = vst.msk [vmem:[%s171 + $0x30] sm:$0xff] %vm269, %v2072
      %2091 = vst.msk [vmem:[%s171 + $0x38] sm:$0xff] %vm269, %v2073
      %2092 = vst.msk [vmem:[%s171 + $0x40] sm:$0xff] %vm269, %v2074
      %2093 = vst.msk [vmem:[%s171 + $0x48] sm:$0xff] %vm269, %v2075
      %2094 = vst.msk [vmem:[%s171 + $0x50] sm:$0xff] %vm269, %v2076
      %2095 = vst.msk [vmem:[%s171 + $0x58] sm:$0xff] %vm269, %v2077
      %2096 = vst.msk [vmem:[%s171 + $0x60] sm:$0xff] %vm269, %v2078
      %2097 = vst.msk [vmem:[%s171 + $0x68] sm:$0xff] %vm269, %v2079
      %2098 = vst.msk [vmem:[%s171 + $0x70] sm:$0xff] %vm269, %v2080
      %2099 = vst.msk [vmem:[%s171 + $0x78] sm:$0xff] %vm269, %v2081
      %2100 = vst.msk [vmem:[%s171 + $0x80] sm:$0xff] %vm269, %v2082
      %2101 = vst.msk [vmem:[%s171 + $0x88] sm:$0xff] %vm269, %v2083
      %p2102 = scmp.lt.s32.totalorder %s15, 1
      %s2103 = scalar_select %p2102, %s15, 1
      %s2104 = smul.addr %s2103, 18
      %s2105 = smul.addr %s2104, 8
      %s2106 = scalar_lea.vmem %s3, %s2105
      // Predicated region
      $region33: #{_head_fwd.3} parent=31 // pred_check
        %p2107 = pneg %p101
      $region34: #{_head_fwd.3} parent=31 // pred_check_branch
        %2109 = sbr.rel (%p2107) target = $region36
      $region35: #{_head_fwd.3} parent=31 // pred_region
        _
      $region36: #{_head_fwd.3} parent=31 // pred_fallthru
        _
    $region32: #{_head_fwd.3} parent=5 // pred_fallthru
      _
    %p2110 = scmp.le.s32.totalorder 2, %s10
    // Predicated region
    $region37: #{_head_fwd.3} parent=5 // pred_check
      %p2111 = pneg %p2110
    $region38: #{_head_fwd.3} parent=5 // pred_check_branch
      %2113 = sbr.rel (%p2111) target = $region40
    $region39: #{_head_fwd.3} parent=5 // pred_region
      %s2114 = ssub.s32 %s10, 2
      // Predicated region
      $region41: #{_head_fwd.3} parent=39 // pred_check
        %p2115 = pneg %p107
      $region42: #{_head_fwd.3} parent=39 // pred_check_branch
        %2117 = sbr.rel (%p2115) target = $region44
      $region43: #{_head_fwd.3} parent=39 // pred_region
        %p2118 = scmp.lt.s32.totalorder %s16, 1
        %s2119 = scalar_select %p2118, %s16, 1
        %s2120 = smul.addr %s2119, 18
        %s2121 = smul.addr %s2120, 8
        %s2122 = scalar_lea.vmem %s3, %s2121
      $region44: #{_head_fwd.3} parent=39 // pred_fallthru
        _
    $region40: #{_head_fwd.3} parent=5 // pred_fallthru
      _
  $region6: #{_head_fwd.3} parent=0 // loop_footer
    %s14 = sadd.s32 1, %s10
  $region7: #{_head_fwd.3} parent=0 // loop_footer_branch
    %9 = sbr.rel target = $region3
  $region8: #{_head_fwd.3} parent=0 // loop_exit
    _

</llo_original>
